<compile_context>
chip_gen: v7x
topology: tpu7x:2x2x1
jax: 0.10.0
libtpu: 0.0.40
codegen_flags: <defaults>
</compile_context>

<pallas_src>
import functools

import jax
import jax.numpy as jnp
from jax import lax
from jax.experimental import pallas as pl
from jax.experimental.pallas import tpu as pltpu

FLATTEN_RATIO = 8                       # conv output length (L_OUT)
KERNEL_SIZE = 3
C_OUT = 16
L_IN = FLATTEN_RATIO + KERNEL_SIZE - 1  # 10
OUTPUT_SIZE = 1

LANES = 128                             # batch elements packed per reshaped row
GROUP_COLS = LANES * L_IN               # 1280 columns -> lane-dense blocks
MAX_BLOCK_ROWS = 1024                   # reshaped rows per grid step (131072 batch rows)


def _round_up(n, m):
    return ((n + m - 1) // m) * m


def _cnn_kernel(x_ref, w_ref, b_ref, out_ref, *, precision):
    # x_ref:   (R, 1280)   lane-dense input block (128 batch rows per VMEM row)
    # w_ref:   (1280, 128) resident block-diagonal folded weight
    # b_ref:   (1, 128)    resident bias row
    # out_ref: (R, 128)    lane-dense output block (unmasked 128-wide stores)
    acc = jnp.dot(x_ref[...], w_ref[...],
                  preferred_element_type=jnp.float32, precision=precision)
    out_ref[...] = (acc + b_ref[...]).astype(out_ref.dtype)


def _fold_params(conv_w, conv_b, fc_w, fc_b):
    """Fold conv1 + fc1 into an effective 10-tap linear map.
    Valid because the module has no activation between the two layers."""
    wconv = conv_w.astype(jnp.float32)[:, 0, :]                    # (C_OUT, K)
    wfc = fc_w.astype(jnp.float32).reshape(C_OUT, FLATTEN_RATIO)   # channel-major flatten
    w_eff = jnp.zeros((L_IN,), jnp.float32)
    for k in range(KERNEL_SIZE):
        w_eff = w_eff.at[k:k + FLATTEN_RATIO].add(wconv[:, k] @ wfc)
    b_eff = fc_b.astype(jnp.float32)[0] + jnp.sum(
        conv_b.astype(jnp.float32)[:, None] * wfc)
    return w_eff, b_eff


def cnn_forward(x, conv_w, conv_b, fc_w, fc_b, *, max_block_rows=MAX_BLOCK_ROWS):
    """x: (B, 10).  PyTorch parameter shapes: conv_w (16,1,3), conv_b (16,),
    fc_w (1,128), fc_b (1,)."""
    x = jnp.asarray(x)
    if x.dtype != jnp.bfloat16:
        x = x.astype(jnp.float32)       # bf16 inputs stay bf16 (half the HBM bytes)
    B, L = x.shape
    assert L == L_IN, (L, L_IN)

    w_eff, b_eff = _fold_params(conv_w, conv_b, fc_w, fc_b)

    # Block-diagonal folded weight: W[j*L_IN + t, j] = w_eff[t]  -> (1280, 128).
    w_bd = jnp.kron(jnp.eye(LANES, dtype=jnp.float32), w_eff[:, None]).astype(x.dtype)
    bias_row = jnp.full((1, LANES), b_eff, jnp.float32)

    # Lane-dense view: (B, 10) -> (B/128, 1280).  Zero-copy when B % 128 == 0;
    # ragged batches pad only to the next multiple of 128.
    b_pad = _round_up(max(B, 1), LANES)
    if b_pad != B:
        x = jnp.pad(x, ((0, b_pad - B), (0, 0)))
    nrows = b_pad // LANES
    x2 = x.reshape(nrows, GROUP_COLS)   # contiguous row-major reshape: no data movement

    # Rows per grid step: big enough to amortize ~0.35us/step overhead, small
    # enough for modest double-buffered VMEM, and >= 2 blocks when possible so
    # both v7x TensorCores get work.
    if nrows <= 8:
        rows_blk = nrows
    else:
        rows_blk = min(max_block_rows, _round_up(pl.cdiv(nrows, 2), 8))
    nblk = pl.cdiv(nrows, rows_blk)     # last block may be partial (clamped by Pallas)

    itemsize = jnp.dtype(x2.dtype).itemsize
    cost = pl.CostEstimate(
        flops=2 * nrows * GROUP_COLS * LANES,
        transcendentals=0,
        bytes_accessed=(nrows * GROUP_COLS * itemsize          # streamed input
                        + nrows * LANES * 4                    # output
                        + GROUP_COLS * LANES * itemsize        # resident weight
                        + LANES * 4),                          # bias row
    )

    precision = (lax.Precision.DEFAULT if x2.dtype == jnp.bfloat16
                 else lax.Precision.HIGHEST)

    out = pl.pallas_call(
        functools.partial(_cnn_kernel, precision=precision),
        out_shape=jax.ShapeDtypeStruct((nrows, LANES), jnp.float32),
        grid=(nblk,),
        in_specs=[
            pl.BlockSpec((rows_blk, GROUP_COLS), lambda i: (i, 0)),  # streamed input
            pl.BlockSpec((GROUP_COLS, LANES), lambda i: (0, 0)),     # resident weight
            pl.BlockSpec((1, LANES), lambda i: (0, 0)),              # resident bias
        ],
        out_specs=pl.BlockSpec((rows_blk, LANES), lambda i: (i, 0)),
        compiler_params=pltpu.CompilerParams(
            dimension_semantics=("parallel",),
            vmem_limit_bytes=32 * 1024 * 1024,
        ),
        cost_estimate=cost,
    )(x2, w_bd, bias_row)

    # (nrows, 128) -> (b_pad,) is again a free contiguous reshape; out[r, j] is
    # the result for batch row r*128 + j.
    return out.reshape(b_pad)[:B].reshape(B, OUTPUT_SIZE)


def cnn_reference(x, conv_w, conv_b, fc_w, fc_b):
    """Pure-JAX reference mirroring the PyTorch forward (NCL conv, channel-major flatten)."""
    x = jnp.asarray(x, jnp.float32)
    B = x.shape[0]
    w = conv_w[:, 0, :]                                            # (C_OUT, K)
    conv = jnp.zeros((B, C_OUT, FLATTEN_RATIO), jnp.float32)
    for k in range(KERNEL_SIZE):
        conv = conv + x[:, None, k:k + FLATTEN_RATIO] * w[None, :, k, None]
    conv = conv + conv_b[None, :, None]
    flat = conv.reshape(B, C_OUT * FLATTEN_RATIO)                  # torch.flatten(x, 1)
    return flat @ fc_w.T + fc_b[None, :]


if __name__ == "__main__":
    key = jax.random.PRNGKey(0)
    k_x1, k_cw, k_cb, k_fw, k_fb, k_x2, k_x3, k_x4 = jax.random.split(key, 8)

    # PyTorch-style uniform init bounds (1/sqrt(fan_in)).
    conv_bound = 1.0 / (1 * KERNEL_SIZE) ** 0.5
    fc_bound = 1.0 / (C_OUT * FLATTEN_RATIO) ** 0.5
    conv_w = jax.random.uniform(k_cw, (C_OUT, 1, KERNEL_SIZE), jnp.float32,
                                -conv_bound, conv_bound)
    conv_b = jax.random.uniform(k_cb, (C_OUT,), jnp.float32, -conv_bound, conv_bound)
    fc_w = jax.random.uniform(k_fw, (OUTPUT_SIZE, C_OUT * FLATTEN_RATIO), jnp.float32,
                              -fc_bound, fc_bound)
    fc_b = jax.random.uniform(k_fb, (OUTPUT_SIZE,), jnp.float32, -fc_bound, fc_bound)

    # 1) Tiny batch (B=2): single-block path.
    x1 = jax.random.normal(k_x1, (2, L_IN), jnp.float32)
    out1 = jax.block_until_ready(cnn_forward(x1, conv_w, conv_b, fc_w, fc_b))
    ref1 = cnn_reference(x1, conv_w, conv_b, fc_w, fc_b)
    assert out1.shape == (2, OUTPUT_SIZE), out1.shape
    assert jnp.allclose(out1, ref1, atol=2e-5, rtol=1e-4), (out1, ref1)

    # 2) Multiple-of-128 batch: zero-copy lane-dense path, 2 parallel blocks.
    x2 = jax.random.normal(k_x2, (4096, L_IN), jnp.float32)
    out2 = jax.block_until_ready(cnn_forward(x2, conv_w, conv_b, fc_w, fc_b))
    ref2 = cnn_reference(x2, conv_w, conv_b, fc_w, fc_b)
    assert out2.shape == (4096, OUTPUT_SIZE), out2.shape
    assert jnp.allclose(out2, ref2, atol=2e-5, rtol=1e-4), \
        float(jnp.max(jnp.abs(out2 - ref2)))

    # 3) Ragged batch: pads only to the next multiple of 128; exercises the
    #    partial last block (out-of-bounds rows are discarded on write).
    x3 = jax.random.normal(k_x3, (2600, L_IN), jnp.float32)
    out3 = jax.block_until_ready(cnn_forward(x3, conv_w, conv_b, fc_w, fc_b))
    ref3 = cnn_reference(x3, conv_w, conv_b, fc_w, fc_b)
    assert out3.shape == (2600, OUTPUT_SIZE), out3.shape
    assert jnp.allclose(out3, ref3, atol=2e-5, rtol=1e-4), \
        float(jnp.max(jnp.abs(out3 - ref3)))

    # 4) bf16 input path (halved HBM read bytes); compare against the f32
    #    reference evaluated on the bf16-rounded inputs.
    x4 = jax.random.normal(k_x4, (512, L_IN), jnp.float32).astype(jnp.bfloat16)
    out4 = jax.block_until_ready(cnn_forward(x4, conv_w, conv_b, fc_w, fc_b))
    ref4 = cnn_reference(x4.astype(jnp.float32), conv_w, conv_b, fc_w, fc_b)
    assert out4.shape == (512, OUTPUT_SIZE), out4.shape
    assert jnp.allclose(out4, ref4, atol=3e-2, rtol=2e-2), \
        float(jnp.max(jnp.abs(out4 - ref4)))

    print("KERNEL_OK")
</pallas_src>

<mosaic_0001>
module attributes {stable_mosaic.version = 11 : i64} {
  func.func @_cnn_kernel(%arg0: i32, %arg1: memref<1x1280xf32, #tpu.memory_space<vmem>>, %arg2: memref<1280x128xf32, #tpu.memory_space<vmem>>, %arg3: memref<1x128xf32, #tpu.memory_space<vmem>>, %arg4: memref<1x128xf32, #tpu.memory_space<vmem>>) attributes {dimension_semantics = [#tpu.dimension_semantics<parallel>], iteration_bounds = array<i64: 1>, scalar_prefetch = 0 : i64, scratch_operands = 0 : i64, tpu.core_type = #tpu.core_type<tc>, window_params = [{transform_indices = @transform_0, window_bounds = array<i64: 1, 1280>}, {pipeline_mode = #tpu.pipeline_mode<synchronous>, transform_indices = @transform_1, window_bounds = array<i64: 1280, 128>}, {pipeline_mode = #tpu.pipeline_mode<synchronous>, transform_indices = @transform_2, window_bounds = array<i64: 1, 128>}, {transform_indices = @transform_3, window_bounds = array<i64: 1, 128>}]} {
    %c0 = arith.constant 0 : index
    %c0_0 = arith.constant 0 : index
    %0 = vector.load %arg1[%c0, %c0_0] : memref<1x1280xf32, #tpu.memory_space<vmem>>, vector<1x1280xf32>
    %c0_1 = arith.constant 0 : index
    %c0_2 = arith.constant 0 : index
    %1 = vector.load %arg2[%c0_1, %c0_2] : memref<1280x128xf32, #tpu.memory_space<vmem>>, vector<1280x128xf32>
    %cst = arith.constant dense<0.000000e+00> : vector<1x128xf32>
    %2 = tpu.matmul %0, %1, %cst {dimension_numbers = #tpu.dot_dimension_numbers<[1], [0], [0], [1], [0, 0, 1, 1], [], []>, precision = #tpu.contract_precision<fp32>} : vector<1x1280xf32>, vector<1280x128xf32>, vector<1x128xf32> -> vector<1x128xf32>
    %c0_3 = arith.constant 0 : index
    %c0_4 = arith.constant 0 : index
    %3 = vector.load %arg3[%c0_3, %c0_4] : memref<1x128xf32, #tpu.memory_space<vmem>>, vector<1x128xf32>
    %4 = arith.addf %2, %3 : vector<1x128xf32>
    %c0_5 = arith.constant 0 : index
    %c0_6 = arith.constant 0 : index
    %5 = vector.load %arg4[%c0_5, %c0_6] : memref<1x128xf32, #tpu.memory_space<vmem>>, vector<1x128xf32>
    tpu.vector_store %arg4[%c0_5, %c0_6], %4 {strides = array<i32>} : memref<1x128xf32, #tpu.memory_space<vmem>>, vector<1x128xf32>,
    return
  }
  func.func @transform_0(%arg0: i32) -> (i32, i32) {
    %c0_i32 = arith.constant 0 : i32
    %c0_i32_0 = arith.constant 0 : i32
    return %arg0, %c0_i32 : i32, i32
  }
  func.func @transform_1(%arg0: i32) -> (i32, i32) {
    %c0_i32 = arith.constant 0 : i32
    %c0_i32_0 = arith.constant 0 : i32
    %c0_i32_1 = arith.constant 0 : i32
    return %c0_i32, %c0_i32_0 : i32, i32
  }
  func.func @transform_2(%arg0: i32) -> (i32, i32) {
    %c0_i32 = arith.constant 0 : i32
    %c0_i32_0 = arith.constant 0 : i32
    %c0_i32_1 = arith.constant 0 : i32
    return %c0_i32, %c0_i32_0 : i32, i32
  }
  func.func @transform_3(%arg0: i32) -> (i32, i32) {
    %c0_i32 = arith.constant 0 : i32
    %c0_i32_0 = arith.constant 0 : i32
    return %arg0, %c0_i32 : i32, i32
  }
}

</mosaic_0001>

<llo_original>
// kernel: tpu_custom_call.1
$region0: #{tpu_custom_call.1}
  #allocation0 [shape = 'u32[]', space=smem, size = 0x4, offset = 0x4, fixed_abs, tag = 'smem constant byte address 0x4 - core index']
  #allocation1 [shape = 'u32[144,128]{1,0:T(1,128)}', space=vmem, size = 0x12000, scoped, tag = 'internal scratch']
  %s0 = inlined_call_operand.hbm [shape: f32[1,1280], index: 0, kind: input, shape index: {}]
  %s1 = inlined_call_operand.hbm [shape: f32[1280,128], index: 1, kind: input, shape index: {}]
  %s2 = inlined_call_operand.vmem [shape: f32[1,128], index: 2, kind: input, shape index: {}]
  %s3 = inlined_call_operand.hbm [shape: f32[1,128], index: 3, kind: output, shape index: {}]
  %s4 = sld [smem:[#allocation0]]
  $region30: #{tpu_custom_call.1} parent=0
    _
  %s6 = ssub.s32 1, %s4
  %s7 = scalar_select 0, %s6, %s4
  $region1: #{tpu_custom_call.1} parent=0
    #allocation2 [shape = 'u8[5120]{0}', space=vmem, size = 0x1400, scoped, tag = 'input window, operand 0, single buffered']
    #allocation3 [shape = 's32[1]{0}', space=sflag, size = 0x4, scoped, tag = 'scoped memory for tpu_custom_call.1']
    #allocation4 [shape = 's32[1]{0}', space=sflag, size = 0x4, scoped, tag = 'scoped memory for tpu_custom_call.1']
    #allocation5 [shape = 'u8[655360]{0}', space=vmem, size = 0xa0000, scoped, tag = 'input window, operand 1, single buffered']
    #allocation6 [shape = 's32[1]{0}', space=sflag, size = 0x4, scoped, tag = 'scoped memory for tpu_custom_call.1']
    #allocation7 [shape = 'u8[512]{0}', space=vmem, size = 0x400, scoped, tag = 'output window, operand 0, single buffered']
    %8 = vsyncpa [#allocation3], 0
    %9 = vsyncpa [#allocation6], 0
    %10 = vsyncpa [#allocation4], 0
    // Predicated region
    $region2: #{tpu_custom_call.1} parent=1 // pred_check
      _
    $region3: #{tpu_custom_call.1} parent=1 // pred_check_branch
      %12 = sbr.rel (0) target = $region5
    $region4: #{tpu_custom_call.1} parent=1 // pred_region
      %s14 = ssub.s32 160, 160
      %15 = vsyncadd [#allocation3], %s14
      %s17 = sshll.u32 [#allocation2], 4
      %s18 = int_to_ptr.vmem [resolvable:$true] %s17
      %20 = dma.hbm_to_vmem [thread:$0]  %s0, 160, %s18, [#allocation3]
    $region5: #{tpu_custom_call.1} parent=1 // pred_fallthru
      _
    // Predicated region
    $region6: #{tpu_custom_call.1} parent=1 // pred_check
      _
    $region7: #{tpu_custom_call.1} parent=1 // pred_check_branch
      %22 = sbr.rel (0) target = $region9
    $region8: #{tpu_custom_call.1} parent=1 // pred_region
      %s24 = ssub.s32 20480, 20480
      %25 = vsyncadd [#allocation6], %s24
      %s26 = sshll.u32 [#allocation5], 4
      %s27 = int_to_ptr.vmem [resolvable:$true] %s26
      %32 = dma.hbm_to_vmem [thread:$0]  %s1, 20480, %s27, [#allocation6], 128, 128, 8
    $region9: #{tpu_custom_call.1} parent=1 // pred_fallthru
      _
    // Predicated region
    $region10: #{tpu_custom_call.1} parent=1 // pred_check
      _
    $region11: #{tpu_custom_call.1} parent=1 // pred_check_branch
      %34 = sbr.rel (0) target = $region13
    $region12: #{tpu_custom_call.1} parent=1 // pred_region
      _
    $region13: #{tpu_custom_call.1} parent=1 // pred_fallthru
      _
    // Predicated region
    $region14: #{tpu_custom_call.1} parent=1 // pred_check
      _
    $region15: #{tpu_custom_call.1} parent=1 // pred_check_branch
      %36 = sbr.rel (0) target = $region17
    $region16: #{tpu_custom_call.1} parent=1 // pred_region
      %37 = dma.done [#allocation3], 160
    $region17: #{tpu_custom_call.1} parent=1 // pred_fallthru
      _
    // Predicated region
    $region18: #{tpu_custom_call.1} parent=1 // pred_check
      _
    $region19: #{tpu_custom_call.1} parent=1 // pred_check_branch
      %39 = sbr.rel (0) target = $region21
    $region20: #{tpu_custom_call.1} parent=1 // pred_region
      %40 = dma.done [#allocation6], 20480
    $region21: #{tpu_custom_call.1} parent=1 // pred_fallthru
      _
    %v41 = vld [vmem:[#allocation2] sm:$0xff]
    %v42 = vld [vmem:[#allocation2 + $0x8] sm:$0x3]
    %v43 = vld [vmem:[#allocation5] sm:$0xff]
    %v44 = vld [vmem:[#allocation5 + $0x8] sm:$0xff]
    %v45 = vld [vmem:[#allocation5 + $0x10] sm:$0xff]
    %v46 = vld [vmem:[#allocation5 + $0x18] sm:$0xff]
    %v47 = vld [vmem:[#allocation5 + $0x20] sm:$0xff]
    %v48 = vld [vmem:[#allocation5 + $0x28] sm:$0xff]
    %v49 = vld [vmem:[#allocation5 + $0x30] sm:$0xff]
    %v50 = vld [vmem:[#allocation5 + $0x38] sm:$0xff]
    %v51 = vld [vmem:[#allocation5 + $0x40] sm:$0xff]
    %v52 = vld [vmem:[#allocation5 + $0x48] sm:$0xff]
    %v53 = vld [vmem:[#allocation5 + $0x50] sm:$0xff]
    %v54 = vld [vmem:[#allocation5 + $0x58] sm:$0xff]
    %v55 = vld [vmem:[#allocation5 + $0x60] sm:$0xff]
    %v56 = vld [vmem:[#allocation5 + $0x68] sm:$0xff]
    %v57 = vld [vmem:[#allocation5 + $0x70] sm:$0xff]
    %v58 = vld [vmem:[#allocation5 + $0x78] sm:$0xff]
    %v59 = vld [vmem:[#allocation5 + $0x80] sm:$0xff]
    %v60 = vld [vmem:[#allocation5 + $0x88] sm:$0xff]
    %v61 = vld [vmem:[#allocation5 + $0x90] sm:$0xff]
    %v62 = vld [vmem:[#allocation5 + $0x98] sm:$0xff]
    %v63 = vld [vmem:[#allocation5 + $0xa0] sm:$0xff]
    %v64 = vld [vmem:[#allocation5 + $0xa8] sm:$0xff]
    %v65 = vld [vmem:[#allocation5 + $0xb0] sm:$0xff]
    %v66 = vld [vmem:[#allocation5 + $0xb8] sm:$0xff]
    %v67 = vld [vmem:[#allocation5 + $0xc0] sm:$0xff]
    %v68 = vld [vmem:[#allocation5 + $0xc8] sm:$0xff]
    %v69 = vld [vmem:[#allocation5 + $0xd0] sm:$0xff]
    %v70 = vld [vmem:[#allocation5 + $0xd8] sm:$0xff]
    %v71 = vld [vmem:[#allocation5 + $0xe0] sm:$0xff]
    %v72 = vld [vmem:[#allocation5 + $0xe8] sm:$0xff]
    %v73 = vld [vmem:[#allocation5 + $0xf0] sm:$0xff]
    %v74 = vld [vmem:[#allocation5 + $0xf8] sm:$0xff]
    %v75 = vld [vmem:[#allocation5 + $0x100] sm:$0xff]
    %v76 = vld [vmem:[#allocation5 + $0x108] sm:$0xff]
    %v77 = vld [vmem:[#allocation5 + $0x110] sm:$0xff]
    %v78 = vld [vmem:[#allocation5 + $0x118] sm:$0xff]
    %v79 = vld [vmem:[#allocation5 + $0x120] sm:$0xff]
    %v80 = vld [vmem:[#allocation5 + $0x128] sm:$0xff]
    %v81 = vld [vmem:[#allocation5 + $0x130] sm:$0xff]
    %v82 = vld [vmem:[#allocation5 + $0x138] sm:$0xff]
    %v83 = vld [vmem:[#allocation5 + $0x140] sm:$0xff]
    %v84 = vld [vmem:[#allocation5 + $0x148] sm:$0xff]
    %v85 = vld [vmem:[#allocation5 + $0x150] sm:$0xff]
    %v86 = vld [vmem:[#allocation5 + $0x158] sm:$0xff]
    %v87 = vld [vmem:[#allocation5 + $0x160] sm:$0xff]
    %v88 = vld [vmem:[#allocation5 + $0x168] sm:$0xff]
    %v89 = vld [vmem:[#allocation5 + $0x170] sm:$0xff]
    %v90 = vld [vmem:[#allocation5 + $0x178] sm:$0xff]
    %v91 = vld [vmem:[#allocation5 + $0x180] sm:$0xff]
    %v92 = vld [vmem:[#allocation5 + $0x188] sm:$0xff]
    %v93 = vld [vmem:[#allocation5 + $0x190] sm:$0xff]
    %v94 = vld [vmem:[#allocation5 + $0x198] sm:$0xff]
    %v95 = vld [vmem:[#allocation5 + $0x1a0] sm:$0xff]
    %v96 = vld [vmem:[#allocation5 + $0x1a8] sm:$0xff]
    %v97 = vld [vmem:[#allocation5 + $0x1b0] sm:$0xff]
    %v98 = vld [vmem:[#allocation5 + $0x1b8] sm:$0xff]
    %v99 = vld [vmem:[#allocation5 + $0x1c0] sm:$0xff]
    %v100 = vld [vmem:[#allocation5 + $0x1c8] sm:$0xff]
    %v101 = vld [vmem:[#allocation5 + $0x1d0] sm:$0xff]
    %v102 = vld [vmem:[#allocation5 + $0x1d8] sm:$0xff]
    %v103 = vld [vmem:[#allocation5 + $0x1e0] sm:$0xff]
    %v104 = vld [vmem:[#allocation5 + $0x1e8] sm:$0xff]
    %v105 = vld [vmem:[#allocation5 + $0x1f0] sm:$0xff]
    %v106 = vld [vmem:[#allocation5 + $0x1f8] sm:$0xff]
    %v107 = vld [vmem:[#allocation5 + $0x200] sm:$0xff]
    %v108 = vld [vmem:[#allocation5 + $0x208] sm:$0xff]
    %v109 = vld [vmem:[#allocation5 + $0x210] sm:$0xff]
    %v110 = vld [vmem:[#allocation5 + $0x218] sm:$0xff]
    %v111 = vld [vmem:[#allocation5 + $0x220] sm:$0xff]
    %v112 = vld [vmem:[#allocation5 + $0x228] sm:$0xff]
    %v113 = vld [vmem:[#allocation5 + $0x230] sm:$0xff]
    %v114 = vld [vmem:[#allocation5 + $0x238] sm:$0xff]
    %v115 = vld [vmem:[#allocation5 + $0x240] sm:$0xff]
    %v116 = vld [vmem:[#allocation5 + $0x248] sm:$0xff]
    %v117 = vld [vmem:[#allocation5 + $0x250] sm:$0xff]
    %v118 = vld [vmem:[#allocation5 + $0x258] sm:$0xff]
    %v119 = vld [vmem:[#allocation5 + $0x260] sm:$0xff]
    %v120 = vld [vmem:[#allocation5 + $0x268] sm:$0xff]
    %v121 = vld [vmem:[#allocation5 + $0x270] sm:$0xff]
    %v122 = vld [vmem:[#allocation5 + $0x278] sm:$0xff]
    %v123 = vld [vmem:[#allocation5 + $0x280] sm:$0xff]
    %v124 = vld [vmem:[#allocation5 + $0x288] sm:$0xff]
    %v125 = vld [vmem:[#allocation5 + $0x290] sm:$0xff]
    %v126 = vld [vmem:[#allocation5 + $0x298] sm:$0xff]
    %v127 = vld [vmem:[#allocation5 + $0x2a0] sm:$0xff]
    %v128 = vld [vmem:[#allocation5 + $0x2a8] sm:$0xff]
    %v129 = vld [vmem:[#allocation5 + $0x2b0] sm:$0xff]
    %v130 = vld [vmem:[#allocation5 + $0x2b8] sm:$0xff]
    %v131 = vld [vmem:[#allocation5 + $0x2c0] sm:$0xff]
    %v132 = vld [vmem:[#allocation5 + $0x2c8] sm:$0xff]
    %v133 = vld [vmem:[#allocation5 + $0x2d0] sm:$0xff]
    %v134 = vld [vmem:[#allocation5 + $0x2d8] sm:$0xff]
    %v135 = vld [vmem:[#allocation5 + $0x2e0] sm:$0xff]
    %v136 = vld [vmem:[#allocation5 + $0x2e8] sm:$0xff]
    %v137 = vld [vmem:[#allocation5 + $0x2f0] sm:$0xff]
    %v138 = vld [vmem:[#allocation5 + $0x2f8] sm:$0xff]
    %v139 = vld [vmem:[#allocation5 + $0x300] sm:$0xff]
    %v140 = vld [vmem:[#allocation5 + $0x308] sm:$0xff]
    %v141 = vld [vmem:[#allocation5 + $0x310] sm:$0xff]
    %v142 = vld [vmem:[#allocation5 + $0x318] sm:$0xff]
    %v143 = vld [vmem:[#allocation5 + $0x320] sm:$0xff]
    %v144 = vld [vmem:[#allocation5 + $0x328] sm:$0xff]
    %v145 = vld [vmem:[#allocation5 + $0x330] sm:$0xff]
    %v146 = vld [vmem:[#allocation5 + $0x338] sm:$0xff]
    %v147 = vld [vmem:[#allocation5 + $0x340] sm:$0xff]
    %v148 = vld [vmem:[#allocation5 + $0x348] sm:$0xff]
    %v149 = vld [vmem:[#allocation5 + $0x350] sm:$0xff]
    %v150 = vld [vmem:[#allocation5 + $0x358] sm:$0xff]
    %v151 = vld [vmem:[#allocation5 + $0x360] sm:$0xff]
    %v152 = vld [vmem:[#allocation5 + $0x368] sm:$0xff]
    %v153 = vld [vmem:[#allocation5 + $0x370] sm:$0xff]
    %v154 = vld [vmem:[#allocation5 + $0x378] sm:$0xff]
    %v155 = vld [vmem:[#allocation5 + $0x380] sm:$0xff]
    %v156 = vld [vmem:[#allocation5 + $0x388] sm:$0xff]
    %v157 = vld [vmem:[#allocation5 + $0x390] sm:$0xff]
    %v158 = vld [vmem:[#allocation5 + $0x398] sm:$0xff]
    %v159 = vld [vmem:[#allocation5 + $0x3a0] sm:$0xff]
    %v160 = vld [vmem:[#allocation5 + $0x3a8] sm:$0xff]
    %v161 = vld [vmem:[#allocation5 + $0x3b0] sm:$0xff]
    %v162 = vld [vmem:[#allocation5 + $0x3b8] sm:$0xff]
    %v163 = vld [vmem:[#allocation5 + $0x3c0] sm:$0xff]
    %v164 = vld [vmem:[#allocation5 + $0x3c8] sm:$0xff]
    %v165 = vld [vmem:[#allocation5 + $0x3d0] sm:$0xff]
    %v166 = vld [vmem:[#allocation5 + $0x3d8] sm:$0xff]
    %v167 = vld [vmem:[#allocation5 + $0x3e0] sm:$0xff]
    %v168 = vld [vmem:[#allocation5 + $0x3e8] sm:$0xff]
    %v169 = vld [vmem:[#allocation5 + $0x3f0] sm:$0xff]
    %v170 = vld [vmem:[#allocation5 + $0x3f8] sm:$0xff]
    %v171 = vld [vmem:[#allocation5 + $0x400] sm:$0xff]
    %v172 = vld [vmem:[#allocation5 + $0x408] sm:$0xff]
    %v173 = vld [vmem:[#allocation5 + $0x410] sm:$0xff]
    %v174 = vld [vmem:[#allocation5 + $0x418] sm:$0xff]
    %v175 = vld [vmem:[#allocation5 + $0x420] sm:$0xff]
    %v176 = vld [vmem:[#allocation5 + $0x428] sm:$0xff]
    %v177 = vld [vmem:[#allocation5 + $0x430] sm:$0xff]
    %v178 = vld [vmem:[#allocation5 + $0x438] sm:$0xff]
    %v179 = vld [vmem:[#allocation5 + $0x440] sm:$0xff]
    %v180 = vld [vmem:[#allocation5 + $0x448] sm:$0xff]
    %v181 = vld [vmem:[#allocation5 + $0x450] sm:$0xff]
    %v182 = vld [vmem:[#allocation5 + $0x458] sm:$0xff]
    %v183 = vld [vmem:[#allocation5 + $0x460] sm:$0xff]
    %v184 = vld [vmem:[#allocation5 + $0x468] sm:$0xff]
    %v185 = vld [vmem:[#allocation5 + $0x470] sm:$0xff]
    %v186 = vld [vmem:[#allocation5 + $0x478] sm:$0xff]
    %v187 = vld [vmem:[#allocation5 + $0x480] sm:$0xff]
    %v188 = vld [vmem:[#allocation5 + $0x488] sm:$0xff]
    %v189 = vld [vmem:[#allocation5 + $0x490] sm:$0xff]
    %v190 = vld [vmem:[#allocation5 + $0x498] sm:$0xff]
    %v191 = vld [vmem:[#allocation5 + $0x4a0] sm:$0xff]
    %v192 = vld [vmem:[#allocation5 + $0x4a8] sm:$0xff]
    %v193 = vld [vmem:[#allocation5 + $0x4b0] sm:$0xff]
    %v194 = vld [vmem:[#allocation5 + $0x4b8] sm:$0xff]
    %v195 = vld [vmem:[#allocation5 + $0x4c0] sm:$0xff]
    %v196 = vld [vmem:[#allocation5 + $0x4c8] sm:$0xff]
    %v197 = vld [vmem:[#allocation5 + $0x4d0] sm:$0xff]
    %v198 = vld [vmem:[#allocation5 + $0x4d8] sm:$0xff]
    %v199 = vld [vmem:[#allocation5 + $0x4e0] sm:$0xff]
    %v200 = vld [vmem:[#allocation5 + $0x4e8] sm:$0xff]
    %v201 = vld [vmem:[#allocation5 + $0x4f0] sm:$0xff]
    %v202 = vld [vmem:[#allocation5 + $0x4f8] sm:$0xff]
    %v203 = vld [vmem:[%s2] sm:$0x1]
    %v206 = vlaneseq
    %v207 = vshrl.u32 %v206, 7
    %v208 = vsub.s32 0, %v207
    %v209 = vrot.slane %v41, %v208
    %v210 = vlaneseq
    %v211 = vshrl.u32 %v210, 7
    %v212 = vsub.s32 1, %v211
    %v213 = vrot.slane %v41, %v212
    %v214 = vlaneseq
    %v215 = vshrl.u32 %v214, 7
    %v216 = vsub.s32 2, %v215
    %v217 = vrot.slane %v41, %v216
    %v218 = vlaneseq
    %v219 = vshrl.u32 %v218, 7
    %v220 = vsub.s32 3, %v219
    %v221 = vrot.slane %v41, %v220
    %v222 = vlaneseq
    %v223 = vshrl.u32 %v222, 7
    %v224 = vsub.s32 4, %v223
    %v225 = vrot.slane %v41, %v224
    %v226 = vlaneseq
    %v227 = vshrl.u32 %v226, 7
    %v228 = vsub.s32 5, %v227
    %v229 = vrot.slane %v41, %v228
    %v230 = vlaneseq
    %v231 = vshrl.u32 %v230, 7
    %v232 = vsub.s32 6, %v231
    %v233 = vrot.slane %v41, %v232
    %v234 = vlaneseq
    %v235 = vshrl.u32 %v234, 7
    %v236 = vsub.s32 7, %v235
    %v237 = vrot.slane %v41, %v236
    %v238 = vlaneseq
    %v239 = vshrl.u32 %v238, 7
    %v240 = vsub.s32 0, %v239
    %v241 = vrot.slane %v42, %v240
    %v242 = vlaneseq
    %v243 = vshrl.u32 %v242, 7
    %v244 = vsub.s32 1, %v243
    %v245 = vrot.slane %v42, %v244
    %256 = vmatprep.subr.mxu0 0.0
    %v257 = vand.u32 %v43, 4294901760
    %258 = vmatpush1.msra.mxu0 %v257
    %259 = vmatprep.subr.mxu0 0.0
    %v260 = vand.u32 %v44, 4294901760
    %261 = vmatpush1.msra.mxu0 %v260
    %262 = vmatprep.subr.mxu0 0.0
    %v263 = vand.u32 %v45, 4294901760
    %264 = vmatpush1.msra.mxu0 %v263
    %265 = vmatprep.subr.mxu0 0.0
    %v266 = vand.u32 %v46, 4294901760
    %267 = vmatpush1.msra.mxu0 %v266
    %268 = vmatprep.subr.mxu0 0.0
    %v269 = vand.u32 %v47, 4294901760
    %270 = vmatpush1.msra.mxu0 %v269
    %271 = vmatprep.subr.mxu0 0.0
    %v272 = vand.u32 %v48, 4294901760
    %273 = vmatpush1.msra.mxu0 %v272
    %274 = vmatprep.subr.mxu0 0.0
    %v275 = vand.u32 %v49, 4294901760
    %276 = vmatpush1.msra.mxu0 %v275
    %277 = vmatprep.subr.mxu0 0.0
    %v278 = vand.u32 %v50, 4294901760
    %279 = vmatpush1.msra.mxu0 %v278
    %280 = vmatprep.subr.mxu0 0.0
    %v281 = vand.u32 %v51, 4294901760
    %282 = vmatpush1.msra.mxu0 %v281
    %283 = vmatprep.subr.mxu0 0.0
    %v284 = vand.u32 %v52, 4294901760
    %285 = vmatpush1.msra.mxu0 %v284
    %286 = vmatprep.subr.mxu0 0.0
    %v287 = vand.u32 %v53, 4294901760
    %288 = vmatpush1.msra.mxu0 %v287
    %289 = vmatprep.subr.mxu0 0.0
    %v290 = vand.u32 %v54, 4294901760
    %291 = vmatpush1.msra.mxu0 %v290
    %292 = vmatprep.subr.mxu0 0.0
    %v293 = vand.u32 %v55, 4294901760
    %294 = vmatpush1.msra.mxu0 %v293
    %295 = vmatprep.subr.mxu0 0.0
    %v296 = vand.u32 %v56, 4294901760
    %297 = vmatpush1.msra.mxu0 %v296
    %298 = vmatprep.subr.mxu0 0.0
    %v299 = vand.u32 %v57, 4294901760
    %300 = vmatpush1.msra.mxu0 %v299
    %301 = vmatprep.subr.mxu0 0.0
    %v302 = vand.u32 %v58, 4294901760
    %303 = vmatpush1.msra.mxu0 %v302
    %304 = vmatprep.subr.mxu0 0.0
    %v305 = vand.u32 %v59, 4294901760
    %306 = vmatpush1.msra.mxu0 %v305
    %307 = vmatprep.subr.mxu0 0.0
    %v308 = vand.u32 %v60, 4294901760
    %309 = vmatpush1.msra.mxu0 %v308
    %310 = vmatprep.subr.mxu0 0.0
    %v311 = vand.u32 %v61, 4294901760
    %312 = vmatpush1.msra.mxu0 %v311
    %313 = vmatprep.subr.mxu0 0.0
    %v314 = vand.u32 %v62, 4294901760
    %315 = vmatpush1.msra.mxu0 %v314
    %316 = vmatprep.subr.mxu0 0.0
    %v317 = vand.u32 %v63, 4294901760
    %318 = vmatpush1.msra.mxu0 %v317
    %319 = vmatprep.subr.mxu0 0.0
    %v320 = vand.u32 %v64, 4294901760
    %321 = vmatpush1.msra.mxu0 %v320
    %322 = vmatprep.subr.mxu0 0.0
    %v323 = vand.u32 %v65, 4294901760
    %324 = vmatpush1.msra.mxu0 %v323
    %325 = vmatprep.subr.mxu0 0.0
    %v326 = vand.u32 %v66, 4294901760
    %327 = vmatpush1.msra.mxu0 %v326
    %328 = vmatprep.subr.mxu0 0.0
    %v329 = vand.u32 %v67, 4294901760
    %330 = vmatpush1.msra.mxu0 %v329
    %331 = vmatprep.subr.mxu0 0.0
    %v332 = vand.u32 %v68, 4294901760
    %333 = vmatpush1.msra.mxu0 %v332
    %334 = vmatprep.subr.mxu0 0.0
    %v335 = vand.u32 %v69, 4294901760
    %336 = vmatpush1.msra.mxu0 %v335
    %337 = vmatprep.subr.mxu0 0.0
    %v338 = vand.u32 %v70, 4294901760
    %339 = vmatpush1.msra.mxu0 %v338
    %340 = vmatprep.subr.mxu0 0.0
    %v341 = vand.u32 %v71, 4294901760
    %342 = vmatpush1.msra.mxu0 %v341
    %343 = vmatprep.subr.mxu0 0.0
    %v344 = vand.u32 %v72, 4294901760
    %345 = vmatpush1.msra.mxu0 %v344
    %346 = vmatprep.subr.mxu0 0.0
    %v347 = vand.u32 %v73, 4294901760
    %348 = vmatpush1.msra.mxu0 %v347
    %349 = vmatprep.subr.mxu0 0.0
    %v350 = vand.u32 %v74, 4294901760
    %351 = vmatpush1.msra.mxu0 %v350
    %v352 = vand.u32 %v213, 4294901760
    %v353 = vsub.f32 %v213, %v352
    %v354 = vand.u32 %v353, 4294901760
    %v355 = vsub.f32 %v353, %v354
    %v356 = vand.u32 %v355, 4294901760
    %357 = vmatprep.mubr.f32.mxu0 %v356
    %v358 = vand.u32 %v209, 4294901760
    %v359 = vsub.f32 %v209, %v358
    %v360 = vand.u32 %v359, 4294901760
    %v361 = vsub.f32 %v359, %v360
    %v362 = vand.u32 %v361, 4294901760
    %363 = vmatmul.mubr.f32.gmra.mrb[0].mxu0 %v362
    %v364 = vpop.f32.mrb[0].mxu0
    %v365 = vadd.f32 %v203, %v364
    %v366 = vpop.f32.mrb[0].mxu0
    %367 = vdwg.mxu0
    %368 = vmatprep.subr.mxu0 0.0
    %v369 = vand.u32 %v43, 4294901760
    %v370 = vsub.f32 %v43, %v369
    %v371 = vand.u32 %v370, 4294901760
    %v372 = vsub.f32 %v370, %v371
    %v373 = vand.u32 %v372, 4294901760
    %374 = vmatpush1.msra.mxu0 %v373
    %375 = vmatprep.subr.mxu0 0.0
    %v376 = vand.u32 %v44, 4294901760
    %v377 = vsub.f32 %v44, %v376
    %v378 = vand.u32 %v377, 4294901760
    %v379 = vsub.f32 %v377, %v378
    %v380 = vand.u32 %v379, 4294901760
    %381 = vmatpush1.msra.mxu0 %v380
    %382 = vmatprep.subr.mxu0 0.0
    %v383 = vand.u32 %v45, 4294901760
    %v384 = vsub.f32 %v45, %v383
    %v385 = vand.u32 %v384, 4294901760
    %v386 = vsub.f32 %v384, %v385
    %v387 = vand.u32 %v386, 4294901760
    %388 = vmatpush1.msra.mxu0 %v387
    %389 = vmatprep.subr.mxu0 0.0
    %v390 = vand.u32 %v46, 4294901760
    %v391 = vsub.f32 %v46, %v390
    %v392 = vand.u32 %v391, 4294901760
    %v393 = vsub.f32 %v391, %v392
    %v394 = vand.u32 %v393, 4294901760
    %395 = vmatpush1.msra.mxu0 %v394
    %396 = vmatprep.subr.mxu0 0.0
    %v397 = vand.u32 %v47, 4294901760
    %v398 = vsub.f32 %v47, %v397
    %v399 = vand.u32 %v398, 4294901760
    %v400 = vsub.f32 %v398, %v399
    %v401 = vand.u32 %v400, 4294901760
    %402 = vmatpush1.msra.mxu0 %v401
    %403 = vmatprep.subr.mxu0 0.0
    %v404 = vand.u32 %v48, 4294901760
    %v405 = vsub.f32 %v48, %v404
    %v406 = vand.u32 %v405, 4294901760
    %v407 = vsub.f32 %v405, %v406
    %v408 = vand.u32 %v407, 4294901760
    %409 = vmatpush1.msra.mxu0 %v408
    %410 = vmatprep.subr.mxu0 0.0
    %v411 = vand.u32 %v49, 4294901760
    %v412 = vsub.f32 %v49, %v411
    %v413 = vand.u32 %v412, 4294901760
    %v414 = vsub.f32 %v412, %v413
    %v415 = vand.u32 %v414, 4294901760
    %416 = vmatpush1.msra.mxu0 %v415
    %417 = vmatprep.subr.mxu0 0.0
    %v418 = vand.u32 %v50, 4294901760
    %v419 = vsub.f32 %v50, %v418
    %v420 = vand.u32 %v419, 4294901760
    %v421 = vsub.f32 %v419, %v420
    %v422 = vand.u32 %v421, 4294901760
    %423 = vmatpush1.msra.mxu0 %v422
    %424 = vmatprep.subr.mxu0 0.0
    %v425 = vand.u32 %v51, 4294901760
    %v426 = vsub.f32 %v51, %v425
    %v427 = vand.u32 %v426, 4294901760
    %v428 = vsub.f32 %v426, %v427
    %v429 = vand.u32 %v428, 4294901760
    %430 = vmatpush1.msra.mxu0 %v429
    %431 = vmatprep.subr.mxu0 0.0
    %v432 = vand.u32 %v52, 4294901760
    %v433 = vsub.f32 %v52, %v432
    %v434 = vand.u32 %v433, 4294901760
    %v435 = vsub.f32 %v433, %v434
    %v436 = vand.u32 %v435, 4294901760
    %437 = vmatpush1.msra.mxu0 %v436
    %438 = vmatprep.subr.mxu0 0.0
    %v439 = vand.u32 %v53, 4294901760
    %v440 = vsub.f32 %v53, %v439
    %v441 = vand.u32 %v440, 4294901760
    %v442 = vsub.f32 %v440, %v441
    %v443 = vand.u32 %v442, 4294901760
    %444 = vmatpush1.msra.mxu0 %v443
    %445 = vmatprep.subr.mxu0 0.0
    %v446 = vand.u32 %v54, 4294901760
    %v447 = vsub.f32 %v54, %v446
    %v448 = vand.u32 %v447, 4294901760
    %v449 = vsub.f32 %v447, %v448
    %v450 = vand.u32 %v449, 4294901760
    %451 = vmatpush1.msra.mxu0 %v450
    %452 = vmatprep.subr.mxu0 0.0
    %v453 = vand.u32 %v55, 4294901760
    %v454 = vsub.f32 %v55, %v453
    %v455 = vand.u32 %v454, 4294901760
    %v456 = vsub.f32 %v454, %v455
    %v457 = vand.u32 %v456, 4294901760
    %458 = vmatpush1.msra.mxu0 %v457
    %459 = vmatprep.subr.mxu0 0.0
    %v460 = vand.u32 %v56, 4294901760
    %v461 = vsub.f32 %v56, %v460
    %v462 = vand.u32 %v461, 4294901760
    %v463 = vsub.f32 %v461, %v462
    %v464 = vand.u32 %v463, 4294901760
    %465 = vmatpush1.msra.mxu0 %v464
    %466 = vmatprep.subr.mxu0 0.0
    %v467 = vand.u32 %v57, 4294901760
    %v468 = vsub.f32 %v57, %v467
    %v469 = vand.u32 %v468, 4294901760
    %v470 = vsub.f32 %v468, %v469
    %v471 = vand.u32 %v470, 4294901760
    %472 = vmatpush1.msra.mxu0 %v471
    %473 = vmatprep.subr.mxu0 0.0
    %v474 = vand.u32 %v58, 4294901760
    %v475 = vsub.f32 %v58, %v474
    %v476 = vand.u32 %v475, 4294901760
    %v477 = vsub.f32 %v475, %v476
    %v478 = vand.u32 %v477, 4294901760
    %479 = vmatpush1.msra.mxu0 %v478
    %480 = vmatprep.subr.mxu0 0.0
    %v481 = vand.u32 %v59, 4294901760
    %v482 = vsub.f32 %v59, %v481
    %v483 = vand.u32 %v482, 4294901760
    %v484 = vsub.f32 %v482, %v483
    %v485 = vand.u32 %v484, 4294901760
    %486 = vmatpush1.msra.mxu0 %v485
    %487 = vmatprep.subr.mxu0 0.0
    %v488 = vand.u32 %v60, 4294901760
    %v489 = vsub.f32 %v60, %v488
    %v490 = vand.u32 %v489, 4294901760
    %v491 = vsub.f32 %v489, %v490
    %v492 = vand.u32 %v491, 4294901760
    %493 = vmatpush1.msra.mxu0 %v492
    %494 = vmatprep.subr.mxu0 0.0
    %v495 = vand.u32 %v61, 4294901760
    %v496 = vsub.f32 %v61, %v495
    %v497 = vand.u32 %v496, 4294901760
    %v498 = vsub.f32 %v496, %v497
    %v499 = vand.u32 %v498, 4294901760
    %500 = vmatpush1.msra.mxu0 %v499
    %501 = vmatprep.subr.mxu0 0.0
    %v502 = vand.u32 %v62, 4294901760
    %v503 = vsub.f32 %v62, %v502
    %v504 = vand.u32 %v503, 4294901760
    %v505 = vsub.f32 %v503, %v504
    %v506 = vand.u32 %v505, 4294901760
    %507 = vmatpush1.msra.mxu0 %v506
    %508 = vmatprep.subr.mxu0 0.0
    %v509 = vand.u32 %v63, 4294901760
    %v510 = vsub.f32 %v63, %v509
    %v511 = vand.u32 %v510, 4294901760
    %v512 = vsub.f32 %v510, %v511
    %v513 = vand.u32 %v512, 4294901760
    %514 = vmatpush1.msra.mxu0 %v513
    %515 = vmatprep.subr.mxu0 0.0
    %v516 = vand.u32 %v64, 4294901760
    %v517 = vsub.f32 %v64, %v516
    %v518 = vand.u32 %v517, 4294901760
    %v519 = vsub.f32 %v517, %v518
    %v520 = vand.u32 %v519, 4294901760
    %521 = vmatpush1.msra.mxu0 %v520
    %522 = vmatprep.subr.mxu0 0.0
    %v523 = vand.u32 %v65, 4294901760
    %v524 = vsub.f32 %v65, %v523
    %v525 = vand.u32 %v524, 4294901760
    %v526 = vsub.f32 %v524, %v525
    %v527 = vand.u32 %v526, 4294901760
    %528 = vmatpush1.msra.mxu0 %v527
    %529 = vmatprep.subr.mxu0 0.0
    %v530 = vand.u32 %v66, 4294901760
    %v531 = vsub.f32 %v66, %v530
    %v532 = vand.u32 %v531, 4294901760
    %v533 = vsub.f32 %v531, %v532
    %v534 = vand.u32 %v533, 4294901760
    %535 = vmatpush1.msra.mxu0 %v534
    %536 = vmatprep.subr.mxu0 0.0
    %v537 = vand.u32 %v67, 4294901760
    %v538 = vsub.f32 %v67, %v537
    %v539 = vand.u32 %v538, 4294901760
    %v540 = vsub.f32 %v538, %v539
    %v541 = vand.u32 %v540, 4294901760
    %542 = vmatpush1.msra.mxu0 %v541
    %543 = vmatprep.subr.mxu0 0.0
    %v544 = vand.u32 %v68, 4294901760
    %v545 = vsub.f32 %v68, %v544
    %v546 = vand.u32 %v545, 4294901760
    %v547 = vsub.f32 %v545, %v546
    %v548 = vand.u32 %v547, 4294901760
    %549 = vmatpush1.msra.mxu0 %v548
    %550 = vmatprep.subr.mxu0 0.0
    %v551 = vand.u32 %v69, 4294901760
    %v552 = vsub.f32 %v69, %v551
    %v553 = vand.u32 %v552, 4294901760
    %v554 = vsub.f32 %v552, %v553
    %v555 = vand.u32 %v554, 4294901760
    %556 = vmatpush1.msra.mxu0 %v555
    %557 = vmatprep.subr.mxu0 0.0
    %v558 = vand.u32 %v70, 4294901760
    %v559 = vsub.f32 %v70, %v558
    %v560 = vand.u32 %v559, 4294901760
    %v561 = vsub.f32 %v559, %v560
    %v562 = vand.u32 %v561, 4294901760
    %563 = vmatpush1.msra.mxu0 %v562
    %564 = vmatprep.subr.mxu0 0.0
    %v565 = vand.u32 %v71, 4294901760
    %v566 = vsub.f32 %v71, %v565
    %v567 = vand.u32 %v566, 4294901760
    %v568 = vsub.f32 %v566, %v567
    %v569 = vand.u32 %v568, 4294901760
    %570 = vmatpush1.msra.mxu0 %v569
    %571 = vmatprep.subr.mxu0 0.0
    %v572 = vand.u32 %v72, 4294901760
    %v573 = vsub.f32 %v72, %v572
    %v574 = vand.u32 %v573, 4294901760
    %v575 = vsub.f32 %v573, %v574
    %v576 = vand.u32 %v575, 4294901760
    %577 = vmatpush1.msra.mxu0 %v576
    %578 = vmatprep.subr.mxu0 0.0
    %v579 = vand.u32 %v73, 4294901760
    %v580 = vsub.f32 %v73, %v579
    %v581 = vand.u32 %v580, 4294901760
    %v582 = vsub.f32 %v580, %v581
    %v583 = vand.u32 %v582, 4294901760
    %584 = vmatpush1.msra.mxu0 %v583
    %585 = vmatprep.subr.mxu0 0.0
    %v586 = vand.u32 %v74, 4294901760
    %v587 = vsub.f32 %v74, %v586
    %v588 = vand.u32 %v587, 4294901760
    %v589 = vsub.f32 %v587, %v588
    %v590 = vand.u32 %v589, 4294901760
    %591 = vmatpush1.msra.mxu0 %v590
    %v592 = vand.u32 %v213, 4294901760
    %593 = vmatprep.mubr.f32.mxu0 %v592
    %v594 = vand.u32 %v209, 4294901760
    %595 = vmatmul.mubr.f32.gmra.mrb[0].mxu0 %v594
    %v596 = vpop.f32.mrb[0].mxu0
    %v597 = vadd.f32 %v365, %v596
    %v598 = vpop.f32.mrb[0].mxu0
    %599 = vdwg.mxu0
    %600 = vmatprep.subr.mxu0 0.0
    %v601 = vand.u32 %v43, 4294901760
    %v602 = vsub.f32 %v43, %v601
    %603 = vmatpush1.msra.mxu0 %v602
    %604 = vmatprep.subr.mxu0 0.0
    %v605 = vand.u32 %v44, 4294901760
    %v606 = vsub.f32 %v44, %v605
    %607 = vmatpush1.msra.mxu0 %v606
    %608 = vmatprep.subr.mxu0 0.0
    %v609 = vand.u32 %v45, 4294901760
    %v610 = vsub.f32 %v45, %v609
    %611 = vmatpush1.msra.mxu0 %v610
    %612 = vmatprep.subr.mxu0 0.0
    %v613 = vand.u32 %v46, 4294901760
    %v614 = vsub.f32 %v46, %v613
    %615 = vmatpush1.msra.mxu0 %v614
    %616 = vmatprep.subr.mxu0 0.0
    %v617 = vand.u32 %v47, 4294901760
    %v618 = vsub.f32 %v47, %v617
    %619 = vmatpush1.msra.mxu0 %v618
    %620 = vmatprep.subr.mxu0 0.0
    %v621 = vand.u32 %v48, 4294901760
    %v622 = vsub.f32 %v48, %v621
    %623 = vmatpush1.msra.mxu0 %v622
    %624 = vmatprep.subr.mxu0 0.0
    %v625 = vand.u32 %v49, 4294901760
    %v626 = vsub.f32 %v49, %v625
    %627 = vmatpush1.msra.mxu0 %v626
    %628 = vmatprep.subr.mxu0 0.0
    %v629 = vand.u32 %v50, 4294901760
    %v630 = vsub.f32 %v50, %v629
    %631 = vmatpush1.msra.mxu0 %v630
    %632 = vmatprep.subr.mxu0 0.0
    %v633 = vand.u32 %v51, 4294901760
    %v634 = vsub.f32 %v51, %v633
    %635 = vmatpush1.msra.mxu0 %v634
    %636 = vmatprep.subr.mxu0 0.0
    %v637 = vand.u32 %v52, 4294901760
    %v638 = vsub.f32 %v52, %v637
    %639 = vmatpush1.msra.mxu0 %v638
    %640 = vmatprep.subr.mxu0 0.0
    %v641 = vand.u32 %v53, 4294901760
    %v642 = vsub.f32 %v53, %v641
    %643 = vmatpush1.msra.mxu0 %v642
    %644 = vmatprep.subr.mxu0 0.0
    %v645 = vand.u32 %v54, 4294901760
    %v646 = vsub.f32 %v54, %v645
    %647 = vmatpush1.msra.mxu0 %v646
    %648 = vmatprep.subr.mxu0 0.0
    %v649 = vand.u32 %v55, 4294901760
    %v650 = vsub.f32 %v55, %v649
    %651 = vmatpush1.msra.mxu0 %v650
    %652 = vmatprep.subr.mxu0 0.0
    %v653 = vand.u32 %v56, 4294901760
    %v654 = vsub.f32 %v56, %v653
    %655 = vmatpush1.msra.mxu0 %v654
    %656 = vmatprep.subr.mxu0 0.0
    %v657 = vand.u32 %v57, 4294901760
    %v658 = vsub.f32 %v57, %v657
    %659 = vmatpush1.msra.mxu0 %v658
    %660 = vmatprep.subr.mxu0 0.0
    %v661 = vand.u32 %v58, 4294901760
    %v662 = vsub.f32 %v58, %v661
    %663 = vmatpush1.msra.mxu0 %v662
    %664 = vmatprep.subr.mxu0 0.0
    %v665 = vand.u32 %v59, 4294901760
    %v666 = vsub.f32 %v59, %v665
    %667 = vmatpush1.msra.mxu0 %v666
    %668 = vmatprep.subr.mxu0 0.0
    %v669 = vand.u32 %v60, 4294901760
    %v670 = vsub.f32 %v60, %v669
    %671 = vmatpush1.msra.mxu0 %v670
    %672 = vmatprep.subr.mxu0 0.0
    %v673 = vand.u32 %v61, 4294901760
    %v674 = vsub.f32 %v61, %v673
    %675 = vmatpush1.msra.mxu0 %v674
    %676 = vmatprep.subr.mxu0 0.0
    %v677 = vand.u32 %v62, 4294901760
    %v678 = vsub.f32 %v62, %v677
    %679 = vmatpush1.msra.mxu0 %v678
    %680 = vmatprep.subr.mxu0 0.0
    %v681 = vand.u32 %v63, 4294901760
    %v682 = vsub.f32 %v63, %v681
    %683 = vmatpush1.msra.mxu0 %v682
    %684 = vmatprep.subr.mxu0 0.0
    %v685 = vand.u32 %v64, 4294901760
    %v686 = vsub.f32 %v64, %v685
    %687 = vmatpush1.msra.mxu0 %v686
    %688 = vmatprep.subr.mxu0 0.0
    %v689 = vand.u32 %v65, 4294901760
    %v690 = vsub.f32 %v65, %v689
    %691 = vmatpush1.msra.mxu0 %v690
    %692 = vmatprep.subr.mxu0 0.0
    %v693 = vand.u32 %v66, 4294901760
    %v694 = vsub.f32 %v66, %v693
    %695 = vmatpush1.msra.mxu0 %v694
    %696 = vmatprep.subr.mxu0 0.0
    %v697 = vand.u32 %v67, 4294901760
    %v698 = vsub.f32 %v67, %v697
    %699 = vmatpush1.msra.mxu0 %v698
    %700 = vmatprep.subr.mxu0 0.0
    %v701 = vand.u32 %v68, 4294901760
    %v702 = vsub.f32 %v68, %v701
    %703 = vmatpush1.msra.mxu0 %v702
    %704 = vmatprep.subr.mxu0 0.0
    %v705 = vand.u32 %v69, 4294901760
    %v706 = vsub.f32 %v69, %v705
    %707 = vmatpush1.msra.mxu0 %v706
    %708 = vmatprep.subr.mxu0 0.0
    %v709 = vand.u32 %v70, 4294901760
    %v710 = vsub.f32 %v70, %v709
    %711 = vmatpush1.msra.mxu0 %v710
    %712 = vmatprep.subr.mxu0 0.0
    %v713 = vand.u32 %v71, 4294901760
    %v714 = vsub.f32 %v71, %v713
    %715 = vmatpush1.msra.mxu0 %v714
    %716 = vmatprep.subr.mxu0 0.0
    %v717 = vand.u32 %v72, 4294901760
    %v718 = vsub.f32 %v72, %v717
    %719 = vmatpush1.msra.mxu0 %v718
    %720 = vmatprep.subr.mxu0 0.0
    %v721 = vand.u32 %v73, 4294901760
    %v722 = vsub.f32 %v73, %v721
    %723 = vmatpush1.msra.mxu0 %v722
    %724 = vmatprep.subr.mxu0 0.0
    %v725 = vand.u32 %v74, 4294901760
    %v726 = vsub.f32 %v74, %v725
    %727 = vmatpush1.msra.mxu0 %v726
    %v728 = vand.u32 %v213, 4294901760
    %v729 = vsub.f32 %v213, %v728
    %730 = vmatprep.mubr.f32.mxu0 %v729
    %v731 = vand.u32 %v209, 4294901760
    %v732 = vsub.f32 %v209, %v731
    %733 = vmatmul.mubr.f32.gmra.mrb[0].mxu0 %v732
    %v734 = vpop.f32.mrb[0].mxu0
    %v735 = vadd.f32 %v597, %v734
    %v736 = vpop.f32.mrb[0].mxu0
    %737 = vdwg.mxu0
    %738 = vmatprep.subr.mxu0 0.0
    %v739 = vand.u32 %v43, 4294901760
    %740 = vmatpush1.msra.mxu0 %v739
    %741 = vmatprep.subr.mxu0 0.0
    %v742 = vand.u32 %v44, 4294901760
    %743 = vmatpush1.msra.mxu0 %v742
    %744 = vmatprep.subr.mxu0 0.0
    %v745 = vand.u32 %v45, 4294901760
    %746 = vmatpush1.msra.mxu0 %v745
    %747 = vmatprep.subr.mxu0 0.0
    %v748 = vand.u32 %v46, 4294901760
    %749 = vmatpush1.msra.mxu0 %v748
    %750 = vmatprep.subr.mxu0 0.0
    %v751 = vand.u32 %v47, 4294901760
    %752 = vmatpush1.msra.mxu0 %v751
    %753 = vmatprep.subr.mxu0 0.0
    %v754 = vand.u32 %v48, 4294901760
    %755 = vmatpush1.msra.mxu0 %v754
    %756 = vmatprep.subr.mxu0 0.0
    %v757 = vand.u32 %v49, 4294901760
    %758 = vmatpush1.msra.mxu0 %v757
    %759 = vmatprep.subr.mxu0 0.0
    %v760 = vand.u32 %v50, 4294901760
    %761 = vmatpush1.msra.mxu0 %v760
    %762 = vmatprep.subr.mxu0 0.0
    %v763 = vand.u32 %v51, 4294901760
    %764 = vmatpush1.msra.mxu0 %v763
    %765 = vmatprep.subr.mxu0 0.0
    %v766 = vand.u32 %v52, 4294901760
    %767 = vmatpush1.msra.mxu0 %v766
    %768 = vmatprep.subr.mxu0 0.0
    %v769 = vand.u32 %v53, 4294901760
    %770 = vmatpush1.msra.mxu0 %v769
    %771 = vmatprep.subr.mxu0 0.0
    %v772 = vand.u32 %v54, 4294901760
    %773 = vmatpush1.msra.mxu0 %v772
    %774 = vmatprep.subr.mxu0 0.0
    %v775 = vand.u32 %v55, 4294901760
    %776 = vmatpush1.msra.mxu0 %v775
    %777 = vmatprep.subr.mxu0 0.0
    %v778 = vand.u32 %v56, 4294901760
    %779 = vmatpush1.msra.mxu0 %v778
    %780 = vmatprep.subr.mxu0 0.0
    %v781 = vand.u32 %v57, 4294901760
    %782 = vmatpush1.msra.mxu0 %v781
    %783 = vmatprep.subr.mxu0 0.0
    %v784 = vand.u32 %v58, 4294901760
    %785 = vmatpush1.msra.mxu0 %v784
    %786 = vmatprep.subr.mxu0 0.0
    %v787 = vand.u32 %v59, 4294901760
    %788 = vmatpush1.msra.mxu0 %v787
    %789 = vmatprep.subr.mxu0 0.0
    %v790 = vand.u32 %v60, 4294901760
    %791 = vmatpush1.msra.mxu0 %v790
    %792 = vmatprep.subr.mxu0 0.0
    %v793 = vand.u32 %v61, 4294901760
    %794 = vmatpush1.msra.mxu0 %v793
    %795 = vmatprep.subr.mxu0 0.0
    %v796 = vand.u32 %v62, 4294901760
    %797 = vmatpush1.msra.mxu0 %v796
    %798 = vmatprep.subr.mxu0 0.0
    %v799 = vand.u32 %v63, 4294901760
    %800 = vmatpush1.msra.mxu0 %v799
    %801 = vmatprep.subr.mxu0 0.0
    %v802 = vand.u32 %v64, 4294901760
    %803 = vmatpush1.msra.mxu0 %v802
    %804 = vmatprep.subr.mxu0 0.0
    %v805 = vand.u32 %v65, 4294901760
    %806 = vmatpush1.msra.mxu0 %v805
    %807 = vmatprep.subr.mxu0 0.0
    %v808 = vand.u32 %v66, 4294901760
    %809 = vmatpush1.msra.mxu0 %v808
    %810 = vmatprep.subr.mxu0 0.0
    %v811 = vand.u32 %v67, 4294901760
    %812 = vmatpush1.msra.mxu0 %v811
    %813 = vmatprep.subr.mxu0 0.0
    %v814 = vand.u32 %v68, 4294901760
    %815 = vmatpush1.msra.mxu0 %v814
    %816 = vmatprep.subr.mxu0 0.0
    %v817 = vand.u32 %v69, 4294901760
    %818 = vmatpush1.msra.mxu0 %v817
    %819 = vmatprep.subr.mxu0 0.0
    %v820 = vand.u32 %v70, 4294901760
    %821 = vmatpush1.msra.mxu0 %v820
    %822 = vmatprep.subr.mxu0 0.0
    %v823 = vand.u32 %v71, 4294901760
    %824 = vmatpush1.msra.mxu0 %v823
    %825 = vmatprep.subr.mxu0 0.0
    %v826 = vand.u32 %v72, 4294901760
    %827 = vmatpush1.msra.mxu0 %v826
    %828 = vmatprep.subr.mxu0 0.0
    %v829 = vand.u32 %v73, 4294901760
    %830 = vmatpush1.msra.mxu0 %v829
    %831 = vmatprep.subr.mxu0 0.0
    %v832 = vand.u32 %v74, 4294901760
    %833 = vmatpush1.msra.mxu0 %v832
    %v834 = vand.u32 %v213, 4294901760
    %v835 = vsub.f32 %v213, %v834
    %v836 = vand.u32 %v835, 4294901760
    %837 = vmatprep.mubr.f32.mxu0 %v836
    %v838 = vand.u32 %v209, 4294901760
    %v839 = vsub.f32 %v209, %v838
    %v840 = vand.u32 %v839, 4294901760
    %841 = vmatmul.mubr.f32.gmra.mrb[0].mxu0 %v840
    %v842 = vpop.f32.mrb[0].mxu0
    %v843 = vadd.f32 %v735, %v842
    %v844 = vpop.f32.mrb[0].mxu0
    %845 = vdwg.mxu0
    %846 = vmatprep.subr.mxu0 0.0
    %v847 = vand.u32 %v43, 4294901760
    %v848 = vsub.f32 %v43, %v847
    %v849 = vand.u32 %v848, 4294901760
    %850 = vmatpush1.msra.mxu0 %v849
    %851 = vmatprep.subr.mxu0 0.0
    %v852 = vand.u32 %v44, 4294901760
    %v853 = vsub.f32 %v44, %v852
    %v854 = vand.u32 %v853, 4294901760
    %855 = vmatpush1.msra.mxu0 %v854
    %856 = vmatprep.subr.mxu0 0.0
    %v857 = vand.u32 %v45, 4294901760
    %v858 = vsub.f32 %v45, %v857
    %v859 = vand.u32 %v858, 4294901760
    %860 = vmatpush1.msra.mxu0 %v859
    %861 = vmatprep.subr.mxu0 0.0
    %v862 = vand.u32 %v46, 4294901760
    %v863 = vsub.f32 %v46, %v862
    %v864 = vand.u32 %v863, 4294901760
    %865 = vmatpush1.msra.mxu0 %v864
    %866 = vmatprep.subr.mxu0 0.0
    %v867 = vand.u32 %v47, 4294901760
    %v868 = vsub.f32 %v47, %v867
    %v869 = vand.u32 %v868, 4294901760
    %870 = vmatpush1.msra.mxu0 %v869
    %871 = vmatprep.subr.mxu0 0.0
    %v872 = vand.u32 %v48, 4294901760
    %v873 = vsub.f32 %v48, %v872
    %v874 = vand.u32 %v873, 4294901760
    %875 = vmatpush1.msra.mxu0 %v874
    %876 = vmatprep.subr.mxu0 0.0
    %v877 = vand.u32 %v49, 4294901760
    %v878 = vsub.f32 %v49, %v877
    %v879 = vand.u32 %v878, 4294901760
    %880 = vmatpush1.msra.mxu0 %v879
    %881 = vmatprep.subr.mxu0 0.0
    %v882 = vand.u32 %v50, 4294901760
    %v883 = vsub.f32 %v50, %v882
    %v884 = vand.u32 %v883, 4294901760
    %885 = vmatpush1.msra.mxu0 %v884
    %886 = vmatprep.subr.mxu0 0.0
    %v887 = vand.u32 %v51, 4294901760
    %v888 = vsub.f32 %v51, %v887
    %v889 = vand.u32 %v888, 4294901760
    %890 = vmatpush1.msra.mxu0 %v889
    %891 = vmatprep.subr.mxu0 0.0
    %v892 = vand.u32 %v52, 4294901760
    %v893 = vsub.f32 %v52, %v892
    %v894 = vand.u32 %v893, 4294901760
    %895 = vmatpush1.msra.mxu0 %v894
    %896 = vmatprep.subr.mxu0 0.0
    %v897 = vand.u32 %v53, 4294901760
    %v898 = vsub.f32 %v53, %v897
    %v899 = vand.u32 %v898, 4294901760
    %900 = vmatpush1.msra.mxu0 %v899
    %901 = vmatprep.subr.mxu0 0.0
    %v902 = vand.u32 %v54, 4294901760
    %v903 = vsub.f32 %v54, %v902
    %v904 = vand.u32 %v903, 4294901760
    %905 = vmatpush1.msra.mxu0 %v904
    %906 = vmatprep.subr.mxu0 0.0
    %v907 = vand.u32 %v55, 4294901760
    %v908 = vsub.f32 %v55, %v907
    %v909 = vand.u32 %v908, 4294901760
    %910 = vmatpush1.msra.mxu0 %v909
    %911 = vmatprep.subr.mxu0 0.0
    %v912 = vand.u32 %v56, 4294901760
    %v913 = vsub.f32 %v56, %v912
    %v914 = vand.u32 %v913, 4294901760
    %915 = vmatpush1.msra.mxu0 %v914
    %916 = vmatprep.subr.mxu0 0.0
    %v917 = vand.u32 %v57, 4294901760
    %v918 = vsub.f32 %v57, %v917
    %v919 = vand.u32 %v918, 4294901760
    %920 = vmatpush1.msra.mxu0 %v919
    %921 = vmatprep.subr.mxu0 0.0
    %v922 = vand.u32 %v58, 4294901760
    %v923 = vsub.f32 %v58, %v922
    %v924 = vand.u32 %v923, 4294901760
    %925 = vmatpush1.msra.mxu0 %v924
    %926 = vmatprep.subr.mxu0 0.0
    %v927 = vand.u32 %v59, 4294901760
    %v928 = vsub.f32 %v59, %v927
    %v929 = vand.u32 %v928, 4294901760
    %930 = vmatpush1.msra.mxu0 %v929
    %931 = vmatprep.subr.mxu0 0.0
    %v932 = vand.u32 %v60, 4294901760
    %v933 = vsub.f32 %v60, %v932
    %v934 = vand.u32 %v933, 4294901760
    %935 = vmatpush1.msra.mxu0 %v934
    %936 = vmatprep.subr.mxu0 0.0
    %v937 = vand.u32 %v61, 4294901760
    %v938 = vsub.f32 %v61, %v937
    %v939 = vand.u32 %v938, 4294901760
    %940 = vmatpush1.msra.mxu0 %v939
    %941 = vmatprep.subr.mxu0 0.0
    %v942 = vand.u32 %v62, 4294901760
    %v943 = vsub.f32 %v62, %v942
    %v944 = vand.u32 %v943, 4294901760
    %945 = vmatpush1.msra.mxu0 %v944
    %946 = vmatprep.subr.mxu0 0.0
    %v947 = vand.u32 %v63, 4294901760
    %v948 = vsub.f32 %v63, %v947
    %v949 = vand.u32 %v948, 4294901760
    %950 = vmatpush1.msra.mxu0 %v949
    %951 = vmatprep.subr.mxu0 0.0
    %v952 = vand.u32 %v64, 4294901760
    %v953 = vsub.f32 %v64, %v952
    %v954 = vand.u32 %v953, 4294901760
    %955 = vmatpush1.msra.mxu0 %v954
    %956 = vmatprep.subr.mxu0 0.0
    %v957 = vand.u32 %v65, 4294901760
    %v958 = vsub.f32 %v65, %v957
    %v959 = vand.u32 %v958, 4294901760
    %960 = vmatpush1.msra.mxu0 %v959
    %961 = vmatprep.subr.mxu0 0.0
    %v962 = vand.u32 %v66, 4294901760
    %v963 = vsub.f32 %v66, %v962
    %v964 = vand.u32 %v963, 4294901760
    %965 = vmatpush1.msra.mxu0 %v964
    %966 = vmatprep.subr.mxu0 0.0
    %v967 = vand.u32 %v67, 4294901760
    %v968 = vsub.f32 %v67, %v967
    %v969 = vand.u32 %v968, 4294901760
    %970 = vmatpush1.msra.mxu0 %v969
    %971 = vmatprep.subr.mxu0 0.0
    %v972 = vand.u32 %v68, 4294901760
    %v973 = vsub.f32 %v68, %v972
    %v974 = vand.u32 %v973, 4294901760
    %975 = vmatpush1.msra.mxu0 %v974
    %976 = vmatprep.subr.mxu0 0.0
    %v977 = vand.u32 %v69, 4294901760
    %v978 = vsub.f32 %v69, %v977
    %v979 = vand.u32 %v978, 4294901760
    %980 = vmatpush1.msra.mxu0 %v979
    %981 = vmatprep.subr.mxu0 0.0
    %v982 = vand.u32 %v70, 4294901760
    %v983 = vsub.f32 %v70, %v982
    %v984 = vand.u32 %v983, 4294901760
    %985 = vmatpush1.msra.mxu0 %v984
    %986 = vmatprep.subr.mxu0 0.0
    %v987 = vand.u32 %v71, 4294901760
    %v988 = vsub.f32 %v71, %v987
    %v989 = vand.u32 %v988, 4294901760
    %990 = vmatpush1.msra.mxu0 %v989
    %991 = vmatprep.subr.mxu0 0.0
    %v992 = vand.u32 %v72, 4294901760
    %v993 = vsub.f32 %v72, %v992
    %v994 = vand.u32 %v993, 4294901760
    %995 = vmatpush1.msra.mxu0 %v994
    %996 = vmatprep.subr.mxu0 0.0
    %v997 = vand.u32 %v73, 4294901760
    %v998 = vsub.f32 %v73, %v997
    %v999 = vand.u32 %v998, 4294901760
    %1000 = vmatpush1.msra.mxu0 %v999
    %1001 = vmatprep.subr.mxu0 0.0
    %v1002 = vand.u32 %v74, 4294901760
    %v1003 = vsub.f32 %v74, %v1002
    %v1004 = vand.u32 %v1003, 4294901760
    %1005 = vmatpush1.msra.mxu0 %v1004
    %v1006 = vand.u32 %v213, 4294901760
    %1007 = vmatprep.mubr.f32.mxu0 %v1006
    %v1008 = vand.u32 %v209, 4294901760
    %1009 = vmatmul.mubr.f32.gmra.mrb[0].mxu0 %v1008
    %v1010 = vpop.f32.mrb[0].mxu0
    %v1011 = vadd.f32 %v843, %v1010
    %v1012 = vpop.f32.mrb[0].mxu0
    %1013 = vdwg.mxu0
    %1014 = vmatprep.subr.mxu0 0.0
    %v1015 = vand.u32 %v43, 4294901760
    %1016 = vmatpush1.msra.mxu0 %v1015
    %1017 = vmatprep.subr.mxu0 0.0
    %v1018 = vand.u32 %v44, 4294901760
    %1019 = vmatpush1.msra.mxu0 %v1018
    %1020 = vmatprep.subr.mxu0 0.0
    %v1021 = vand.u32 %v45, 4294901760
    %1022 = vmatpush1.msra.mxu0 %v1021
    %1023 = vmatprep.subr.mxu0 0.0
    %v1024 = vand.u32 %v46, 4294901760
    %1025 = vmatpush1.msra.mxu0 %v1024
    %1026 = vmatprep.subr.mxu0 0.0
    %v1027 = vand.u32 %v47, 4294901760
    %1028 = vmatpush1.msra.mxu0 %v1027
    %1029 = vmatprep.subr.mxu0 0.0
    %v1030 = vand.u32 %v48, 4294901760
    %1031 = vmatpush1.msra.mxu0 %v1030
    %1032 = vmatprep.subr.mxu0 0.0
    %v1033 = vand.u32 %v49, 4294901760
    %1034 = vmatpush1.msra.mxu0 %v1033
    %1035 = vmatprep.subr.mxu0 0.0
    %v1036 = vand.u32 %v50, 4294901760
    %1037 = vmatpush1.msra.mxu0 %v1036
    %1038 = vmatprep.subr.mxu0 0.0
    %v1039 = vand.u32 %v51, 4294901760
    %1040 = vmatpush1.msra.mxu0 %v1039
    %1041 = vmatprep.subr.mxu0 0.0
    %v1042 = vand.u32 %v52, 4294901760
    %1043 = vmatpush1.msra.mxu0 %v1042
    %1044 = vmatprep.subr.mxu0 0.0
    %v1045 = vand.u32 %v53, 4294901760
    %1046 = vmatpush1.msra.mxu0 %v1045
    %1047 = vmatprep.subr.mxu0 0.0
    %v1048 = vand.u32 %v54, 4294901760
    %1049 = vmatpush1.msra.mxu0 %v1048
    %1050 = vmatprep.subr.mxu0 0.0
    %v1051 = vand.u32 %v55, 4294901760
    %1052 = vmatpush1.msra.mxu0 %v1051
    %1053 = vmatprep.subr.mxu0 0.0
    %v1054 = vand.u32 %v56, 4294901760
    %1055 = vmatpush1.msra.mxu0 %v1054
    %1056 = vmatprep.subr.mxu0 0.0
    %v1057 = vand.u32 %v57, 4294901760
    %1058 = vmatpush1.msra.mxu0 %v1057
    %1059 = vmatprep.subr.mxu0 0.0
    %v1060 = vand.u32 %v58, 4294901760
    %1061 = vmatpush1.msra.mxu0 %v1060
    %1062 = vmatprep.subr.mxu0 0.0
    %v1063 = vand.u32 %v59, 4294901760
    %1064 = vmatpush1.msra.mxu0 %v1063
    %1065 = vmatprep.subr.mxu0 0.0
    %v1066 = vand.u32 %v60, 4294901760
    %1067 = vmatpush1.msra.mxu0 %v1066
    %1068 = vmatprep.subr.mxu0 0.0
    %v1069 = vand.u32 %v61, 4294901760
    %1070 = vmatpush1.msra.mxu0 %v1069
    %1071 = vmatprep.subr.mxu0 0.0
    %v1072 = vand.u32 %v62, 4294901760
    %1073 = vmatpush1.msra.mxu0 %v1072
    %1074 = vmatprep.subr.mxu0 0.0
    %v1075 = vand.u32 %v63, 4294901760
    %1076 = vmatpush1.msra.mxu0 %v1075
    %1077 = vmatprep.subr.mxu0 0.0
    %v1078 = vand.u32 %v64, 4294901760
    %1079 = vmatpush1.msra.mxu0 %v1078
    %1080 = vmatprep.subr.mxu0 0.0
    %v1081 = vand.u32 %v65, 4294901760
    %1082 = vmatpush1.msra.mxu0 %v1081
    %1083 = vmatprep.subr.mxu0 0.0
    %v1084 = vand.u32 %v66, 4294901760
    %1085 = vmatpush1.msra.mxu0 %v1084
    %1086 = vmatprep.subr.mxu0 0.0
    %v1087 = vand.u32 %v67, 4294901760
    %1088 = vmatpush1.msra.mxu0 %v1087
    %1089 = vmatprep.subr.mxu0 0.0
    %v1090 = vand.u32 %v68, 4294901760
    %1091 = vmatpush1.msra.mxu0 %v1090
    %1092 = vmatprep.subr.mxu0 0.0
    %v1093 = vand.u32 %v69, 4294901760
    %1094 = vmatpush1.msra.mxu0 %v1093
    %1095 = vmatprep.subr.mxu0 0.0
    %v1096 = vand.u32 %v70, 4294901760
    %1097 = vmatpush1.msra.mxu0 %v1096
    %1098 = vmatprep.subr.mxu0 0.0
    %v1099 = vand.u32 %v71, 4294901760
    %1100 = vmatpush1.msra.mxu0 %v1099
    %1101 = vmatprep.subr.mxu0 0.0
    %v1102 = vand.u32 %v72, 4294901760
    %1103 = vmatpush1.msra.mxu0 %v1102
    %1104 = vmatprep.subr.mxu0 0.0
    %v1105 = vand.u32 %v73, 4294901760
    %1106 = vmatpush1.msra.mxu0 %v1105
    %1107 = vmatprep.subr.mxu0 0.0
    %v1108 = vand.u32 %v74, 4294901760
    %1109 = vmatpush1.msra.mxu0 %v1108
    %v1110 = vand.u32 %v213, 4294901760
    %1111 = vmatprep.mubr.f32.mxu0 %v1110
    %v1112 = vand.u32 %v209, 4294901760
    %1113 = vmatmul.mubr.f32.gmra.mrb[0].mxu0 %v1112
    %v1114 = vpop.f32.mrb[0].mxu0
    %v1115 = vadd.f32 %v1011, %v1114
    %v1116 = vpop.f32.mrb[0].mxu0
    %1117 = vdwg.mxu0
    %1118 = vmatprep.subr.mxu0 0.0
    %v1119 = vand.u32 %v75, 4294901760
    %1120 = vmatpush1.msra.mxu0 %v1119
    %1121 = vmatprep.subr.mxu0 0.0
    %v1122 = vand.u32 %v76, 4294901760
    %1123 = vmatpush1.msra.mxu0 %v1122
    %1124 = vmatprep.subr.mxu0 0.0
    %v1125 = vand.u32 %v77, 4294901760
    %1126 = vmatpush1.msra.mxu0 %v1125
    %1127 = vmatprep.subr.mxu0 0.0
    %v1128 = vand.u32 %v78, 4294901760
    %1129 = vmatpush1.msra.mxu0 %v1128
    %1130 = vmatprep.subr.mxu0 0.0
    %v1131 = vand.u32 %v79, 4294901760
    %1132 = vmatpush1.msra.mxu0 %v1131
    %1133 = vmatprep.subr.mxu0 0.0
    %v1134 = vand.u32 %v80, 4294901760
    %1135 = vmatpush1.msra.mxu0 %v1134
    %1136 = vmatprep.subr.mxu0 0.0
    %v1137 = vand.u32 %v81, 4294901760
    %1138 = vmatpush1.msra.mxu0 %v1137
    %1139 = vmatprep.subr.mxu0 0.0
    %v1140 = vand.u32 %v82, 4294901760
    %1141 = vmatpush1.msra.mxu0 %v1140
    %1142 = vmatprep.subr.mxu0 0.0
    %v1143 = vand.u32 %v83, 4294901760
    %1144 = vmatpush1.msra.mxu0 %v1143
    %1145 = vmatprep.subr.mxu0 0.0
    %v1146 = vand.u32 %v84, 4294901760
    %1147 = vmatpush1.msra.mxu0 %v1146
    %1148 = vmatprep.subr.mxu0 0.0
    %v1149 = vand.u32 %v85, 4294901760
    %1150 = vmatpush1.msra.mxu0 %v1149
    %1151 = vmatprep.subr.mxu0 0.0
    %v1152 = vand.u32 %v86, 4294901760
    %1153 = vmatpush1.msra.mxu0 %v1152
    %1154 = vmatprep.subr.mxu0 0.0
    %v1155 = vand.u32 %v87, 4294901760
    %1156 = vmatpush1.msra.mxu0 %v1155
    %1157 = vmatprep.subr.mxu0 0.0
    %v1158 = vand.u32 %v88, 4294901760
    %1159 = vmatpush1.msra.mxu0 %v1158
    %1160 = vmatprep.subr.mxu0 0.0
    %v1161 = vand.u32 %v89, 4294901760
    %1162 = vmatpush1.msra.mxu0 %v1161
    %1163 = vmatprep.subr.mxu0 0.0
    %v1164 = vand.u32 %v90, 4294901760
    %1165 = vmatpush1.msra.mxu0 %v1164
    %1166 = vmatprep.subr.mxu0 0.0
    %v1167 = vand.u32 %v91, 4294901760
    %1168 = vmatpush1.msra.mxu0 %v1167
    %1169 = vmatprep.subr.mxu0 0.0
    %v1170 = vand.u32 %v92, 4294901760
    %1171 = vmatpush1.msra.mxu0 %v1170
    %1172 = vmatprep.subr.mxu0 0.0
    %v1173 = vand.u32 %v93, 4294901760
    %1174 = vmatpush1.msra.mxu0 %v1173
    %1175 = vmatprep.subr.mxu0 0.0
    %v1176 = vand.u32 %v94, 4294901760
    %1177 = vmatpush1.msra.mxu0 %v1176
    %1178 = vmatprep.subr.mxu0 0.0
    %v1179 = vand.u32 %v95, 4294901760
    %1180 = vmatpush1.msra.mxu0 %v1179
    %1181 = vmatprep.subr.mxu0 0.0
    %v1182 = vand.u32 %v96, 4294901760
    %1183 = vmatpush1.msra.mxu0 %v1182
    %1184 = vmatprep.subr.mxu0 0.0
    %v1185 = vand.u32 %v97, 4294901760
    %1186 = vmatpush1.msra.mxu0 %v1185
    %1187 = vmatprep.subr.mxu0 0.0
    %v1188 = vand.u32 %v98, 4294901760
    %1189 = vmatpush1.msra.mxu0 %v1188
    %1190 = vmatprep.subr.mxu0 0.0
    %v1191 = vand.u32 %v99, 4294901760
    %1192 = vmatpush1.msra.mxu0 %v1191
    %1193 = vmatprep.subr.mxu0 0.0
    %v1194 = vand.u32 %v100, 4294901760
    %1195 = vmatpush1.msra.mxu0 %v1194
    %1196 = vmatprep.subr.mxu0 0.0
    %v1197 = vand.u32 %v101, 4294901760
    %1198 = vmatpush1.msra.mxu0 %v1197
    %1199 = vmatprep.subr.mxu0 0.0
    %v1200 = vand.u32 %v102, 4294901760
    %1201 = vmatpush1.msra.mxu0 %v1200
    %1202 = vmatprep.subr.mxu0 0.0
    %v1203 = vand.u32 %v103, 4294901760
    %1204 = vmatpush1.msra.mxu0 %v1203
    %1205 = vmatprep.subr.mxu0 0.0
    %v1206 = vand.u32 %v104, 4294901760
    %1207 = vmatpush1.msra.mxu0 %v1206
    %1208 = vmatprep.subr.mxu0 0.0
    %v1209 = vand.u32 %v105, 4294901760
    %1210 = vmatpush1.msra.mxu0 %v1209
    %1211 = vmatprep.subr.mxu0 0.0
    %v1212 = vand.u32 %v106, 4294901760
    %1213 = vmatpush1.msra.mxu0 %v1212
    %v1214 = vand.u32 %v221, 4294901760
    %v1215 = vsub.f32 %v221, %v1214
    %v1216 = vand.u32 %v1215, 4294901760
    %v1217 = vsub.f32 %v1215, %v1216
    %v1218 = vand.u32 %v1217, 4294901760
    %1219 = vmatprep.mubr.f32.mxu0 %v1218
    %v1220 = vand.u32 %v217, 4294901760
    %v1221 = vsub.f32 %v217, %v1220
    %v1222 = vand.u32 %v1221, 4294901760
    %v1223 = vsub.f32 %v1221, %v1222
    %v1224 = vand.u32 %v1223, 4294901760
    %1225 = vmatmul.mubr.f32.gmra.mrb[0].mxu0 %v1224
    %v1226 = vpop.f32.mrb[0].mxu0
    %v1227 = vadd.f32 %v1115, %v1226
    %v1228 = vpop.f32.mrb[0].mxu0
    %1229 = vdwg.mxu0
    %1230 = vmatprep.subr.mxu0 0.0
    %v1231 = vand.u32 %v75, 4294901760
    %v1232 = vsub.f32 %v75, %v1231
    %v1233 = vand.u32 %v1232, 4294901760
    %v1234 = vsub.f32 %v1232, %v1233
    %v1235 = vand.u32 %v1234, 4294901760
    %1236 = vmatpush1.msra.mxu0 %v1235
    %1237 = vmatprep.subr.mxu0 0.0
    %v1238 = vand.u32 %v76, 4294901760
    %v1239 = vsub.f32 %v76, %v1238
    %v1240 = vand.u32 %v1239, 4294901760
    %v1241 = vsub.f32 %v1239, %v1240
    %v1242 = vand.u32 %v1241, 4294901760
    %1243 = vmatpush1.msra.mxu0 %v1242
    %1244 = vmatprep.subr.mxu0 0.0
    %v1245 = vand.u32 %v77, 4294901760
    %v1246 = vsub.f32 %v77, %v1245
    %v1247 = vand.u32 %v1246, 4294901760
    %v1248 = vsub.f32 %v1246, %v1247
    %v1249 = vand.u32 %v1248, 4294901760
    %1250 = vmatpush1.msra.mxu0 %v1249
    %1251 = vmatprep.subr.mxu0 0.0
    %v1252 = vand.u32 %v78, 4294901760
    %v1253 = vsub.f32 %v78, %v1252
    %v1254 = vand.u32 %v1253, 4294901760
    %v1255 = vsub.f32 %v1253, %v1254
    %v1256 = vand.u32 %v1255, 4294901760
    %1257 = vmatpush1.msra.mxu0 %v1256
    %1258 = vmatprep.subr.mxu0 0.0
    %v1259 = vand.u32 %v79, 4294901760
    %v1260 = vsub.f32 %v79, %v1259
    %v1261 = vand.u32 %v1260, 4294901760
    %v1262 = vsub.f32 %v1260, %v1261
    %v1263 = vand.u32 %v1262, 4294901760
    %1264 = vmatpush1.msra.mxu0 %v1263
    %1265 = vmatprep.subr.mxu0 0.0
    %v1266 = vand.u32 %v80, 4294901760
    %v1267 = vsub.f32 %v80, %v1266
    %v1268 = vand.u32 %v1267, 4294901760
    %v1269 = vsub.f32 %v1267, %v1268
    %v1270 = vand.u32 %v1269, 4294901760
    %1271 = vmatpush1.msra.mxu0 %v1270
    %1272 = vmatprep.subr.mxu0 0.0
    %v1273 = vand.u32 %v81, 4294901760
    %v1274 = vsub.f32 %v81, %v1273
    %v1275 = vand.u32 %v1274, 4294901760
    %v1276 = vsub.f32 %v1274, %v1275
    %v1277 = vand.u32 %v1276, 4294901760
    %1278 = vmatpush1.msra.mxu0 %v1277
    %1279 = vmatprep.subr.mxu0 0.0
    %v1280 = vand.u32 %v82, 4294901760
    %v1281 = vsub.f32 %v82, %v1280
    %v1282 = vand.u32 %v1281, 4294901760
    %v1283 = vsub.f32 %v1281, %v1282
    %v1284 = vand.u32 %v1283, 4294901760
    %1285 = vmatpush1.msra.mxu0 %v1284
    %1286 = vmatprep.subr.mxu0 0.0
    %v1287 = vand.u32 %v83, 4294901760
    %v1288 = vsub.f32 %v83, %v1287
    %v1289 = vand.u32 %v1288, 4294901760
    %v1290 = vsub.f32 %v1288, %v1289
    %v1291 = vand.u32 %v1290, 4294901760
    %1292 = vmatpush1.msra.mxu0 %v1291
    %1293 = vmatprep.subr.mxu0 0.0
    %v1294 = vand.u32 %v84, 4294901760
    %v1295 = vsub.f32 %v84, %v1294
    %v1296 = vand.u32 %v1295, 4294901760
    %v1297 = vsub.f32 %v1295, %v1296
    %v1298 = vand.u32 %v1297, 4294901760
    %1299 = vmatpush1.msra.mxu0 %v1298
    %1300 = vmatprep.subr.mxu0 0.0
    %v1301 = vand.u32 %v85, 4294901760
    %v1302 = vsub.f32 %v85, %v1301
    %v1303 = vand.u32 %v1302, 4294901760
    %v1304 = vsub.f32 %v1302, %v1303
    %v1305 = vand.u32 %v1304, 4294901760
    %1306 = vmatpush1.msra.mxu0 %v1305
    %1307 = vmatprep.subr.mxu0 0.0
    %v1308 = vand.u32 %v86, 4294901760
    %v1309 = vsub.f32 %v86, %v1308
    %v1310 = vand.u32 %v1309, 4294901760
    %v1311 = vsub.f32 %v1309, %v1310
    %v1312 = vand.u32 %v1311, 4294901760
    %1313 = vmatpush1.msra.mxu0 %v1312
    %1314 = vmatprep.subr.mxu0 0.0
    %v1315 = vand.u32 %v87, 4294901760
    %v1316 = vsub.f32 %v87, %v1315
    %v1317 = vand.u32 %v1316, 4294901760
    %v1318 = vsub.f32 %v1316, %v1317
    %v1319 = vand.u32 %v1318, 4294901760
    %1320 = vmatpush1.msra.mxu0 %v1319
    %1321 = vmatprep.subr.mxu0 0.0
    %v1322 = vand.u32 %v88, 4294901760
    %v1323 = vsub.f32 %v88, %v1322
    %v1324 = vand.u32 %v1323, 4294901760
    %v1325 = vsub.f32 %v1323, %v1324
    %v1326 = vand.u32 %v1325, 4294901760
    %1327 = vmatpush1.msra.mxu0 %v1326
    %1328 = vmatprep.subr.mxu0 0.0
    %v1329 = vand.u32 %v89, 4294901760
    %v1330 = vsub.f32 %v89, %v1329
    %v1331 = vand.u32 %v1330, 4294901760
    %v1332 = vsub.f32 %v1330, %v1331
    %v1333 = vand.u32 %v1332, 4294901760
    %1334 = vmatpush1.msra.mxu0 %v1333
    %1335 = vmatprep.subr.mxu0 0.0
    %v1336 = vand.u32 %v90, 4294901760
    %v1337 = vsub.f32 %v90, %v1336
    %v1338 = vand.u32 %v1337, 4294901760
    %v1339 = vsub.f32 %v1337, %v1338
    %v1340 = vand.u32 %v1339, 4294901760
    %1341 = vmatpush1.msra.mxu0 %v1340
    %1342 = vmatprep.subr.mxu0 0.0
    %v1343 = vand.u32 %v91, 4294901760
    %v1344 = vsub.f32 %v91, %v1343
    %v1345 = vand.u32 %v1344, 4294901760
    %v1346 = vsub.f32 %v1344, %v1345
    %v1347 = vand.u32 %v1346, 4294901760
    %1348 = vmatpush1.msra.mxu0 %v1347
    %1349 = vmatprep.subr.mxu0 0.0
    %v1350 = vand.u32 %v92, 4294901760
    %v1351 = vsub.f32 %v92, %v1350
    %v1352 = vand.u32 %v1351, 4294901760
    %v1353 = vsub.f32 %v1351, %v1352
    %v1354 = vand.u32 %v1353, 4294901760
    %1355 = vmatpush1.msra.mxu0 %v1354
    %1356 = vmatprep.subr.mxu0 0.0
    %v1357 = vand.u32 %v93, 4294901760
    %v1358 = vsub.f32 %v93, %v1357
    %v1359 = vand.u32 %v1358, 4294901760
    %v1360 = vsub.f32 %v1358, %v1359
    %v1361 = vand.u32 %v1360, 4294901760
    %1362 = vmatpush1.msra.mxu0 %v1361
    %1363 = vmatprep.subr.mxu0 0.0
    %v1364 = vand.u32 %v94, 4294901760
    %v1365 = vsub.f32 %v94, %v1364
    %v1366 = vand.u32 %v1365, 4294901760
    %v1367 = vsub.f32 %v1365, %v1366
    %v1368 = vand.u32 %v1367, 4294901760
    %1369 = vmatpush1.msra.mxu0 %v1368
    %1370 = vmatprep.subr.mxu0 0.0
    %v1371 = vand.u32 %v95, 4294901760
    %v1372 = vsub.f32 %v95, %v1371
    %v1373 = vand.u32 %v1372, 4294901760
    %v1374 = vsub.f32 %v1372, %v1373
    %v1375 = vand.u32 %v1374, 4294901760
    %1376 = vmatpush1.msra.mxu0 %v1375
    %1377 = vmatprep.subr.mxu0 0.0
    %v1378 = vand.u32 %v96, 4294901760
    %v1379 = vsub.f32 %v96, %v1378
    %v1380 = vand.u32 %v1379, 4294901760
    %v1381 = vsub.f32 %v1379, %v1380
    %v1382 = vand.u32 %v1381, 4294901760
    %1383 = vmatpush1.msra.mxu0 %v1382
    %1384 = vmatprep.subr.mxu0 0.0
    %v1385 = vand.u32 %v97, 4294901760
    %v1386 = vsub.f32 %v97, %v1385
    %v1387 = vand.u32 %v1386, 4294901760
    %v1388 = vsub.f32 %v1386, %v1387
    %v1389 = vand.u32 %v1388, 4294901760
    %1390 = vmatpush1.msra.mxu0 %v1389
    %1391 = vmatprep.subr.mxu0 0.0
    %v1392 = vand.u32 %v98, 4294901760
    %v1393 = vsub.f32 %v98, %v1392
    %v1394 = vand.u32 %v1393, 4294901760
    %v1395 = vsub.f32 %v1393, %v1394
    %v1396 = vand.u32 %v1395, 4294901760
    %1397 = vmatpush1.msra.mxu0 %v1396
    %1398 = vmatprep.subr.mxu0 0.0
    %v1399 = vand.u32 %v99, 4294901760
    %v1400 = vsub.f32 %v99, %v1399
    %v1401 = vand.u32 %v1400, 4294901760
    %v1402 = vsub.f32 %v1400, %v1401
    %v1403 = vand.u32 %v1402, 4294901760
    %1404 = vmatpush1.msra.mxu0 %v1403
    %1405 = vmatprep.subr.mxu0 0.0
    %v1406 = vand.u32 %v100, 4294901760
    %v1407 = vsub.f32 %v100, %v1406
    %v1408 = vand.u32 %v1407, 4294901760
    %v1409 = vsub.f32 %v1407, %v1408
    %v1410 = vand.u32 %v1409, 4294901760
    %1411 = vmatpush1.msra.mxu0 %v1410
    %1412 = vmatprep.subr.mxu0 0.0
    %v1413 = vand.u32 %v101, 4294901760
    %v1414 = vsub.f32 %v101, %v1413
    %v1415 = vand.u32 %v1414, 4294901760
    %v1416 = vsub.f32 %v1414, %v1415
    %v1417 = vand.u32 %v1416, 4294901760
    %1418 = vmatpush1.msra.mxu0 %v1417
    %1419 = vmatprep.subr.mxu0 0.0
    %v1420 = vand.u32 %v102, 4294901760
    %v1421 = vsub.f32 %v102, %v1420
    %v1422 = vand.u32 %v1421, 4294901760
    %v1423 = vsub.f32 %v1421, %v1422
    %v1424 = vand.u32 %v1423, 4294901760
    %1425 = vmatpush1.msra.mxu0 %v1424
    %1426 = vmatprep.subr.mxu0 0.0
    %v1427 = vand.u32 %v103, 4294901760
    %v1428 = vsub.f32 %v103, %v1427
    %v1429 = vand.u32 %v1428, 4294901760
    %v1430 = vsub.f32 %v1428, %v1429
    %v1431 = vand.u32 %v1430, 4294901760
    %1432 = vmatpush1.msra.mxu0 %v1431
    %1433 = vmatprep.subr.mxu0 0.0
    %v1434 = vand.u32 %v104, 4294901760
    %v1435 = vsub.f32 %v104, %v1434
    %v1436 = vand.u32 %v1435, 4294901760
    %v1437 = vsub.f32 %v1435, %v1436
    %v1438 = vand.u32 %v1437, 4294901760
    %1439 = vmatpush1.msra.mxu0 %v1438
    %1440 = vmatprep.subr.mxu0 0.0
    %v1441 = vand.u32 %v105, 4294901760
    %v1442 = vsub.f32 %v105, %v1441
    %v1443 = vand.u32 %v1442, 4294901760
    %v1444 = vsub.f32 %v1442, %v1443
    %v1445 = vand.u32 %v1444, 4294901760
    %1446 = vmatpush1.msra.mxu0 %v1445
    %1447 = vmatprep.subr.mxu0 0.0
    %v1448 = vand.u32 %v106, 4294901760
    %v1449 = vsub.f32 %v106, %v1448
    %v1450 = vand.u32 %v1449, 4294901760
    %v1451 = vsub.f32 %v1449, %v1450
    %v1452 = vand.u32 %v1451, 4294901760
    %1453 = vmatpush1.msra.mxu0 %v1452
    %v1454 = vand.u32 %v221, 4294901760
    %1455 = vmatprep.mubr.f32.mxu0 %v1454
    %v1456 = vand.u32 %v217, 4294901760
    %1457 = vmatmul.mubr.f32.gmra.mrb[0].mxu0 %v1456
    %v1458 = vpop.f32.mrb[0].mxu0
    %v1459 = vadd.f32 %v1227, %v1458
    %v1460 = vpop.f32.mrb[0].mxu0
    %1461 = vdwg.mxu0
    %1462 = vmatprep.subr.mxu0 0.0
    %v1463 = vand.u32 %v75, 4294901760
    %v1464 = vsub.f32 %v75, %v1463
    %1465 = vmatpush1.msra.mxu0 %v1464
    %1466 = vmatprep.subr.mxu0 0.0
    %v1467 = vand.u32 %v76, 4294901760
    %v1468 = vsub.f32 %v76, %v1467
    %1469 = vmatpush1.msra.mxu0 %v1468
    %1470 = vmatprep.subr.mxu0 0.0
    %v1471 = vand.u32 %v77, 4294901760
    %v1472 = vsub.f32 %v77, %v1471
    %1473 = vmatpush1.msra.mxu0 %v1472
    %1474 = vmatprep.subr.mxu0 0.0
    %v1475 = vand.u32 %v78, 4294901760
    %v1476 = vsub.f32 %v78, %v1475
    %1477 = vmatpush1.msra.mxu0 %v1476
    %1478 = vmatprep.subr.mxu0 0.0
    %v1479 = vand.u32 %v79, 4294901760
    %v1480 = vsub.f32 %v79, %v1479
    %1481 = vmatpush1.msra.mxu0 %v1480
    %1482 = vmatprep.subr.mxu0 0.0
    %v1483 = vand.u32 %v80, 4294901760
    %v1484 = vsub.f32 %v80, %v1483
    %1485 = vmatpush1.msra.mxu0 %v1484
    %1486 = vmatprep.subr.mxu0 0.0
    %v1487 = vand.u32 %v81, 4294901760
    %v1488 = vsub.f32 %v81, %v1487
    %1489 = vmatpush1.msra.mxu0 %v1488
    %1490 = vmatprep.subr.mxu0 0.0
    %v1491 = vand.u32 %v82, 4294901760
    %v1492 = vsub.f32 %v82, %v1491
    %1493 = vmatpush1.msra.mxu0 %v1492
    %1494 = vmatprep.subr.mxu0 0.0
    %v1495 = vand.u32 %v83, 4294901760
    %v1496 = vsub.f32 %v83, %v1495
    %1497 = vmatpush1.msra.mxu0 %v1496
    %1498 = vmatprep.subr.mxu0 0.0
    %v1499 = vand.u32 %v84, 4294901760
    %v1500 = vsub.f32 %v84, %v1499
    %1501 = vmatpush1.msra.mxu0 %v1500
    %1502 = vmatprep.subr.mxu0 0.0
    %v1503 = vand.u32 %v85, 4294901760
    %v1504 = vsub.f32 %v85, %v1503
    %1505 = vmatpush1.msra.mxu0 %v1504
    %1506 = vmatprep.subr.mxu0 0.0
    %v1507 = vand.u32 %v86, 4294901760
    %v1508 = vsub.f32 %v86, %v1507
    %1509 = vmatpush1.msra.mxu0 %v1508
    %1510 = vmatprep.subr.mxu0 0.0
    %v1511 = vand.u32 %v87, 4294901760
    %v1512 = vsub.f32 %v87, %v1511
    %1513 = vmatpush1.msra.mxu0 %v1512
    %1514 = vmatprep.subr.mxu0 0.0
    %v1515 = vand.u32 %v88, 4294901760
    %v1516 = vsub.f32 %v88, %v1515
    %1517 = vmatpush1.msra.mxu0 %v1516
    %1518 = vmatprep.subr.mxu0 0.0
    %v1519 = vand.u32 %v89, 4294901760
    %v1520 = vsub.f32 %v89, %v1519
    %1521 = vmatpush1.msra.mxu0 %v1520
    %1522 = vmatprep.subr.mxu0 0.0
    %v1523 = vand.u32 %v90, 4294901760
    %v1524 = vsub.f32 %v90, %v1523
    %1525 = vmatpush1.msra.mxu0 %v1524
    %1526 = vmatprep.subr.mxu0 0.0
    %v1527 = vand.u32 %v91, 4294901760
    %v1528 = vsub.f32 %v91, %v1527
    %1529 = vmatpush1.msra.mxu0 %v1528
    %1530 = vmatprep.subr.mxu0 0.0
    %v1531 = vand.u32 %v92, 4294901760
    %v1532 = vsub.f32 %v92, %v1531
    %1533 = vmatpush1.msra.mxu0 %v1532
    %1534 = vmatprep.subr.mxu0 0.0
    %v1535 = vand.u32 %v93, 4294901760
    %v1536 = vsub.f32 %v93, %v1535
    %1537 = vmatpush1.msra.mxu0 %v1536
    %1538 = vmatprep.subr.mxu0 0.0
    %v1539 = vand.u32 %v94, 4294901760
    %v1540 = vsub.f32 %v94, %v1539
    %1541 = vmatpush1.msra.mxu0 %v1540
    %1542 = vmatprep.subr.mxu0 0.0
    %v1543 = vand.u32 %v95, 4294901760
    %v1544 = vsub.f32 %v95, %v1543
    %1545 = vmatpush1.msra.mxu0 %v1544
    %1546 = vmatprep.subr.mxu0 0.0
    %v1547 = vand.u32 %v96, 4294901760
    %v1548 = vsub.f32 %v96, %v1547
    %1549 = vmatpush1.msra.mxu0 %v1548
    %1550 = vmatprep.subr.mxu0 0.0
    %v1551 = vand.u32 %v97, 4294901760
    %v1552 = vsub.f32 %v97, %v1551
    %1553 = vmatpush1.msra.mxu0 %v1552
    %1554 = vmatprep.subr.mxu0 0.0
    %v1555 = vand.u32 %v98, 4294901760
    %v1556 = vsub.f32 %v98, %v1555
    %1557 = vmatpush1.msra.mxu0 %v1556
    %1558 = vmatprep.subr.mxu0 0.0
    %v1559 = vand.u32 %v99, 4294901760
    %v1560 = vsub.f32 %v99, %v1559
    %1561 = vmatpush1.msra.mxu0 %v1560
    %1562 = vmatprep.subr.mxu0 0.0
    %v1563 = vand.u32 %v100, 4294901760
    %v1564 = vsub.f32 %v100, %v1563
    %1565 = vmatpush1.msra.mxu0 %v1564
    %1566 = vmatprep.subr.mxu0 0.0
    %v1567 = vand.u32 %v101, 4294901760
    %v1568 = vsub.f32 %v101, %v1567
    %1569 = vmatpush1.msra.mxu0 %v1568
    %1570 = vmatprep.subr.mxu0 0.0
    %v1571 = vand.u32 %v102, 4294901760
    %v1572 = vsub.f32 %v102, %v1571
    %1573 = vmatpush1.msra.mxu0 %v1572
    %1574 = vmatprep.subr.mxu0 0.0
    %v1575 = vand.u32 %v103, 4294901760
    %v1576 = vsub.f32 %v103, %v1575
    %1577 = vmatpush1.msra.mxu0 %v1576
    %1578 = vmatprep.subr.mxu0 0.0
    %v1579 = vand.u32 %v104, 4294901760
    %v1580 = vsub.f32 %v104, %v1579
    %1581 = vmatpush1.msra.mxu0 %v1580
    %1582 = vmatprep.subr.mxu0 0.0
    %v1583 = vand.u32 %v105, 4294901760
    %v1584 = vsub.f32 %v105, %v1583
    %1585 = vmatpush1.msra.mxu0 %v1584
    %1586 = vmatprep.subr.mxu0 0.0
    %v1587 = vand.u32 %v106, 4294901760
    %v1588 = vsub.f32 %v106, %v1587
    %1589 = vmatpush1.msra.mxu0 %v1588
    %v1590 = vand.u32 %v221, 4294901760
    %v1591 = vsub.f32 %v221, %v1590
    %1592 = vmatprep.mubr.f32.mxu0 %v1591
    %v1593 = vand.u32 %v217, 4294901760
    %v1594 = vsub.f32 %v217, %v1593
    %1595 = vmatmul.mubr.f32.gmra.mrb[0].mxu0 %v1594
    %v1596 = vpop.f32.mrb[0].mxu0
    %v1597 = vadd.f32 %v1459, %v1596
    %v1598 = vpop.f32.mrb[0].mxu0
    %1599 = vdwg.mxu0
    %1600 = vmatprep.subr.mxu0 0.0
    %v1601 = vand.u32 %v75, 4294901760
    %1602 = vmatpush1.msra.mxu0 %v1601
    %1603 = vmatprep.subr.mxu0 0.0
    %v1604 = vand.u32 %v76, 4294901760
    %1605 = vmatpush1.msra.mxu0 %v1604
    %1606 = vmatprep.subr.mxu0 0.0
    %v1607 = vand.u32 %v77, 4294901760
    %1608 = vmatpush1.msra.mxu0 %v1607
    %1609 = vmatprep.subr.mxu0 0.0
    %v1610 = vand.u32 %v78, 4294901760
    %1611 = vmatpush1.msra.mxu0 %v1610
    %1612 = vmatprep.subr.mxu0 0.0
    %v1613 = vand.u32 %v79, 4294901760
    %1614 = vmatpush1.msra.mxu0 %v1613
    %1615 = vmatprep.subr.mxu0 0.0
    %v1616 = vand.u32 %v80, 4294901760
    %1617 = vmatpush1.msra.mxu0 %v1616
    %1618 = vmatprep.subr.mxu0 0.0
    %v1619 = vand.u32 %v81, 4294901760
    %1620 = vmatpush1.msra.mxu0 %v1619
    %1621 = vmatprep.subr.mxu0 0.0
    %v1622 = vand.u32 %v82, 4294901760
    %1623 = vmatpush1.msra.mxu0 %v1622
    %1624 = vmatprep.subr.mxu0 0.0
    %v1625 = vand.u32 %v83, 4294901760
    %1626 = vmatpush1.msra.mxu0 %v1625
    %1627 = vmatprep.subr.mxu0 0.0
    %v1628 = vand.u32 %v84, 4294901760
    %1629 = vmatpush1.msra.mxu0 %v1628
    %1630 = vmatprep.subr.mxu0 0.0
    %v1631 = vand.u32 %v85, 4294901760
    %1632 = vmatpush1.msra.mxu0 %v1631
    %1633 = vmatprep.subr.mxu0 0.0
    %v1634 = vand.u32 %v86, 4294901760
    %1635 = vmatpush1.msra.mxu0 %v1634
    %1636 = vmatprep.subr.mxu0 0.0
    %v1637 = vand.u32 %v87, 4294901760
    %1638 = vmatpush1.msra.mxu0 %v1637
    %1639 = vmatprep.subr.mxu0 0.0
    %v1640 = vand.u32 %v88, 4294901760
    %1641 = vmatpush1.msra.mxu0 %v1640
    %1642 = vmatprep.subr.mxu0 0.0
    %v1643 = vand.u32 %v89, 4294901760
    %1644 = vmatpush1.msra.mxu0 %v1643
    %1645 = vmatprep.subr.mxu0 0.0
    %v1646 = vand.u32 %v90, 4294901760
    %1647 = vmatpush1.msra.mxu0 %v1646
    %1648 = vmatprep.subr.mxu0 0.0
    %v1649 = vand.u32 %v91, 4294901760
    %1650 = vmatpush1.msra.mxu0 %v1649
    %1651 = vmatprep.subr.mxu0 0.0
    %v1652 = vand.u32 %v92, 4294901760
    %1653 = vmatpush1.msra.mxu0 %v1652
    %1654 = vmatprep.subr.mxu0 0.0
    %v1655 = vand.u32 %v93, 4294901760
    %1656 = vmatpush1.msra.mxu0 %v1655
    %1657 = vmatprep.subr.mxu0 0.0
    %v1658 = vand.u32 %v94, 4294901760
    %1659 = vmatpush1.msra.mxu0 %v1658
    %1660 = vmatprep.subr.mxu0 0.0
    %v1661 = vand.u32 %v95, 4294901760
    %1662 = vmatpush1.msra.mxu0 %v1661
    %1663 = vmatprep.subr.mxu0 0.0
    %v1664 = vand.u32 %v96, 4294901760
    %1665 = vmatpush1.msra.mxu0 %v1664
    %1666 = vmatprep.subr.mxu0 0.0
    %v1667 = vand.u32 %v97, 4294901760
    %1668 = vmatpush1.msra.mxu0 %v1667
    %1669 = vmatprep.subr.mxu0 0.0
    %v1670 = vand.u32 %v98, 4294901760
    %1671 = vmatpush1.msra.mxu0 %v1670
    %1672 = vmatprep.subr.mxu0 0.0
    %v1673 = vand.u32 %v99, 4294901760
    %1674 = vmatpush1.msra.mxu0 %v1673
    %1675 = vmatprep.subr.mxu0 0.0
    %v1676 = vand.u32 %v100, 4294901760
    %1677 = vmatpush1.msra.mxu0 %v1676
    %1678 = vmatprep.subr.mxu0 0.0
    %v1679 = vand.u32 %v101, 4294901760
    %1680 = vmatpush1.msra.mxu0 %v1679
    %1681 = vmatprep.subr.mxu0 0.0
    %v1682 = vand.u32 %v102, 4294901760
    %1683 = vmatpush1.msra.mxu0 %v1682
    %1684 = vmatprep.subr.mxu0 0.0
    %v1685 = vand.u32 %v103, 4294901760
    %1686 = vmatpush1.msra.mxu0 %v1685
    %1687 = vmatprep.subr.mxu0 0.0
    %v1688 = vand.u32 %v104, 4294901760
    %1689 = vmatpush1.msra.mxu0 %v1688
    %1690 = vmatprep.subr.mxu0 0.0
    %v1691 = vand.u32 %v105, 4294901760
    %1692 = vmatpush1.msra.mxu0 %v1691
    %1693 = vmatprep.subr.mxu0 0.0
    %v1694 = vand.u32 %v106, 4294901760
    %1695 = vmatpush1.msra.mxu0 %v1694
    %v1696 = vand.u32 %v221, 4294901760
    %v1697 = vsub.f32 %v221, %v1696
    %v1698 = vand.u32 %v1697, 4294901760
    %1699 = vmatprep.mubr.f32.mxu0 %v1698
    %v1700 = vand.u32 %v217, 4294901760
    %v1701 = vsub.f32 %v217, %v1700
    %v1702 = vand.u32 %v1701, 4294901760
    %1703 = vmatmul.mubr.f32.gmra.mrb[0].mxu0 %v1702
    %v1704 = vpop.f32.mrb[0].mxu0
    %v1705 = vadd.f32 %v1597, %v1704
    %v1706 = vpop.f32.mrb[0].mxu0
    %1707 = vdwg.mxu0
    %1708 = vmatprep.subr.mxu0 0.0
    %v1709 = vand.u32 %v75, 4294901760
    %v1710 = vsub.f32 %v75, %v1709
    %v1711 = vand.u32 %v1710, 4294901760
    %1712 = vmatpush1.msra.mxu0 %v1711
    %1713 = vmatprep.subr.mxu0 0.0
    %v1714 = vand.u32 %v76, 4294901760
    %v1715 = vsub.f32 %v76, %v1714
    %v1716 = vand.u32 %v1715, 4294901760
    %1717 = vmatpush1.msra.mxu0 %v1716
    %1718 = vmatprep.subr.mxu0 0.0
    %v1719 = vand.u32 %v77, 4294901760
    %v1720 = vsub.f32 %v77, %v1719
    %v1721 = vand.u32 %v1720, 4294901760
    %1722 = vmatpush1.msra.mxu0 %v1721
    %1723 = vmatprep.subr.mxu0 0.0
    %v1724 = vand.u32 %v78, 4294901760
    %v1725 = vsub.f32 %v78, %v1724
    %v1726 = vand.u32 %v1725, 4294901760
    %1727 = vmatpush1.msra.mxu0 %v1726
    %1728 = vmatprep.subr.mxu0 0.0
    %v1729 = vand.u32 %v79, 4294901760
    %v1730 = vsub.f32 %v79, %v1729
    %v1731 = vand.u32 %v1730, 4294901760
    %1732 = vmatpush1.msra.mxu0 %v1731
    %1733 = vmatprep.subr.mxu0 0.0
    %v1734 = vand.u32 %v80, 4294901760
    %v1735 = vsub.f32 %v80, %v1734
    %v1736 = vand.u32 %v1735, 4294901760
    %1737 = vmatpush1.msra.mxu0 %v1736
    %1738 = vmatprep.subr.mxu0 0.0
    %v1739 = vand.u32 %v81, 4294901760
    %v1740 = vsub.f32 %v81, %v1739
    %v1741 = vand.u32 %v1740, 4294901760
    %1742 = vmatpush1.msra.mxu0 %v1741
    %1743 = vmatprep.subr.mxu0 0.0
    %v1744 = vand.u32 %v82, 4294901760
    %v1745 = vsub.f32 %v82, %v1744
    %v1746 = vand.u32 %v1745, 4294901760
    %1747 = vmatpush1.msra.mxu0 %v1746
    %1748 = vmatprep.subr.mxu0 0.0
    %v1749 = vand.u32 %v83, 4294901760
    %v1750 = vsub.f32 %v83, %v1749
    %v1751 = vand.u32 %v1750, 4294901760
    %1752 = vmatpush1.msra.mxu0 %v1751
    %1753 = vmatprep.subr.mxu0 0.0
    %v1754 = vand.u32 %v84, 4294901760
    %v1755 = vsub.f32 %v84, %v1754
    %v1756 = vand.u32 %v1755, 4294901760
    %1757 = vmatpush1.msra.mxu0 %v1756
    %1758 = vmatprep.subr.mxu0 0.0
    %v1759 = vand.u32 %v85, 4294901760
    %v1760 = vsub.f32 %v85, %v1759
    %v1761 = vand.u32 %v1760, 4294901760
    %1762 = vmatpush1.msra.mxu0 %v1761
    %1763 = vmatprep.subr.mxu0 0.0
    %v1764 = vand.u32 %v86, 4294901760
    %v1765 = vsub.f32 %v86, %v1764
    %v1766 = vand.u32 %v1765, 4294901760
    %1767 = vmatpush1.msra.mxu0 %v1766
    %1768 = vmatprep.subr.mxu0 0.0
    %v1769 = vand.u32 %v87, 4294901760
    %v1770 = vsub.f32 %v87, %v1769
    %v1771 = vand.u32 %v1770, 4294901760
    %1772 = vmatpush1.msra.mxu0 %v1771
    %1773 = vmatprep.subr.mxu0 0.0
    %v1774 = vand.u32 %v88, 4294901760
    %v1775 = vsub.f32 %v88, %v1774
    %v1776 = vand.u32 %v1775, 4294901760
    %1777 = vmatpush1.msra.mxu0 %v1776
    %1778 = vmatprep.subr.mxu0 0.0
    %v1779 = vand.u32 %v89, 4294901760
    %v1780 = vsub.f32 %v89, %v1779
    %v1781 = vand.u32 %v1780, 4294901760
    %1782 = vmatpush1.msra.mxu0 %v1781
    %1783 = vmatprep.subr.mxu0 0.0
    %v1784 = vand.u32 %v90, 4294901760
    %v1785 = vsub.f32 %v90, %v1784
    %v1786 = vand.u32 %v1785, 4294901760
    %1787 = vmatpush1.msra.mxu0 %v1786
    %1788 = vmatprep.subr.mxu0 0.0
    %v1789 = vand.u32 %v91, 4294901760
    %v1790 = vsub.f32 %v91, %v1789
    %v1791 = vand.u32 %v1790, 4294901760
    %1792 = vmatpush1.msra.mxu0 %v1791
    %1793 = vmatprep.subr.mxu0 0.0
    %v1794 = vand.u32 %v92, 4294901760
    %v1795 = vsub.f32 %v92, %v1794
    %v1796 = vand.u32 %v1795, 4294901760
    %1797 = vmatpush1.msra.mxu0 %v1796
    %1798 = vmatprep.subr.mxu0 0.0
    %v1799 = vand.u32 %v93, 4294901760
    %v1800 = vsub.f32 %v93, %v1799
    %v1801 = vand.u32 %v1800, 4294901760
    %1802 = vmatpush1.msra.mxu0 %v1801
    %1803 = vmatprep.subr.mxu0 0.0
    %v1804 = vand.u32 %v94, 4294901760
    %v1805 = vsub.f32 %v94, %v1804
    %v1806 = vand.u32 %v1805, 4294901760
    %1807 = vmatpush1.msra.mxu0 %v1806
    %1808 = vmatprep.subr.mxu0 0.0
    %v1809 = vand.u32 %v95, 4294901760
    %v1810 = vsub.f32 %v95, %v1809
    %v1811 = vand.u32 %v1810, 4294901760
    %1812 = vmatpush1.msra.mxu0 %v1811
    %1813 = vmatprep.subr.mxu0 0.0
    %v1814 = vand.u32 %v96, 4294901760
    %v1815 = vsub.f32 %v96, %v1814
    %v1816 = vand.u32 %v1815, 4294901760
    %1817 = vmatpush1.msra.mxu0 %v1816
    %1818 = vmatprep.subr.mxu0 0.0
    %v1819 = vand.u32 %v97, 4294901760
    %v1820 = vsub.f32 %v97, %v1819
    %v1821 = vand.u32 %v1820, 4294901760
    %1822 = vmatpush1.msra.mxu0 %v1821
    %1823 = vmatprep.subr.mxu0 0.0
    %v1824 = vand.u32 %v98, 4294901760
    %v1825 = vsub.f32 %v98, %v1824
    %v1826 = vand.u32 %v1825, 4294901760
    %1827 = vmatpush1.msra.mxu0 %v1826
    %1828 = vmatprep.subr.mxu0 0.0
    %v1829 = vand.u32 %v99, 4294901760
    %v1830 = vsub.f32 %v99, %v1829
    %v1831 = vand.u32 %v1830, 4294901760
    %1832 = vmatpush1.msra.mxu0 %v1831
    %1833 = vmatprep.subr.mxu0 0.0
    %v1834 = vand.u32 %v100, 4294901760
    %v1835 = vsub.f32 %v100, %v1834
    %v1836 = vand.u32 %v1835, 4294901760
    %1837 = vmatpush1.msra.mxu0 %v1836
    %1838 = vmatprep.subr.mxu0 0.0
    %v1839 = vand.u32 %v101, 4294901760
    %v1840 = vsub.f32 %v101, %v1839
    %v1841 = vand.u32 %v1840, 4294901760
    %1842 = vmatpush1.msra.mxu0 %v1841
    %1843 = vmatprep.subr.mxu0 0.0
    %v1844 = vand.u32 %v102, 4294901760
    %v1845 = vsub.f32 %v102, %v1844
    %v1846 = vand.u32 %v1845, 4294901760
    %1847 = vmatpush1.msra.mxu0 %v1846
    %1848 = vmatprep.subr.mxu0 0.0
    %v1849 = vand.u32 %v103, 4294901760
    %v1850 = vsub.f32 %v103, %v1849
    %v1851 = vand.u32 %v1850, 4294901760
    %1852 = vmatpush1.msra.mxu0 %v1851
    %1853 = vmatprep.subr.mxu0 0.0
    %v1854 = vand.u32 %v104, 4294901760
    %v1855 = vsub.f32 %v104, %v1854
    %v1856 = vand.u32 %v1855, 4294901760
    %1857 = vmatpush1.msra.mxu0 %v1856
    %1858 = vmatprep.subr.mxu0 0.0
    %v1859 = vand.u32 %v105, 4294901760
    %v1860 = vsub.f32 %v105, %v1859
    %v1861 = vand.u32 %v1860, 4294901760
    %1862 = vmatpush1.msra.mxu0 %v1861
    %1863 = vmatprep.subr.mxu0 0.0
    %v1864 = vand.u32 %v106, 4294901760
    %v1865 = vsub.f32 %v106, %v1864
    %v1866 = vand.u32 %v1865, 4294901760
    %1867 = vmatpush1.msra.mxu0 %v1866
    %v1868 = vand.u32 %v221, 4294901760
    %1869 = vmatprep.mubr.f32.mxu0 %v1868
    %v1870 = vand.u32 %v217, 4294901760
    %1871 = vmatmul.mubr.f32.gmra.mrb[0].mxu0 %v1870
    %v1872 = vpop.f32.mrb[0].mxu0
    %v1873 = vadd.f32 %v1705, %v1872
    %v1874 = vpop.f32.mrb[0].mxu0
    %1875 = vdwg.mxu0
    %1876 = vmatprep.subr.mxu0 0.0
    %v1877 = vand.u32 %v75, 4294901760
    %1878 = vmatpush1.msra.mxu0 %v1877
    %1879 = vmatprep.subr.mxu0 0.0
    %v1880 = vand.u32 %v76, 4294901760
    %1881 = vmatpush1.msra.mxu0 %v1880
    %1882 = vmatprep.subr.mxu0 0.0
    %v1883 = vand.u32 %v77, 4294901760
    %1884 = vmatpush1.msra.mxu0 %v1883
    %1885 = vmatprep.subr.mxu0 0.0
    %v1886 = vand.u32 %v78, 4294901760
    %1887 = vmatpush1.msra.mxu0 %v1886
    %1888 = vmatprep.subr.mxu0 0.0
    %v1889 = vand.u32 %v79, 4294901760
    %1890 = vmatpush1.msra.mxu0 %v1889
    %1891 = vmatprep.subr.mxu0 0.0
    %v1892 = vand.u32 %v80, 4294901760
    %1893 = vmatpush1.msra.mxu0 %v1892
    %1894 = vmatprep.subr.mxu0 0.0
    %v1895 = vand.u32 %v81, 4294901760
    %1896 = vmatpush1.msra.mxu0 %v1895
    %1897 = vmatprep.subr.mxu0 0.0
    %v1898 = vand.u32 %v82, 4294901760
    %1899 = vmatpush1.msra.mxu0 %v1898
    %1900 = vmatprep.subr.mxu0 0.0
    %v1901 = vand.u32 %v83, 4294901760
    %1902 = vmatpush1.msra.mxu0 %v1901
    %1903 = vmatprep.subr.mxu0 0.0
    %v1904 = vand.u32 %v84, 4294901760
    %1905 = vmatpush1.msra.mxu0 %v1904
    %1906 = vmatprep.subr.mxu0 0.0
    %v1907 = vand.u32 %v85, 4294901760
    %1908 = vmatpush1.msra.mxu0 %v1907
    %1909 = vmatprep.subr.mxu0 0.0
    %v1910 = vand.u32 %v86, 4294901760
    %1911 = vmatpush1.msra.mxu0 %v1910
    %1912 = vmatprep.subr.mxu0 0.0
    %v1913 = vand.u32 %v87, 4294901760
    %1914 = vmatpush1.msra.mxu0 %v1913
    %1915 = vmatprep.subr.mxu0 0.0
    %v1916 = vand.u32 %v88, 4294901760
    %1917 = vmatpush1.msra.mxu0 %v1916
    %1918 = vmatprep.subr.mxu0 0.0
    %v1919 = vand.u32 %v89, 4294901760
    %1920 = vmatpush1.msra.mxu0 %v1919
    %1921 = vmatprep.subr.mxu0 0.0
    %v1922 = vand.u32 %v90, 4294901760
    %1923 = vmatpush1.msra.mxu0 %v1922
    %1924 = vmatprep.subr.mxu0 0.0
    %v1925 = vand.u32 %v91, 4294901760
    %1926 = vmatpush1.msra.mxu0 %v1925
    %1927 = vmatprep.subr.mxu0 0.0
    %v1928 = vand.u32 %v92, 4294901760
    %1929 = vmatpush1.msra.mxu0 %v1928
    %1930 = vmatprep.subr.mxu0 0.0
    %v1931 = vand.u32 %v93, 4294901760
    %1932 = vmatpush1.msra.mxu0 %v1931
    %1933 = vmatprep.subr.mxu0 0.0
    %v1934 = vand.u32 %v94, 4294901760
    %1935 = vmatpush1.msra.mxu0 %v1934
    %1936 = vmatprep.subr.mxu0 0.0
    %v1937 = vand.u32 %v95, 4294901760
    %1938 = vmatpush1.msra.mxu0 %v1937
    %1939 = vmatprep.subr.mxu0 0.0
    %v1940 = vand.u32 %v96, 4294901760
    %1941 = vmatpush1.msra.mxu0 %v1940
    %1942 = vmatprep.subr.mxu0 0.0
    %v1943 = vand.u32 %v97, 4294901760
    %1944 = vmatpush1.msra.mxu0 %v1943
    %1945 = vmatprep.subr.mxu0 0.0
    %v1946 = vand.u32 %v98, 4294901760
    %1947 = vmatpush1.msra.mxu0 %v1946
    %1948 = vmatprep.subr.mxu0 0.0
    %v1949 = vand.u32 %v99, 4294901760
    %1950 = vmatpush1.msra.mxu0 %v1949
    %1951 = vmatprep.subr.mxu0 0.0
    %v1952 = vand.u32 %v100, 4294901760
    %1953 = vmatpush1.msra.mxu0 %v1952
    %1954 = vmatprep.subr.mxu0 0.0
    %v1955 = vand.u32 %v101, 4294901760
    %1956 = vmatpush1.msra.mxu0 %v1955
    %1957 = vmatprep.subr.mxu0 0.0
    %v1958 = vand.u32 %v102, 4294901760
    %1959 = vmatpush1.msra.mxu0 %v1958
    %1960 = vmatprep.subr.mxu0 0.0
    %v1961 = vand.u32 %v103, 4294901760
    %1962 = vmatpush1.msra.mxu0 %v1961
    %1963 = vmatprep.subr.mxu0 0.0
    %v1964 = vand.u32 %v104, 4294901760
    %1965 = vmatpush1.msra.mxu0 %v1964
    %1966 = vmatprep.subr.mxu0 0.0
    %v1967 = vand.u32 %v105, 4294901760
    %1968 = vmatpush1.msra.mxu0 %v1967
    %1969 = vmatprep.subr.mxu0 0.0
    %v1970 = vand.u32 %v106, 4294901760
    %1971 = vmatpush1.msra.mxu0 %v1970
    %v1972 = vand.u32 %v221, 4294901760
    %1973 = vmatprep.mubr.f32.mxu0 %v1972
    %v1974 = vand.u32 %v217, 4294901760
    %1975 = vmatmul.mubr.f32.gmra.mrb[0].mxu0 %v1974
    %v1976 = vpop.f32.mrb[0].mxu0
    %v1977 = vadd.f32 %v1873, %v1976
    %v1978 = vpop.f32.mrb[0].mxu0
    %1979 = vdwg.mxu0
    %1980 = vmatprep.subr.mxu0 0.0
    %v1981 = vand.u32 %v107, 4294901760
    %1982 = vmatpush1.msra.mxu0 %v1981
    %1983 = vmatprep.subr.mxu0 0.0
    %v1984 = vand.u32 %v108, 4294901760
    %1985 = vmatpush1.msra.mxu0 %v1984
    %1986 = vmatprep.subr.mxu0 0.0
    %v1987 = vand.u32 %v109, 4294901760
    %1988 = vmatpush1.msra.mxu0 %v1987
    %1989 = vmatprep.subr.mxu0 0.0
    %v1990 = vand.u32 %v110, 4294901760
    %1991 = vmatpush1.msra.mxu0 %v1990
    %1992 = vmatprep.subr.mxu0 0.0
    %v1993 = vand.u32 %v111, 4294901760
    %1994 = vmatpush1.msra.mxu0 %v1993
    %1995 = vmatprep.subr.mxu0 0.0
    %v1996 = vand.u32 %v112, 4294901760
    %1997 = vmatpush1.msra.mxu0 %v1996
    %1998 = vmatprep.subr.mxu0 0.0
    %v1999 = vand.u32 %v113, 4294901760
    %2000 = vmatpush1.msra.mxu0 %v1999
    %2001 = vmatprep.subr.mxu0 0.0
    %v2002 = vand.u32 %v114, 4294901760
    %2003 = vmatpush1.msra.mxu0 %v2002
    %2004 = vmatprep.subr.mxu0 0.0
    %v2005 = vand.u32 %v115, 4294901760
    %2006 = vmatpush1.msra.mxu0 %v2005
    %2007 = vmatprep.subr.mxu0 0.0
    %v2008 = vand.u32 %v116, 4294901760
    %2009 = vmatpush1.msra.mxu0 %v2008
    %2010 = vmatprep.subr.mxu0 0.0
    %v2011 = vand.u32 %v117, 4294901760
    %2012 = vmatpush1.msra.mxu0 %v2011
    %2013 = vmatprep.subr.mxu0 0.0
    %v2014 = vand.u32 %v118, 4294901760
    %2015 = vmatpush1.msra.mxu0 %v2014
    %2016 = vmatprep.subr.mxu0 0.0
    %v2017 = vand.u32 %v119, 4294901760
    %2018 = vmatpush1.msra.mxu0 %v2017
    %2019 = vmatprep.subr.mxu0 0.0
    %v2020 = vand.u32 %v120, 4294901760
    %2021 = vmatpush1.msra.mxu0 %v2020
    %2022 = vmatprep.subr.mxu0 0.0
    %v2023 = vand.u32 %v121, 4294901760
    %2024 = vmatpush1.msra.mxu0 %v2023
    %2025 = vmatprep.subr.mxu0 0.0
    %v2026 = vand.u32 %v122, 4294901760
    %2027 = vmatpush1.msra.mxu0 %v2026
    %2028 = vmatprep.subr.mxu0 0.0
    %v2029 = vand.u32 %v123, 4294901760
    %2030 = vmatpush1.msra.mxu0 %v2029
    %2031 = vmatprep.subr.mxu0 0.0
    %v2032 = vand.u32 %v124, 4294901760
    %2033 = vmatpush1.msra.mxu0 %v2032
    %2034 = vmatprep.subr.mxu0 0.0
    %v2035 = vand.u32 %v125, 4294901760
    %2036 = vmatpush1.msra.mxu0 %v2035
    %2037 = vmatprep.subr.mxu0 0.0
    %v2038 = vand.u32 %v126, 4294901760
    %2039 = vmatpush1.msra.mxu0 %v2038
    %2040 = vmatprep.subr.mxu0 0.0
    %v2041 = vand.u32 %v127, 4294901760
    %2042 = vmatpush1.msra.mxu0 %v2041
    %2043 = vmatprep.subr.mxu0 0.0
    %v2044 = vand.u32 %v128, 4294901760
    %2045 = vmatpush1.msra.mxu0 %v2044
    %2046 = vmatprep.subr.mxu0 0.0
    %v2047 = vand.u32 %v129, 4294901760
    %2048 = vmatpush1.msra.mxu0 %v2047
    %2049 = vmatprep.subr.mxu0 0.0
    %v2050 = vand.u32 %v130, 4294901760
    %2051 = vmatpush1.msra.mxu0 %v2050
    %2052 = vmatprep.subr.mxu0 0.0
    %v2053 = vand.u32 %v131, 4294901760
    %2054 = vmatpush1.msra.mxu0 %v2053
    %2055 = vmatprep.subr.mxu0 0.0
    %v2056 = vand.u32 %v132, 4294901760
    %2057 = vmatpush1.msra.mxu0 %v2056
    %2058 = vmatprep.subr.mxu0 0.0
    %v2059 = vand.u32 %v133, 4294901760
    %2060 = vmatpush1.msra.mxu0 %v2059
    %2061 = vmatprep.subr.mxu0 0.0
    %v2062 = vand.u32 %v134, 4294901760
    %2063 = vmatpush1.msra.mxu0 %v2062
    %2064 = vmatprep.subr.mxu0 0.0
    %v2065 = vand.u32 %v135, 4294901760
    %2066 = vmatpush1.msra.mxu0 %v2065
    %2067 = vmatprep.subr.mxu0 0.0
    %v2068 = vand.u32 %v136, 4294901760
    %2069 = vmatpush1.msra.mxu0 %v2068
    %2070 = vmatprep.subr.mxu0 0.0
    %v2071 = vand.u32 %v137, 4294901760
    %2072 = vmatpush1.msra.mxu0 %v2071
    %2073 = vmatprep.subr.mxu0 0.0
    %v2074 = vand.u32 %v138, 4294901760
    %2075 = vmatpush1.msra.mxu0 %v2074
    %v2076 = vand.u32 %v229, 4294901760
    %v2077 = vsub.f32 %v229, %v2076
    %v2078 = vand.u32 %v2077, 4294901760
    %v2079 = vsub.f32 %v2077, %v2078
    %v2080 = vand.u32 %v2079, 4294901760
    %2081 = vmatprep.mubr.f32.mxu0 %v2080
    %v2082 = vand.u32 %v225, 4294901760
    %v2083 = vsub.f32 %v225, %v2082
    %v2084 = vand.u32 %v2083, 4294901760
    %v2085 = vsub.f32 %v2083, %v2084
    %v2086 = vand.u32 %v2085, 4294901760
    %2087 = vmatmul.mubr.f32.gmra.mrb[0].mxu0 %v2086
    %v2088 = vpop.f32.mrb[0].mxu0
    %v2089 = vadd.f32 %v1977, %v2088
    %v2090 = vpop.f32.mrb[0].mxu0
    %2091 = vdwg.mxu0
    %2092 = vmatprep.subr.mxu0 0.0
    %v2093 = vand.u32 %v107, 4294901760
    %v2094 = vsub.f32 %v107, %v2093
    %v2095 = vand.u32 %v2094, 4294901760
    %v2096 = vsub.f32 %v2094, %v2095
    %v2097 = vand.u32 %v2096, 4294901760
    %2098 = vmatpush1.msra.mxu0 %v2097
    %2099 = vmatprep.subr.mxu0 0.0
    %v2100 = vand.u32 %v108, 4294901760
    %v2101 = vsub.f32 %v108, %v2100
    %v2102 = vand.u32 %v2101, 4294901760
    %v2103 = vsub.f32 %v2101, %v2102
    %v2104 = vand.u32 %v2103, 4294901760
    %2105 = vmatpush1.msra.mxu0 %v2104
    %2106 = vmatprep.subr.mxu0 0.0
    %v2107 = vand.u32 %v109, 4294901760
    %v2108 = vsub.f32 %v109, %v2107
    %v2109 = vand.u32 %v2108, 4294901760
    %v2110 = vsub.f32 %v2108, %v2109
    %v2111 = vand.u32 %v2110, 4294901760
    %2112 = vmatpush1.msra.mxu0 %v2111
    %2113 = vmatprep.subr.mxu0 0.0
    %v2114 = vand.u32 %v110, 4294901760
    %v2115 = vsub.f32 %v110, %v2114
    %v2116 = vand.u32 %v2115, 4294901760
    %v2117 = vsub.f32 %v2115, %v2116
    %v2118 = vand.u32 %v2117, 4294901760
    %2119 = vmatpush1.msra.mxu0 %v2118
    %2120 = vmatprep.subr.mxu0 0.0
    %v2121 = vand.u32 %v111, 4294901760
    %v2122 = vsub.f32 %v111, %v2121
    %v2123 = vand.u32 %v2122, 4294901760
    %v2124 = vsub.f32 %v2122, %v2123
    %v2125 = vand.u32 %v2124, 4294901760
    %2126 = vmatpush1.msra.mxu0 %v2125
    %2127 = vmatprep.subr.mxu0 0.0
    %v2128 = vand.u32 %v112, 4294901760
    %v2129 = vsub.f32 %v112, %v2128
    %v2130 = vand.u32 %v2129, 4294901760
    %v2131 = vsub.f32 %v2129, %v2130
    %v2132 = vand.u32 %v2131, 4294901760
    %2133 = vmatpush1.msra.mxu0 %v2132
    %2134 = vmatprep.subr.mxu0 0.0
    %v2135 = vand.u32 %v113, 4294901760
    %v2136 = vsub.f32 %v113, %v2135
    %v2137 = vand.u32 %v2136, 4294901760
    %v2138 = vsub.f32 %v2136, %v2137
    %v2139 = vand.u32 %v2138, 4294901760
    %2140 = vmatpush1.msra.mxu0 %v2139
    %2141 = vmatprep.subr.mxu0 0.0
    %v2142 = vand.u32 %v114, 4294901760
    %v2143 = vsub.f32 %v114, %v2142
    %v2144 = vand.u32 %v2143, 4294901760
    %v2145 = vsub.f32 %v2143, %v2144
    %v2146 = vand.u32 %v2145, 4294901760
    %2147 = vmatpush1.msra.mxu0 %v2146
    %2148 = vmatprep.subr.mxu0 0.0
    %v2149 = vand.u32 %v115, 4294901760
    %v2150 = vsub.f32 %v115, %v2149
    %v2151 = vand.u32 %v2150, 4294901760
    %v2152 = vsub.f32 %v2150, %v2151
    %v2153 = vand.u32 %v2152, 4294901760
    %2154 = vmatpush1.msra.mxu0 %v2153
    %2155 = vmatprep.subr.mxu0 0.0
    %v2156 = vand.u32 %v116, 4294901760
    %v2157 = vsub.f32 %v116, %v2156
    %v2158 = vand.u32 %v2157, 4294901760
    %v2159 = vsub.f32 %v2157, %v2158
    %v2160 = vand.u32 %v2159, 4294901760
    %2161 = vmatpush1.msra.mxu0 %v2160
    %2162 = vmatprep.subr.mxu0 0.0
    %v2163 = vand.u32 %v117, 4294901760
    %v2164 = vsub.f32 %v117, %v2163
    %v2165 = vand.u32 %v2164, 4294901760
    %v2166 = vsub.f32 %v2164, %v2165
    %v2167 = vand.u32 %v2166, 4294901760
    %2168 = vmatpush1.msra.mxu0 %v2167
    %2169 = vmatprep.subr.mxu0 0.0
    %v2170 = vand.u32 %v118, 4294901760
    %v2171 = vsub.f32 %v118, %v2170
    %v2172 = vand.u32 %v2171, 4294901760
    %v2173 = vsub.f32 %v2171, %v2172
    %v2174 = vand.u32 %v2173, 4294901760
    %2175 = vmatpush1.msra.mxu0 %v2174
    %2176 = vmatprep.subr.mxu0 0.0
    %v2177 = vand.u32 %v119, 4294901760
    %v2178 = vsub.f32 %v119, %v2177
    %v2179 = vand.u32 %v2178, 4294901760
    %v2180 = vsub.f32 %v2178, %v2179
    %v2181 = vand.u32 %v2180, 4294901760
    %2182 = vmatpush1.msra.mxu0 %v2181
    %2183 = vmatprep.subr.mxu0 0.0
    %v2184 = vand.u32 %v120, 4294901760
    %v2185 = vsub.f32 %v120, %v2184
    %v2186 = vand.u32 %v2185, 4294901760
    %v2187 = vsub.f32 %v2185, %v2186
    %v2188 = vand.u32 %v2187, 4294901760
    %2189 = vmatpush1.msra.mxu0 %v2188
    %2190 = vmatprep.subr.mxu0 0.0
    %v2191 = vand.u32 %v121, 4294901760
    %v2192 = vsub.f32 %v121, %v2191
    %v2193 = vand.u32 %v2192, 4294901760
    %v2194 = vsub.f32 %v2192, %v2193
    %v2195 = vand.u32 %v2194, 4294901760
    %2196 = vmatpush1.msra.mxu0 %v2195
    %2197 = vmatprep.subr.mxu0 0.0
    %v2198 = vand.u32 %v122, 4294901760
    %v2199 = vsub.f32 %v122, %v2198
    %v2200 = vand.u32 %v2199, 4294901760
    %v2201 = vsub.f32 %v2199, %v2200
    %v2202 = vand.u32 %v2201, 4294901760
    %2203 = vmatpush1.msra.mxu0 %v2202
    %2204 = vmatprep.subr.mxu0 0.0
    %v2205 = vand.u32 %v123, 4294901760
    %v2206 = vsub.f32 %v123, %v2205
    %v2207 = vand.u32 %v2206, 4294901760
    %v2208 = vsub.f32 %v2206, %v2207
    %v2209 = vand.u32 %v2208, 4294901760
    %2210 = vmatpush1.msra.mxu0 %v2209
    %2211 = vmatprep.subr.mxu0 0.0
    %v2212 = vand.u32 %v124, 4294901760
    %v2213 = vsub.f32 %v124, %v2212
    %v2214 = vand.u32 %v2213, 4294901760
    %v2215 = vsub.f32 %v2213, %v2214
    %v2216 = vand.u32 %v2215, 4294901760
    %2217 = vmatpush1.msra.mxu0 %v2216
    %2218 = vmatprep.subr.mxu0 0.0
    %v2219 = vand.u32 %v125, 4294901760
    %v2220 = vsub.f32 %v125, %v2219
    %v2221 = vand.u32 %v2220, 4294901760
    %v2222 = vsub.f32 %v2220, %v2221
    %v2223 = vand.u32 %v2222, 4294901760
    %2224 = vmatpush1.msra.mxu0 %v2223
    %2225 = vmatprep.subr.mxu0 0.0
    %v2226 = vand.u32 %v126, 4294901760
    %v2227 = vsub.f32 %v126, %v2226
    %v2228 = vand.u32 %v2227, 4294901760
    %v2229 = vsub.f32 %v2227, %v2228
    %v2230 = vand.u32 %v2229, 4294901760
    %2231 = vmatpush1.msra.mxu0 %v2230
    %2232 = vmatprep.subr.mxu0 0.0
    %v2233 = vand.u32 %v127, 4294901760
    %v2234 = vsub.f32 %v127, %v2233
    %v2235 = vand.u32 %v2234, 4294901760
    %v2236 = vsub.f32 %v2234, %v2235
    %v2237 = vand.u32 %v2236, 4294901760
    %2238 = vmatpush1.msra.mxu0 %v2237
    %2239 = vmatprep.subr.mxu0 0.0
    %v2240 = vand.u32 %v128, 4294901760
    %v2241 = vsub.f32 %v128, %v2240
    %v2242 = vand.u32 %v2241, 4294901760
    %v2243 = vsub.f32 %v2241, %v2242
    %v2244 = vand.u32 %v2243, 4294901760
    %2245 = vmatpush1.msra.mxu0 %v2244
    %2246 = vmatprep.subr.mxu0 0.0
    %v2247 = vand.u32 %v129, 4294901760
    %v2248 = vsub.f32 %v129, %v2247
    %v2249 = vand.u32 %v2248, 4294901760
    %v2250 = vsub.f32 %v2248, %v2249
    %v2251 = vand.u32 %v2250, 4294901760
    %2252 = vmatpush1.msra.mxu0 %v2251
    %2253 = vmatprep.subr.mxu0 0.0
    %v2254 = vand.u32 %v130, 4294901760
    %v2255 = vsub.f32 %v130, %v2254
    %v2256 = vand.u32 %v2255, 4294901760
    %v2257 = vsub.f32 %v2255, %v2256
    %v2258 = vand.u32 %v2257, 4294901760
    %2259 = vmatpush1.msra.mxu0 %v2258
    %2260 = vmatprep.subr.mxu0 0.0
    %v2261 = vand.u32 %v131, 4294901760
    %v2262 = vsub.f32 %v131, %v2261
    %v2263 = vand.u32 %v2262, 4294901760
    %v2264 = vsub.f32 %v2262, %v2263
    %v2265 = vand.u32 %v2264, 4294901760
    %2266 = vmatpush1.msra.mxu0 %v2265
    %2267 = vmatprep.subr.mxu0 0.0
    %v2268 = vand.u32 %v132, 4294901760
    %v2269 = vsub.f32 %v132, %v2268
    %v2270 = vand.u32 %v2269, 4294901760
    %v2271 = vsub.f32 %v2269, %v2270
    %v2272 = vand.u32 %v2271, 4294901760
    %2273 = vmatpush1.msra.mxu0 %v2272
    %2274 = vmatprep.subr.mxu0 0.0
    %v2275 = vand.u32 %v133, 4294901760
    %v2276 = vsub.f32 %v133, %v2275
    %v2277 = vand.u32 %v2276, 4294901760
    %v2278 = vsub.f32 %v2276, %v2277
    %v2279 = vand.u32 %v2278, 4294901760
    %2280 = vmatpush1.msra.mxu0 %v2279
    %2281 = vmatprep.subr.mxu0 0.0
    %v2282 = vand.u32 %v134, 4294901760
    %v2283 = vsub.f32 %v134, %v2282
    %v2284 = vand.u32 %v2283, 4294901760
    %v2285 = vsub.f32 %v2283, %v2284
    %v2286 = vand.u32 %v2285, 4294901760
    %2287 = vmatpush1.msra.mxu0 %v2286
    %2288 = vmatprep.subr.mxu0 0.0
    %v2289 = vand.u32 %v135, 4294901760
    %v2290 = vsub.f32 %v135, %v2289
    %v2291 = vand.u32 %v2290, 4294901760
    %v2292 = vsub.f32 %v2290, %v2291
    %v2293 = vand.u32 %v2292, 4294901760
    %2294 = vmatpush1.msra.mxu0 %v2293
    %2295 = vmatprep.subr.mxu0 0.0
    %v2296 = vand.u32 %v136, 4294901760
    %v2297 = vsub.f32 %v136, %v2296
    %v2298 = vand.u32 %v2297, 4294901760
    %v2299 = vsub.f32 %v2297, %v2298
    %v2300 = vand.u32 %v2299, 4294901760
    %2301 = vmatpush1.msra.mxu0 %v2300
    %2302 = vmatprep.subr.mxu0 0.0
    %v2303 = vand.u32 %v137, 4294901760
    %v2304 = vsub.f32 %v137, %v2303
    %v2305 = vand.u32 %v2304, 4294901760
    %v2306 = vsub.f32 %v2304, %v2305
    %v2307 = vand.u32 %v2306, 4294901760
    %2308 = vmatpush1.msra.mxu0 %v2307
    %2309 = vmatprep.subr.mxu0 0.0
    %v2310 = vand.u32 %v138, 4294901760
    %v2311 = vsub.f32 %v138, %v2310
    %v2312 = vand.u32 %v2311, 4294901760
    %v2313 = vsub.f32 %v2311, %v2312
    %v2314 = vand.u32 %v2313, 4294901760
    %2315 = vmatpush1.msra.mxu0 %v2314
    %v2316 = vand.u32 %v229, 4294901760
    %2317 = vmatprep.mubr.f32.mxu0 %v2316
    %v2318 = vand.u32 %v225, 4294901760
    %2319 = vmatmul.mubr.f32.gmra.mrb[0].mxu0 %v2318
    %v2320 = vpop.f32.mrb[0].mxu0
    %v2321 = vadd.f32 %v2089, %v2320
    %v2322 = vpop.f32.mrb[0].mxu0
    %2323 = vdwg.mxu0
    %2324 = vmatprep.subr.mxu0 0.0
    %v2325 = vand.u32 %v107, 4294901760
    %v2326 = vsub.f32 %v107, %v2325
    %2327 = vmatpush1.msra.mxu0 %v2326
    %2328 = vmatprep.subr.mxu0 0.0
    %v2329 = vand.u32 %v108, 4294901760
    %v2330 = vsub.f32 %v108, %v2329
    %2331 = vmatpush1.msra.mxu0 %v2330
    %2332 = vmatprep.subr.mxu0 0.0
    %v2333 = vand.u32 %v109, 4294901760
    %v2334 = vsub.f32 %v109, %v2333
    %2335 = vmatpush1.msra.mxu0 %v2334
    %2336 = vmatprep.subr.mxu0 0.0
    %v2337 = vand.u32 %v110, 4294901760
    %v2338 = vsub.f32 %v110, %v2337
    %2339 = vmatpush1.msra.mxu0 %v2338
    %2340 = vmatprep.subr.mxu0 0.0
    %v2341 = vand.u32 %v111, 4294901760
    %v2342 = vsub.f32 %v111, %v2341
    %2343 = vmatpush1.msra.mxu0 %v2342
    %2344 = vmatprep.subr.mxu0 0.0
    %v2345 = vand.u32 %v112, 4294901760
    %v2346 = vsub.f32 %v112, %v2345
    %2347 = vmatpush1.msra.mxu0 %v2346
    %2348 = vmatprep.subr.mxu0 0.0
    %v2349 = vand.u32 %v113, 4294901760
    %v2350 = vsub.f32 %v113, %v2349
    %2351 = vmatpush1.msra.mxu0 %v2350
    %2352 = vmatprep.subr.mxu0 0.0
    %v2353 = vand.u32 %v114, 4294901760
    %v2354 = vsub.f32 %v114, %v2353
    %2355 = vmatpush1.msra.mxu0 %v2354
    %2356 = vmatprep.subr.mxu0 0.0
    %v2357 = vand.u32 %v115, 4294901760
    %v2358 = vsub.f32 %v115, %v2357
    %2359 = vmatpush1.msra.mxu0 %v2358
    %2360 = vmatprep.subr.mxu0 0.0
    %v2361 = vand.u32 %v116, 4294901760
    %v2362 = vsub.f32 %v116, %v2361
    %2363 = vmatpush1.msra.mxu0 %v2362
    %2364 = vmatprep.subr.mxu0 0.0
    %v2365 = vand.u32 %v117, 4294901760
    %v2366 = vsub.f32 %v117, %v2365
    %2367 = vmatpush1.msra.mxu0 %v2366
    %2368 = vmatprep.subr.mxu0 0.0
    %v2369 = vand.u32 %v118, 4294901760
    %v2370 = vsub.f32 %v118, %v2369
    %2371 = vmatpush1.msra.mxu0 %v2370
    %2372 = vmatprep.subr.mxu0 0.0
    %v2373 = vand.u32 %v119, 4294901760
    %v2374 = vsub.f32 %v119, %v2373
    %2375 = vmatpush1.msra.mxu0 %v2374
    %2376 = vmatprep.subr.mxu0 0.0
    %v2377 = vand.u32 %v120, 4294901760
    %v2378 = vsub.f32 %v120, %v2377
    %2379 = vmatpush1.msra.mxu0 %v2378
    %2380 = vmatprep.subr.mxu0 0.0
    %v2381 = vand.u32 %v121, 4294901760
    %v2382 = vsub.f32 %v121, %v2381
    %2383 = vmatpush1.msra.mxu0 %v2382
    %2384 = vmatprep.subr.mxu0 0.0
    %v2385 = vand.u32 %v122, 4294901760
    %v2386 = vsub.f32 %v122, %v2385
    %2387 = vmatpush1.msra.mxu0 %v2386
    %2388 = vmatprep.subr.mxu0 0.0
    %v2389 = vand.u32 %v123, 4294901760
    %v2390 = vsub.f32 %v123, %v2389
    %2391 = vmatpush1.msra.mxu0 %v2390
    %2392 = vmatprep.subr.mxu0 0.0
    %v2393 = vand.u32 %v124, 4294901760
    %v2394 = vsub.f32 %v124, %v2393
    %2395 = vmatpush1.msra.mxu0 %v2394
    %2396 = vmatprep.subr.mxu0 0.0
    %v2397 = vand.u32 %v125, 4294901760
    %v2398 = vsub.f32 %v125, %v2397
    %2399 = vmatpush1.msra.mxu0 %v2398
    %2400 = vmatprep.subr.mxu0 0.0
    %v2401 = vand.u32 %v126, 4294901760
    %v2402 = vsub.f32 %v126, %v2401
    %2403 = vmatpush1.msra.mxu0 %v2402
    %2404 = vmatprep.subr.mxu0 0.0
    %v2405 = vand.u32 %v127, 4294901760
    %v2406 = vsub.f32 %v127, %v2405
    %2407 = vmatpush1.msra.mxu0 %v2406
    %2408 = vmatprep.subr.mxu0 0.0
    %v2409 = vand.u32 %v128, 4294901760
    %v2410 = vsub.f32 %v128, %v2409
    %2411 = vmatpush1.msra.mxu0 %v2410
    %2412 = vmatprep.subr.mxu0 0.0
    %v2413 = vand.u32 %v129, 4294901760
    %v2414 = vsub.f32 %v129, %v2413
    %2415 = vmatpush1.msra.mxu0 %v2414
    %2416 = vmatprep.subr.mxu0 0.0
    %v2417 = vand.u32 %v130, 4294901760
    %v2418 = vsub.f32 %v130, %v2417
    %2419 = vmatpush1.msra.mxu0 %v2418
    %2420 = vmatprep.subr.mxu0 0.0
    %v2421 = vand.u32 %v131, 4294901760
    %v2422 = vsub.f32 %v131, %v2421
    %2423 = vmatpush1.msra.mxu0 %v2422
    %2424 = vmatprep.subr.mxu0 0.0
    %v2425 = vand.u32 %v132, 4294901760
    %v2426 = vsub.f32 %v132, %v2425
    %2427 = vmatpush1.msra.mxu0 %v2426
    %2428 = vmatprep.subr.mxu0 0.0
    %v2429 = vand.u32 %v133, 4294901760
    %v2430 = vsub.f32 %v133, %v2429
    %2431 = vmatpush1.msra.mxu0 %v2430
    %2432 = vmatprep.subr.mxu0 0.0
    %v2433 = vand.u32 %v134, 4294901760
    %v2434 = vsub.f32 %v134, %v2433
    %2435 = vmatpush1.msra.mxu0 %v2434
    %2436 = vmatprep.subr.mxu0 0.0
    %v2437 = vand.u32 %v135, 4294901760
    %v2438 = vsub.f32 %v135, %v2437
    %2439 = vmatpush1.msra.mxu0 %v2438
    %2440 = vmatprep.subr.mxu0 0.0
    %v2441 = vand.u32 %v136, 4294901760
    %v2442 = vsub.f32 %v136, %v2441
    %2443 = vmatpush1.msra.mxu0 %v2442
    %2444 = vmatprep.subr.mxu0 0.0
    %v2445 = vand.u32 %v137, 4294901760
    %v2446 = vsub.f32 %v137, %v2445
    %2447 = vmatpush1.msra.mxu0 %v2446
    %2448 = vmatprep.subr.mxu0 0.0
    %v2449 = vand.u32 %v138, 4294901760
    %v2450 = vsub.f32 %v138, %v2449
    %2451 = vmatpush1.msra.mxu0 %v2450
    %v2452 = vand.u32 %v229, 4294901760
    %v2453 = vsub.f32 %v229, %v2452
    %2454 = vmatprep.mubr.f32.mxu0 %v2453
    %v2455 = vand.u32 %v225, 4294901760
    %v2456 = vsub.f32 %v225, %v2455
    %2457 = vmatmul.mubr.f32.gmra.mrb[0].mxu0 %v2456
    %v2458 = vpop.f32.mrb[0].mxu0
    %v2459 = vadd.f32 %v2321, %v2458
    %v2460 = vpop.f32.mrb[0].mxu0
    %2461 = vdwg.mxu0
    %2462 = vmatprep.subr.mxu0 0.0
    %v2463 = vand.u32 %v107, 4294901760
    %2464 = vmatpush1.msra.mxu0 %v2463
    %2465 = vmatprep.subr.mxu0 0.0
    %v2466 = vand.u32 %v108, 4294901760
    %2467 = vmatpush1.msra.mxu0 %v2466
    %2468 = vmatprep.subr.mxu0 0.0
    %v2469 = vand.u32 %v109, 4294901760
    %2470 = vmatpush1.msra.mxu0 %v2469
    %2471 = vmatprep.subr.mxu0 0.0
    %v2472 = vand.u32 %v110, 4294901760
    %2473 = vmatpush1.msra.mxu0 %v2472
    %2474 = vmatprep.subr.mxu0 0.0
    %v2475 = vand.u32 %v111, 4294901760
    %2476 = vmatpush1.msra.mxu0 %v2475
    %2477 = vmatprep.subr.mxu0 0.0
    %v2478 = vand.u32 %v112, 4294901760
    %2479 = vmatpush1.msra.mxu0 %v2478
    %2480 = vmatprep.subr.mxu0 0.0
    %v2481 = vand.u32 %v113, 4294901760
    %2482 = vmatpush1.msra.mxu0 %v2481
    %2483 = vmatprep.subr.mxu0 0.0
    %v2484 = vand.u32 %v114, 4294901760
    %2485 = vmatpush1.msra.mxu0 %v2484
    %2486 = vmatprep.subr.mxu0 0.0
    %v2487 = vand.u32 %v115, 4294901760
    %2488 = vmatpush1.msra.mxu0 %v2487
    %2489 = vmatprep.subr.mxu0 0.0
    %v2490 = vand.u32 %v116, 4294901760
    %2491 = vmatpush1.msra.mxu0 %v2490
    %2492 = vmatprep.subr.mxu0 0.0
    %v2493 = vand.u32 %v117, 4294901760
    %2494 = vmatpush1.msra.mxu0 %v2493
    %2495 = vmatprep.subr.mxu0 0.0
    %v2496 = vand.u32 %v118, 4294901760
    %2497 = vmatpush1.msra.mxu0 %v2496
    %2498 = vmatprep.subr.mxu0 0.0
    %v2499 = vand.u32 %v119, 4294901760
    %2500 = vmatpush1.msra.mxu0 %v2499
    %2501 = vmatprep.subr.mxu0 0.0
    %v2502 = vand.u32 %v120, 4294901760
    %2503 = vmatpush1.msra.mxu0 %v2502
    %2504 = vmatprep.subr.mxu0 0.0
    %v2505 = vand.u32 %v121, 4294901760
    %2506 = vmatpush1.msra.mxu0 %v2505
    %2507 = vmatprep.subr.mxu0 0.0
    %v2508 = vand.u32 %v122, 4294901760
    %2509 = vmatpush1.msra.mxu0 %v2508
    %2510 = vmatprep.subr.mxu0 0.0
    %v2511 = vand.u32 %v123, 4294901760
    %2512 = vmatpush1.msra.mxu0 %v2511
    %2513 = vmatprep.subr.mxu0 0.0
    %v2514 = vand.u32 %v124, 4294901760
    %2515 = vmatpush1.msra.mxu0 %v2514
    %2516 = vmatprep.subr.mxu0 0.0
    %v2517 = vand.u32 %v125, 4294901760
    %2518 = vmatpush1.msra.mxu0 %v2517
    %2519 = vmatprep.subr.mxu0 0.0
    %v2520 = vand.u32 %v126, 4294901760
    %2521 = vmatpush1.msra.mxu0 %v2520
    %2522 = vmatprep.subr.mxu0 0.0
    %v2523 = vand.u32 %v127, 4294901760
    %2524 = vmatpush1.msra.mxu0 %v2523
    %2525 = vmatprep.subr.mxu0 0.0
    %v2526 = vand.u32 %v128, 4294901760
    %2527 = vmatpush1.msra.mxu0 %v2526
    %2528 = vmatprep.subr.mxu0 0.0
    %v2529 = vand.u32 %v129, 4294901760
    %2530 = vmatpush1.msra.mxu0 %v2529
    %2531 = vmatprep.subr.mxu0 0.0
    %v2532 = vand.u32 %v130, 4294901760
    %2533 = vmatpush1.msra.mxu0 %v2532
    %2534 = vmatprep.subr.mxu0 0.0
    %v2535 = vand.u32 %v131, 4294901760
    %2536 = vmatpush1.msra.mxu0 %v2535
    %2537 = vmatprep.subr.mxu0 0.0
    %v2538 = vand.u32 %v132, 4294901760
    %2539 = vmatpush1.msra.mxu0 %v2538
    %2540 = vmatprep.subr.mxu0 0.0
    %v2541 = vand.u32 %v133, 4294901760
    %2542 = vmatpush1.msra.mxu0 %v2541
    %2543 = vmatprep.subr.mxu0 0.0
    %v2544 = vand.u32 %v134, 4294901760
    %2545 = vmatpush1.msra.mxu0 %v2544
    %2546 = vmatprep.subr.mxu0 0.0
    %v2547 = vand.u32 %v135, 4294901760
    %2548 = vmatpush1.msra.mxu0 %v2547
    %2549 = vmatprep.subr.mxu0 0.0
    %v2550 = vand.u32 %v136, 4294901760
    %2551 = vmatpush1.msra.mxu0 %v2550
    %2552 = vmatprep.subr.mxu0 0.0
    %v2553 = vand.u32 %v137, 4294901760
    %2554 = vmatpush1.msra.mxu0 %v2553
    %2555 = vmatprep.subr.mxu0 0.0
    %v2556 = vand.u32 %v138, 4294901760
    %2557 = vmatpush1.msra.mxu0 %v2556
    %v2558 = vand.u32 %v229, 4294901760
    %v2559 = vsub.f32 %v229, %v2558
    %v2560 = vand.u32 %v2559, 4294901760
    %2561 = vmatprep.mubr.f32.mxu0 %v2560
    %v2562 = vand.u32 %v225, 4294901760
    %v2563 = vsub.f32 %v225, %v2562
    %v2564 = vand.u32 %v2563, 4294901760
    %2565 = vmatmul.mubr.f32.gmra.mrb[0].mxu0 %v2564
    %v2566 = vpop.f32.mrb[0].mxu0
    %v2567 = vadd.f32 %v2459, %v2566
    %v2568 = vpop.f32.mrb[0].mxu0
    %2569 = vdwg.mxu0
    %2570 = vmatprep.subr.mxu0 0.0
    %v2571 = vand.u32 %v107, 4294901760
    %v2572 = vsub.f32 %v107, %v2571
    %v2573 = vand.u32 %v2572, 4294901760
    %2574 = vmatpush1.msra.mxu0 %v2573
    %2575 = vmatprep.subr.mxu0 0.0
    %v2576 = vand.u32 %v108, 4294901760
    %v2577 = vsub.f32 %v108, %v2576
    %v2578 = vand.u32 %v2577, 4294901760
    %2579 = vmatpush1.msra.mxu0 %v2578
    %2580 = vmatprep.subr.mxu0 0.0
    %v2581 = vand.u32 %v109, 4294901760
    %v2582 = vsub.f32 %v109, %v2581
    %v2583 = vand.u32 %v2582, 4294901760
    %2584 = vmatpush1.msra.mxu0 %v2583
    %2585 = vmatprep.subr.mxu0 0.0
    %v2586 = vand.u32 %v110, 4294901760
    %v2587 = vsub.f32 %v110, %v2586
    %v2588 = vand.u32 %v2587, 4294901760
    %2589 = vmatpush1.msra.mxu0 %v2588
    %2590 = vmatprep.subr.mxu0 0.0
    %v2591 = vand.u32 %v111, 4294901760
    %v2592 = vsub.f32 %v111, %v2591
    %v2593 = vand.u32 %v2592, 4294901760
    %2594 = vmatpush1.msra.mxu0 %v2593
    %2595 = vmatprep.subr.mxu0 0.0
    %v2596 = vand.u32 %v112, 4294901760
    %v2597 = vsub.f32 %v112, %v2596
    %v2598 = vand.u32 %v2597, 4294901760
    %2599 = vmatpush1.msra.mxu0 %v2598
    %2600 = vmatprep.subr.mxu0 0.0
    %v2601 = vand.u32 %v113, 4294901760
    %v2602 = vsub.f32 %v113, %v2601
    %v2603 = vand.u32 %v2602, 4294901760
    %2604 = vmatpush1.msra.mxu0 %v2603
    %2605 = vmatprep.subr.mxu0 0.0
    %v2606 = vand.u32 %v114, 4294901760
    %v2607 = vsub.f32 %v114, %v2606
    %v2608 = vand.u32 %v2607, 4294901760
    %2609 = vmatpush1.msra.mxu0 %v2608
    %2610 = vmatprep.subr.mxu0 0.0
    %v2611 = vand.u32 %v115, 4294901760
    %v2612 = vsub.f32 %v115, %v2611
    %v2613 = vand.u32 %v2612, 4294901760
    %2614 = vmatpush1.msra.mxu0 %v2613
    %2615 = vmatprep.subr.mxu0 0.0
    %v2616 = vand.u32 %v116, 4294901760
    %v2617 = vsub.f32 %v116, %v2616
    %v2618 = vand.u32 %v2617, 4294901760
    %2619 = vmatpush1.msra.mxu0 %v2618
    %2620 = vmatprep.subr.mxu0 0.0
    %v2621 = vand.u32 %v117, 4294901760
    %v2622 = vsub.f32 %v117, %v2621
    %v2623 = vand.u32 %v2622, 4294901760
    %2624 = vmatpush1.msra.mxu0 %v2623
    %2625 = vmatprep.subr.mxu0 0.0
    %v2626 = vand.u32 %v118, 4294901760
    %v2627 = vsub.f32 %v118, %v2626
    %v2628 = vand.u32 %v2627, 4294901760
    %2629 = vmatpush1.msra.mxu0 %v2628
    %2630 = vmatprep.subr.mxu0 0.0
    %v2631 = vand.u32 %v119, 4294901760
    %v2632 = vsub.f32 %v119, %v2631
    %v2633 = vand.u32 %v2632, 4294901760
    %2634 = vmatpush1.msra.mxu0 %v2633
    %2635 = vmatprep.subr.mxu0 0.0
    %v2636 = vand.u32 %v120, 4294901760
    %v2637 = vsub.f32 %v120, %v2636
    %v2638 = vand.u32 %v2637, 4294901760
    %2639 = vmatpush1.msra.mxu0 %v2638
    %2640 = vmatprep.subr.mxu0 0.0
    %v2641 = vand.u32 %v121, 4294901760
    %v2642 = vsub.f32 %v121, %v2641
    %v2643 = vand.u32 %v2642, 4294901760
    %2644 = vmatpush1.msra.mxu0 %v2643
    %2645 = vmatprep.subr.mxu0 0.0
    %v2646 = vand.u32 %v122, 4294901760
    %v2647 = vsub.f32 %v122, %v2646
    %v2648 = vand.u32 %v2647, 4294901760
    %2649 = vmatpush1.msra.mxu0 %v2648
    %2650 = vmatprep.subr.mxu0 0.0
    %v2651 = vand.u32 %v123, 4294901760
    %v2652 = vsub.f32 %v123, %v2651
    %v2653 = vand.u32 %v2652, 4294901760
    %2654 = vmatpush1.msra.mxu0 %v2653
    %2655 = vmatprep.subr.mxu0 0.0
    %v2656 = vand.u32 %v124, 4294901760
    %v2657 = vsub.f32 %v124, %v2656
    %v2658 = vand.u32 %v2657, 4294901760
    %2659 = vmatpush1.msra.mxu0 %v2658
    %2660 = vmatprep.subr.mxu0 0.0
    %v2661 = vand.u32 %v125, 4294901760
    %v2662 = vsub.f32 %v125, %v2661
    %v2663 = vand.u32 %v2662, 4294901760
    %2664 = vmatpush1.msra.mxu0 %v2663
    %2665 = vmatprep.subr.mxu0 0.0
    %v2666 = vand.u32 %v126, 4294901760
    %v2667 = vsub.f32 %v126, %v2666
    %v2668 = vand.u32 %v2667, 4294901760
    %2669 = vmatpush1.msra.mxu0 %v2668
    %2670 = vmatprep.subr.mxu0 0.0
    %v2671 = vand.u32 %v127, 4294901760
    %v2672 = vsub.f32 %v127, %v2671
    %v2673 = vand.u32 %v2672, 4294901760
    %2674 = vmatpush1.msra.mxu0 %v2673
    %2675 = vmatprep.subr.mxu0 0.0
    %v2676 = vand.u32 %v128, 4294901760
    %v2677 = vsub.f32 %v128, %v2676
    %v2678 = vand.u32 %v2677, 4294901760
    %2679 = vmatpush1.msra.mxu0 %v2678
    %2680 = vmatprep.subr.mxu0 0.0
    %v2681 = vand.u32 %v129, 4294901760
    %v2682 = vsub.f32 %v129, %v2681
    %v2683 = vand.u32 %v2682, 4294901760
    %2684 = vmatpush1.msra.mxu0 %v2683
    %2685 = vmatprep.subr.mxu0 0.0
    %v2686 = vand.u32 %v130, 4294901760
    %v2687 = vsub.f32 %v130, %v2686
    %v2688 = vand.u32 %v2687, 4294901760
    %2689 = vmatpush1.msra.mxu0 %v2688
    %2690 = vmatprep.subr.mxu0 0.0
    %v2691 = vand.u32 %v131, 4294901760
    %v2692 = vsub.f32 %v131, %v2691
    %v2693 = vand.u32 %v2692, 4294901760
    %2694 = vmatpush1.msra.mxu0 %v2693
    %2695 = vmatprep.subr.mxu0 0.0
    %v2696 = vand.u32 %v132, 4294901760
    %v2697 = vsub.f32 %v132, %v2696
    %v2698 = vand.u32 %v2697, 4294901760
    %2699 = vmatpush1.msra.mxu0 %v2698
    %2700 = vmatprep.subr.mxu0 0.0
    %v2701 = vand.u32 %v133, 4294901760
    %v2702 = vsub.f32 %v133, %v2701
    %v2703 = vand.u32 %v2702, 4294901760
    %2704 = vmatpush1.msra.mxu0 %v2703
    %2705 = vmatprep.subr.mxu0 0.0
    %v2706 = vand.u32 %v134, 4294901760
    %v2707 = vsub.f32 %v134, %v2706
    %v2708 = vand.u32 %v2707, 4294901760
    %2709 = vmatpush1.msra.mxu0 %v2708
    %2710 = vmatprep.subr.mxu0 0.0
    %v2711 = vand.u32 %v135, 4294901760
    %v2712 = vsub.f32 %v135, %v2711
    %v2713 = vand.u32 %v2712, 4294901760
    %2714 = vmatpush1.msra.mxu0 %v2713
    %2715 = vmatprep.subr.mxu0 0.0
    %v2716 = vand.u32 %v136, 4294901760
    %v2717 = vsub.f32 %v136, %v2716
    %v2718 = vand.u32 %v2717, 4294901760
    %2719 = vmatpush1.msra.mxu0 %v2718
    %2720 = vmatprep.subr.mxu0 0.0
    %v2721 = vand.u32 %v137, 4294901760
    %v2722 = vsub.f32 %v137, %v2721
    %v2723 = vand.u32 %v2722, 4294901760
    %2724 = vmatpush1.msra.mxu0 %v2723
    %2725 = vmatprep.subr.mxu0 0.0
    %v2726 = vand.u32 %v138, 4294901760
    %v2727 = vsub.f32 %v138, %v2726
    %v2728 = vand.u32 %v2727, 4294901760
    %2729 = vmatpush1.msra.mxu0 %v2728
    %v2730 = vand.u32 %v229, 4294901760
    %2731 = vmatprep.mubr.f32.mxu0 %v2730
    %v2732 = vand.u32 %v225, 4294901760
    %2733 = vmatmul.mubr.f32.gmra.mrb[0].mxu0 %v2732
    %v2734 = vpop.f32.mrb[0].mxu0
    %v2735 = vadd.f32 %v2567, %v2734
    %v2736 = vpop.f32.mrb[0].mxu0
    %2737 = vdwg.mxu0
    %2738 = vmatprep.subr.mxu0 0.0
    %v2739 = vand.u32 %v107, 4294901760
    %2740 = vmatpush1.msra.mxu0 %v2739
    %2741 = vmatprep.subr.mxu0 0.0
    %v2742 = vand.u32 %v108, 4294901760
    %2743 = vmatpush1.msra.mxu0 %v2742
    %2744 = vmatprep.subr.mxu0 0.0
    %v2745 = vand.u32 %v109, 4294901760
    %2746 = vmatpush1.msra.mxu0 %v2745
    %2747 = vmatprep.subr.mxu0 0.0
    %v2748 = vand.u32 %v110, 4294901760
    %2749 = vmatpush1.msra.mxu0 %v2748
    %2750 = vmatprep.subr.mxu0 0.0
    %v2751 = vand.u32 %v111, 4294901760
    %2752 = vmatpush1.msra.mxu0 %v2751
    %2753 = vmatprep.subr.mxu0 0.0
    %v2754 = vand.u32 %v112, 4294901760
    %2755 = vmatpush1.msra.mxu0 %v2754
    %2756 = vmatprep.subr.mxu0 0.0
    %v2757 = vand.u32 %v113, 4294901760
    %2758 = vmatpush1.msra.mxu0 %v2757
    %2759 = vmatprep.subr.mxu0 0.0
    %v2760 = vand.u32 %v114, 4294901760
    %2761 = vmatpush1.msra.mxu0 %v2760
    %2762 = vmatprep.subr.mxu0 0.0
    %v2763 = vand.u32 %v115, 4294901760
    %2764 = vmatpush1.msra.mxu0 %v2763
    %2765 = vmatprep.subr.mxu0 0.0
    %v2766 = vand.u32 %v116, 4294901760
    %2767 = vmatpush1.msra.mxu0 %v2766
    %2768 = vmatprep.subr.mxu0 0.0
    %v2769 = vand.u32 %v117, 4294901760
    %2770 = vmatpush1.msra.mxu0 %v2769
    %2771 = vmatprep.subr.mxu0 0.0
    %v2772 = vand.u32 %v118, 4294901760
    %2773 = vmatpush1.msra.mxu0 %v2772
    %2774 = vmatprep.subr.mxu0 0.0
    %v2775 = vand.u32 %v119, 4294901760
    %2776 = vmatpush1.msra.mxu0 %v2775
    %2777 = vmatprep.subr.mxu0 0.0
    %v2778 = vand.u32 %v120, 4294901760
    %2779 = vmatpush1.msra.mxu0 %v2778
    %2780 = vmatprep.subr.mxu0 0.0
    %v2781 = vand.u32 %v121, 4294901760
    %2782 = vmatpush1.msra.mxu0 %v2781
    %2783 = vmatprep.subr.mxu0 0.0
    %v2784 = vand.u32 %v122, 4294901760
    %2785 = vmatpush1.msra.mxu0 %v2784
    %2786 = vmatprep.subr.mxu0 0.0
    %v2787 = vand.u32 %v123, 4294901760
    %2788 = vmatpush1.msra.mxu0 %v2787
    %2789 = vmatprep.subr.mxu0 0.0
    %v2790 = vand.u32 %v124, 4294901760
    %2791 = vmatpush1.msra.mxu0 %v2790
    %2792 = vmatprep.subr.mxu0 0.0
    %v2793 = vand.u32 %v125, 4294901760
    %2794 = vmatpush1.msra.mxu0 %v2793
    %2795 = vmatprep.subr.mxu0 0.0
    %v2796 = vand.u32 %v126, 4294901760
    %2797 = vmatpush1.msra.mxu0 %v2796
    %2798 = vmatprep.subr.mxu0 0.0
    %v2799 = vand.u32 %v127, 4294901760
    %2800 = vmatpush1.msra.mxu0 %v2799
    %2801 = vmatprep.subr.mxu0 0.0
    %v2802 = vand.u32 %v128, 4294901760
    %2803 = vmatpush1.msra.mxu0 %v2802
    %2804 = vmatprep.subr.mxu0 0.0
    %v2805 = vand.u32 %v129, 4294901760
    %2806 = vmatpush1.msra.mxu0 %v2805
    %2807 = vmatprep.subr.mxu0 0.0
    %v2808 = vand.u32 %v130, 4294901760
    %2809 = vmatpush1.msra.mxu0 %v2808
    %2810 = vmatprep.subr.mxu0 0.0
    %v2811 = vand.u32 %v131, 4294901760
    %2812 = vmatpush1.msra.mxu0 %v2811
    %2813 = vmatprep.subr.mxu0 0.0
    %v2814 = vand.u32 %v132, 4294901760
    %2815 = vmatpush1.msra.mxu0 %v2814
    %2816 = vmatprep.subr.mxu0 0.0
    %v2817 = vand.u32 %v133, 4294901760
    %2818 = vmatpush1.msra.mxu0 %v2817
    %2819 = vmatprep.subr.mxu0 0.0
    %v2820 = vand.u32 %v134, 4294901760
    %2821 = vmatpush1.msra.mxu0 %v2820
    %2822 = vmatprep.subr.mxu0 0.0
    %v2823 = vand.u32 %v135, 4294901760
    %2824 = vmatpush1.msra.mxu0 %v2823
    %2825 = vmatprep.subr.mxu0 0.0
    %v2826 = vand.u32 %v136, 4294901760
    %2827 = vmatpush1.msra.mxu0 %v2826
    %2828 = vmatprep.subr.mxu0 0.0
    %v2829 = vand.u32 %v137, 4294901760
    %2830 = vmatpush1.msra.mxu0 %v2829
    %2831 = vmatprep.subr.mxu0 0.0
    %v2832 = vand.u32 %v138, 4294901760
    %2833 = vmatpush1.msra.mxu0 %v2832
    %v2834 = vand.u32 %v229, 4294901760
    %2835 = vmatprep.mubr.f32.mxu0 %v2834
    %v2836 = vand.u32 %v225, 4294901760
    %2837 = vmatmul.mubr.f32.gmra.mrb[0].mxu0 %v2836
    %v2838 = vpop.f32.mrb[0].mxu0
    %v2839 = vadd.f32 %v2735, %v2838
    %v2840 = vpop.f32.mrb[0].mxu0
    %2841 = vdwg.mxu0
    %2842 = vmatprep.subr.mxu0 0.0
    %v2843 = vand.u32 %v139, 4294901760
    %2844 = vmatpush1.msra.mxu0 %v2843
    %2845 = vmatprep.subr.mxu0 0.0
    %v2846 = vand.u32 %v140, 4294901760
    %2847 = vmatpush1.msra.mxu0 %v2846
    %2848 = vmatprep.subr.mxu0 0.0
    %v2849 = vand.u32 %v141, 4294901760
    %2850 = vmatpush1.msra.mxu0 %v2849
    %2851 = vmatprep.subr.mxu0 0.0
    %v2852 = vand.u32 %v142, 4294901760
    %2853 = vmatpush1.msra.mxu0 %v2852
    %2854 = vmatprep.subr.mxu0 0.0
    %v2855 = vand.u32 %v143, 4294901760
    %2856 = vmatpush1.msra.mxu0 %v2855
    %2857 = vmatprep.subr.mxu0 0.0
    %v2858 = vand.u32 %v144, 4294901760
    %2859 = vmatpush1.msra.mxu0 %v2858
    %2860 = vmatprep.subr.mxu0 0.0
    %v2861 = vand.u32 %v145, 4294901760
    %2862 = vmatpush1.msra.mxu0 %v2861
    %2863 = vmatprep.subr.mxu0 0.0
    %v2864 = vand.u32 %v146, 4294901760
    %2865 = vmatpush1.msra.mxu0 %v2864
    %2866 = vmatprep.subr.mxu0 0.0
    %v2867 = vand.u32 %v147, 4294901760
    %2868 = vmatpush1.msra.mxu0 %v2867
    %2869 = vmatprep.subr.mxu0 0.0
    %v2870 = vand.u32 %v148, 4294901760
    %2871 = vmatpush1.msra.mxu0 %v2870
    %2872 = vmatprep.subr.mxu0 0.0
    %v2873 = vand.u32 %v149, 4294901760
    %2874 = vmatpush1.msra.mxu0 %v2873
    %2875 = vmatprep.subr.mxu0 0.0
    %v2876 = vand.u32 %v150, 4294901760
    %2877 = vmatpush1.msra.mxu0 %v2876
    %2878 = vmatprep.subr.mxu0 0.0
    %v2879 = vand.u32 %v151, 4294901760
    %2880 = vmatpush1.msra.mxu0 %v2879
    %2881 = vmatprep.subr.mxu0 0.0
    %v2882 = vand.u32 %v152, 4294901760
    %2883 = vmatpush1.msra.mxu0 %v2882
    %2884 = vmatprep.subr.mxu0 0.0
    %v2885 = vand.u32 %v153, 4294901760
    %2886 = vmatpush1.msra.mxu0 %v2885
    %2887 = vmatprep.subr.mxu0 0.0
    %v2888 = vand.u32 %v154, 4294901760
    %2889 = vmatpush1.msra.mxu0 %v2888
    %2890 = vmatprep.subr.mxu0 0.0
    %v2891 = vand.u32 %v155, 4294901760
    %2892 = vmatpush1.msra.mxu0 %v2891
    %2893 = vmatprep.subr.mxu0 0.0
    %v2894 = vand.u32 %v156, 4294901760
    %2895 = vmatpush1.msra.mxu0 %v2894
    %2896 = vmatprep.subr.mxu0 0.0
    %v2897 = vand.u32 %v157, 4294901760
    %2898 = vmatpush1.msra.mxu0 %v2897
    %2899 = vmatprep.subr.mxu0 0.0
    %v2900 = vand.u32 %v158, 4294901760
    %2901 = vmatpush1.msra.mxu0 %v2900
    %2902 = vmatprep.subr.mxu0 0.0
    %v2903 = vand.u32 %v159, 4294901760
    %2904 = vmatpush1.msra.mxu0 %v2903
    %2905 = vmatprep.subr.mxu0 0.0
    %v2906 = vand.u32 %v160, 4294901760
    %2907 = vmatpush1.msra.mxu0 %v2906
    %2908 = vmatprep.subr.mxu0 0.0
    %v2909 = vand.u32 %v161, 4294901760
    %2910 = vmatpush1.msra.mxu0 %v2909
    %2911 = vmatprep.subr.mxu0 0.0
    %v2912 = vand.u32 %v162, 4294901760
    %2913 = vmatpush1.msra.mxu0 %v2912
    %2914 = vmatprep.subr.mxu0 0.0
    %v2915 = vand.u32 %v163, 4294901760
    %2916 = vmatpush1.msra.mxu0 %v2915
    %2917 = vmatprep.subr.mxu0 0.0
    %v2918 = vand.u32 %v164, 4294901760
    %2919 = vmatpush1.msra.mxu0 %v2918
    %2920 = vmatprep.subr.mxu0 0.0
    %v2921 = vand.u32 %v165, 4294901760
    %2922 = vmatpush1.msra.mxu0 %v2921
    %2923 = vmatprep.subr.mxu0 0.0
    %v2924 = vand.u32 %v166, 4294901760
    %2925 = vmatpush1.msra.mxu0 %v2924
    %2926 = vmatprep.subr.mxu0 0.0
    %v2927 = vand.u32 %v167, 4294901760
    %2928 = vmatpush1.msra.mxu0 %v2927
    %2929 = vmatprep.subr.mxu0 0.0
    %v2930 = vand.u32 %v168, 4294901760
    %2931 = vmatpush1.msra.mxu0 %v2930
    %2932 = vmatprep.subr.mxu0 0.0
    %v2933 = vand.u32 %v169, 4294901760
    %2934 = vmatpush1.msra.mxu0 %v2933
    %2935 = vmatprep.subr.mxu0 0.0
    %v2936 = vand.u32 %v170, 4294901760
    %2937 = vmatpush1.msra.mxu0 %v2936
    %v2938 = vand.u32 %v237, 4294901760
    %v2939 = vsub.f32 %v237, %v2938
    %v2940 = vand.u32 %v2939, 4294901760
    %v2941 = vsub.f32 %v2939, %v2940
    %v2942 = vand.u32 %v2941, 4294901760
    %2943 = vmatprep.mubr.f32.mxu0 %v2942
    %v2944 = vand.u32 %v233, 4294901760
    %v2945 = vsub.f32 %v233, %v2944
    %v2946 = vand.u32 %v2945, 4294901760
    %v2947 = vsub.f32 %v2945, %v2946
    %v2948 = vand.u32 %v2947, 4294901760
    %2949 = vmatmul.mubr.f32.gmra.mrb[0].mxu0 %v2948
    %v2950 = vpop.f32.mrb[0].mxu0
    %v2951 = vadd.f32 %v2839, %v2950
    %v2952 = vpop.f32.mrb[0].mxu0
    %2953 = vdwg.mxu0
    %2954 = vmatprep.subr.mxu0 0.0
    %v2955 = vand.u32 %v139, 4294901760
    %v2956 = vsub.f32 %v139, %v2955
    %v2957 = vand.u32 %v2956, 4294901760
    %v2958 = vsub.f32 %v2956, %v2957
    %v2959 = vand.u32 %v2958, 4294901760
    %2960 = vmatpush1.msra.mxu0 %v2959
    %2961 = vmatprep.subr.mxu0 0.0
    %v2962 = vand.u32 %v140, 4294901760
    %v2963 = vsub.f32 %v140, %v2962
    %v2964 = vand.u32 %v2963, 4294901760
    %v2965 = vsub.f32 %v2963, %v2964
    %v2966 = vand.u32 %v2965, 4294901760
    %2967 = vmatpush1.msra.mxu0 %v2966
    %2968 = vmatprep.subr.mxu0 0.0
    %v2969 = vand.u32 %v141, 4294901760
    %v2970 = vsub.f32 %v141, %v2969
    %v2971 = vand.u32 %v2970, 4294901760
    %v2972 = vsub.f32 %v2970, %v2971
    %v2973 = vand.u32 %v2972, 4294901760
    %2974 = vmatpush1.msra.mxu0 %v2973
    %2975 = vmatprep.subr.mxu0 0.0
    %v2976 = vand.u32 %v142, 4294901760
    %v2977 = vsub.f32 %v142, %v2976
    %v2978 = vand.u32 %v2977, 4294901760
    %v2979 = vsub.f32 %v2977, %v2978
    %v2980 = vand.u32 %v2979, 4294901760
    %2981 = vmatpush1.msra.mxu0 %v2980
    %2982 = vmatprep.subr.mxu0 0.0
    %v2983 = vand.u32 %v143, 4294901760
    %v2984 = vsub.f32 %v143, %v2983
    %v2985 = vand.u32 %v2984, 4294901760
    %v2986 = vsub.f32 %v2984, %v2985
    %v2987 = vand.u32 %v2986, 4294901760
    %2988 = vmatpush1.msra.mxu0 %v2987
    %2989 = vmatprep.subr.mxu0 0.0
    %v2990 = vand.u32 %v144, 4294901760
    %v2991 = vsub.f32 %v144, %v2990
    %v2992 = vand.u32 %v2991, 4294901760
    %v2993 = vsub.f32 %v2991, %v2992
    %v2994 = vand.u32 %v2993, 4294901760
    %2995 = vmatpush1.msra.mxu0 %v2994
    %2996 = vmatprep.subr.mxu0 0.0
    %v2997 = vand.u32 %v145, 4294901760
    %v2998 = vsub.f32 %v145, %v2997
    %v2999 = vand.u32 %v2998, 4294901760
    %v3000 = vsub.f32 %v2998, %v2999
    %v3001 = vand.u32 %v3000, 4294901760
    %3002 = vmatpush1.msra.mxu0 %v3001
    %3003 = vmatprep.subr.mxu0 0.0
    %v3004 = vand.u32 %v146, 4294901760
    %v3005 = vsub.f32 %v146, %v3004
    %v3006 = vand.u32 %v3005, 4294901760
    %v3007 = vsub.f32 %v3005, %v3006
    %v3008 = vand.u32 %v3007, 4294901760
    %3009 = vmatpush1.msra.mxu0 %v3008
    %3010 = vmatprep.subr.mxu0 0.0
    %v3011 = vand.u32 %v147, 4294901760
    %v3012 = vsub.f32 %v147, %v3011
    %v3013 = vand.u32 %v3012, 4294901760
    %v3014 = vsub.f32 %v3012, %v3013
    %v3015 = vand.u32 %v3014, 4294901760
    %3016 = vmatpush1.msra.mxu0 %v3015
    %3017 = vmatprep.subr.mxu0 0.0
    %v3018 = vand.u32 %v148, 4294901760
    %v3019 = vsub.f32 %v148, %v3018
    %v3020 = vand.u32 %v3019, 4294901760
    %v3021 = vsub.f32 %v3019, %v3020
    %v3022 = vand.u32 %v3021, 4294901760
    %3023 = vmatpush1.msra.mxu0 %v3022
    %3024 = vmatprep.subr.mxu0 0.0
    %v3025 = vand.u32 %v149, 4294901760
    %v3026 = vsub.f32 %v149, %v3025
    %v3027 = vand.u32 %v3026, 4294901760
    %v3028 = vsub.f32 %v3026, %v3027
    %v3029 = vand.u32 %v3028, 4294901760
    %3030 = vmatpush1.msra.mxu0 %v3029
    %3031 = vmatprep.subr.mxu0 0.0
    %v3032 = vand.u32 %v150, 4294901760
    %v3033 = vsub.f32 %v150, %v3032
    %v3034 = vand.u32 %v3033, 4294901760
    %v3035 = vsub.f32 %v3033, %v3034
    %v3036 = vand.u32 %v3035, 4294901760
    %3037 = vmatpush1.msra.mxu0 %v3036
    %3038 = vmatprep.subr.mxu0 0.0
    %v3039 = vand.u32 %v151, 4294901760
    %v3040 = vsub.f32 %v151, %v3039
    %v3041 = vand.u32 %v3040, 4294901760
    %v3042 = vsub.f32 %v3040, %v3041
    %v3043 = vand.u32 %v3042, 4294901760
    %3044 = vmatpush1.msra.mxu0 %v3043
    %3045 = vmatprep.subr.mxu0 0.0
    %v3046 = vand.u32 %v152, 4294901760
    %v3047 = vsub.f32 %v152, %v3046
    %v3048 = vand.u32 %v3047, 4294901760
    %v3049 = vsub.f32 %v3047, %v3048
    %v3050 = vand.u32 %v3049, 4294901760
    %3051 = vmatpush1.msra.mxu0 %v3050
    %3052 = vmatprep.subr.mxu0 0.0
    %v3053 = vand.u32 %v153, 4294901760
    %v3054 = vsub.f32 %v153, %v3053
    %v3055 = vand.u32 %v3054, 4294901760
    %v3056 = vsub.f32 %v3054, %v3055
    %v3057 = vand.u32 %v3056, 4294901760
    %3058 = vmatpush1.msra.mxu0 %v3057
    %3059 = vmatprep.subr.mxu0 0.0
    %v3060 = vand.u32 %v154, 4294901760
    %v3061 = vsub.f32 %v154, %v3060
    %v3062 = vand.u32 %v3061, 4294901760
    %v3063 = vsub.f32 %v3061, %v3062
    %v3064 = vand.u32 %v3063, 4294901760
    %3065 = vmatpush1.msra.mxu0 %v3064
    %3066 = vmatprep.subr.mxu0 0.0
    %v3067 = vand.u32 %v155, 4294901760
    %v3068 = vsub.f32 %v155, %v3067
    %v3069 = vand.u32 %v3068, 4294901760
    %v3070 = vsub.f32 %v3068, %v3069
    %v3071 = vand.u32 %v3070, 4294901760
    %3072 = vmatpush1.msra.mxu0 %v3071
    %3073 = vmatprep.subr.mxu0 0.0
    %v3074 = vand.u32 %v156, 4294901760
    %v3075 = vsub.f32 %v156, %v3074
    %v3076 = vand.u32 %v3075, 4294901760
    %v3077 = vsub.f32 %v3075, %v3076
    %v3078 = vand.u32 %v3077, 4294901760
    %3079 = vmatpush1.msra.mxu0 %v3078
    %3080 = vmatprep.subr.mxu0 0.0
    %v3081 = vand.u32 %v157, 4294901760
    %v3082 = vsub.f32 %v157, %v3081
    %v3083 = vand.u32 %v3082, 4294901760
    %v3084 = vsub.f32 %v3082, %v3083
    %v3085 = vand.u32 %v3084, 4294901760
    %3086 = vmatpush1.msra.mxu0 %v3085
    %3087 = vmatprep.subr.mxu0 0.0
    %v3088 = vand.u32 %v158, 4294901760
    %v3089 = vsub.f32 %v158, %v3088
    %v3090 = vand.u32 %v3089, 4294901760
    %v3091 = vsub.f32 %v3089, %v3090
    %v3092 = vand.u32 %v3091, 4294901760
    %3093 = vmatpush1.msra.mxu0 %v3092
    %3094 = vmatprep.subr.mxu0 0.0
    %v3095 = vand.u32 %v159, 4294901760
    %v3096 = vsub.f32 %v159, %v3095
    %v3097 = vand.u32 %v3096, 4294901760
    %v3098 = vsub.f32 %v3096, %v3097
    %v3099 = vand.u32 %v3098, 4294901760
    %3100 = vmatpush1.msra.mxu0 %v3099
    %3101 = vmatprep.subr.mxu0 0.0
    %v3102 = vand.u32 %v160, 4294901760
    %v3103 = vsub.f32 %v160, %v3102
    %v3104 = vand.u32 %v3103, 4294901760
    %v3105 = vsub.f32 %v3103, %v3104
    %v3106 = vand.u32 %v3105, 4294901760
    %3107 = vmatpush1.msra.mxu0 %v3106
    %3108 = vmatprep.subr.mxu0 0.0
    %v3109 = vand.u32 %v161, 4294901760
    %v3110 = vsub.f32 %v161, %v3109
    %v3111 = vand.u32 %v3110, 4294901760
    %v3112 = vsub.f32 %v3110, %v3111
    %v3113 = vand.u32 %v3112, 4294901760
    %3114 = vmatpush1.msra.mxu0 %v3113
    %3115 = vmatprep.subr.mxu0 0.0
    %v3116 = vand.u32 %v162, 4294901760
    %v3117 = vsub.f32 %v162, %v3116
    %v3118 = vand.u32 %v3117, 4294901760
    %v3119 = vsub.f32 %v3117, %v3118
    %v3120 = vand.u32 %v3119, 4294901760
    %3121 = vmatpush1.msra.mxu0 %v3120
    %3122 = vmatprep.subr.mxu0 0.0
    %v3123 = vand.u32 %v163, 4294901760
    %v3124 = vsub.f32 %v163, %v3123
    %v3125 = vand.u32 %v3124, 4294901760
    %v3126 = vsub.f32 %v3124, %v3125
    %v3127 = vand.u32 %v3126, 4294901760
    %3128 = vmatpush1.msra.mxu0 %v3127
    %3129 = vmatprep.subr.mxu0 0.0
    %v3130 = vand.u32 %v164, 4294901760
    %v3131 = vsub.f32 %v164, %v3130
    %v3132 = vand.u32 %v3131, 4294901760
    %v3133 = vsub.f32 %v3131, %v3132
    %v3134 = vand.u32 %v3133, 4294901760
    %3135 = vmatpush1.msra.mxu0 %v3134
    %3136 = vmatprep.subr.mxu0 0.0
    %v3137 = vand.u32 %v165, 4294901760
    %v3138 = vsub.f32 %v165, %v3137
    %v3139 = vand.u32 %v3138, 4294901760
    %v3140 = vsub.f32 %v3138, %v3139
    %v3141 = vand.u32 %v3140, 4294901760
    %3142 = vmatpush1.msra.mxu0 %v3141
    %3143 = vmatprep.subr.mxu0 0.0
    %v3144 = vand.u32 %v166, 4294901760
    %v3145 = vsub.f32 %v166, %v3144
    %v3146 = vand.u32 %v3145, 4294901760
    %v3147 = vsub.f32 %v3145, %v3146
    %v3148 = vand.u32 %v3147, 4294901760
    %3149 = vmatpush1.msra.mxu0 %v3148
    %3150 = vmatprep.subr.mxu0 0.0
    %v3151 = vand.u32 %v167, 4294901760
    %v3152 = vsub.f32 %v167, %v3151
    %v3153 = vand.u32 %v3152, 4294901760
    %v3154 = vsub.f32 %v3152, %v3153
    %v3155 = vand.u32 %v3154, 4294901760
    %3156 = vmatpush1.msra.mxu0 %v3155
    %3157 = vmatprep.subr.mxu0 0.0
    %v3158 = vand.u32 %v168, 4294901760
    %v3159 = vsub.f32 %v168, %v3158
    %v3160 = vand.u32 %v3159, 4294901760
    %v3161 = vsub.f32 %v3159, %v3160
    %v3162 = vand.u32 %v3161, 4294901760
    %3163 = vmatpush1.msra.mxu0 %v3162
    %3164 = vmatprep.subr.mxu0 0.0
    %v3165 = vand.u32 %v169, 4294901760
    %v3166 = vsub.f32 %v169, %v3165
    %v3167 = vand.u32 %v3166, 4294901760
    %v3168 = vsub.f32 %v3166, %v3167
    %v3169 = vand.u32 %v3168, 4294901760
    %3170 = vmatpush1.msra.mxu0 %v3169
    %3171 = vmatprep.subr.mxu0 0.0
    %v3172 = vand.u32 %v170, 4294901760
    %v3173 = vsub.f32 %v170, %v3172
    %v3174 = vand.u32 %v3173, 4294901760
    %v3175 = vsub.f32 %v3173, %v3174
    %v3176 = vand.u32 %v3175, 4294901760
    %3177 = vmatpush1.msra.mxu0 %v3176
    %v3178 = vand.u32 %v237, 4294901760
    %3179 = vmatprep.mubr.f32.mxu0 %v3178
    %v3180 = vand.u32 %v233, 4294901760
    %3181 = vmatmul.mubr.f32.gmra.mrb[0].mxu0 %v3180
    %v3182 = vpop.f32.mrb[0].mxu0
    %v3183 = vadd.f32 %v2951, %v3182
    %v3184 = vpop.f32.mrb[0].mxu0
    %3185 = vdwg.mxu0
    %3186 = vmatprep.subr.mxu0 0.0
    %v3187 = vand.u32 %v139, 4294901760
    %v3188 = vsub.f32 %v139, %v3187
    %3189 = vmatpush1.msra.mxu0 %v3188
    %3190 = vmatprep.subr.mxu0 0.0
    %v3191 = vand.u32 %v140, 4294901760
    %v3192 = vsub.f32 %v140, %v3191
    %3193 = vmatpush1.msra.mxu0 %v3192
    %3194 = vmatprep.subr.mxu0 0.0
    %v3195 = vand.u32 %v141, 4294901760
    %v3196 = vsub.f32 %v141, %v3195
    %3197 = vmatpush1.msra.mxu0 %v3196
    %3198 = vmatprep.subr.mxu0 0.0
    %v3199 = vand.u32 %v142, 4294901760
    %v3200 = vsub.f32 %v142, %v3199
    %3201 = vmatpush1.msra.mxu0 %v3200
    %3202 = vmatprep.subr.mxu0 0.0
    %v3203 = vand.u32 %v143, 4294901760
    %v3204 = vsub.f32 %v143, %v3203
    %3205 = vmatpush1.msra.mxu0 %v3204
    %3206 = vmatprep.subr.mxu0 0.0
    %v3207 = vand.u32 %v144, 4294901760
    %v3208 = vsub.f32 %v144, %v3207
    %3209 = vmatpush1.msra.mxu0 %v3208
    %3210 = vmatprep.subr.mxu0 0.0
    %v3211 = vand.u32 %v145, 4294901760
    %v3212 = vsub.f32 %v145, %v3211
    %3213 = vmatpush1.msra.mxu0 %v3212
    %3214 = vmatprep.subr.mxu0 0.0
    %v3215 = vand.u32 %v146, 4294901760
    %v3216 = vsub.f32 %v146, %v3215
    %3217 = vmatpush1.msra.mxu0 %v3216
    %3218 = vmatprep.subr.mxu0 0.0
    %v3219 = vand.u32 %v147, 4294901760
    %v3220 = vsub.f32 %v147, %v3219
    %3221 = vmatpush1.msra.mxu0 %v3220
    %3222 = vmatprep.subr.mxu0 0.0
    %v3223 = vand.u32 %v148, 4294901760
    %v3224 = vsub.f32 %v148, %v3223
    %3225 = vmatpush1.msra.mxu0 %v3224
    %3226 = vmatprep.subr.mxu0 0.0
    %v3227 = vand.u32 %v149, 4294901760
    %v3228 = vsub.f32 %v149, %v3227
    %3229 = vmatpush1.msra.mxu0 %v3228
    %3230 = vmatprep.subr.mxu0 0.0
    %v3231 = vand.u32 %v150, 4294901760
    %v3232 = vsub.f32 %v150, %v3231
    %3233 = vmatpush1.msra.mxu0 %v3232
    %3234 = vmatprep.subr.mxu0 0.0
    %v3235 = vand.u32 %v151, 4294901760
    %v3236 = vsub.f32 %v151, %v3235
    %3237 = vmatpush1.msra.mxu0 %v3236
    %3238 = vmatprep.subr.mxu0 0.0
    %v3239 = vand.u32 %v152, 4294901760
    %v3240 = vsub.f32 %v152, %v3239
    %3241 = vmatpush1.msra.mxu0 %v3240
    %3242 = vmatprep.subr.mxu0 0.0
    %v3243 = vand.u32 %v153, 4294901760
    %v3244 = vsub.f32 %v153, %v3243
    %3245 = vmatpush1.msra.mxu0 %v3244
    %3246 = vmatprep.subr.mxu0 0.0
    %v3247 = vand.u32 %v154, 4294901760
    %v3248 = vsub.f32 %v154, %v3247
    %3249 = vmatpush1.msra.mxu0 %v3248
    %3250 = vmatprep.subr.mxu0 0.0
    %v3251 = vand.u32 %v155, 4294901760
    %v3252 = vsub.f32 %v155, %v3251
    %3253 = vmatpush1.msra.mxu0 %v3252
    %3254 = vmatprep.subr.mxu0 0.0
    %v3255 = vand.u32 %v156, 4294901760
    %v3256 = vsub.f32 %v156, %v3255
    %3257 = vmatpush1.msra.mxu0 %v3256
    %3258 = vmatprep.subr.mxu0 0.0
    %v3259 = vand.u32 %v157, 4294901760
    %v3260 = vsub.f32 %v157, %v3259
    %3261 = vmatpush1.msra.mxu0 %v3260
    %3262 = vmatprep.subr.mxu0 0.0
    %v3263 = vand.u32 %v158, 4294901760
    %v3264 = vsub.f32 %v158, %v3263
    %3265 = vmatpush1.msra.mxu0 %v3264
    %3266 = vmatprep.subr.mxu0 0.0
    %v3267 = vand.u32 %v159, 4294901760
    %v3268 = vsub.f32 %v159, %v3267
    %3269 = vmatpush1.msra.mxu0 %v3268
    %3270 = vmatprep.subr.mxu0 0.0
    %v3271 = vand.u32 %v160, 4294901760
    %v3272 = vsub.f32 %v160, %v3271
    %3273 = vmatpush1.msra.mxu0 %v3272
    %3274 = vmatprep.subr.mxu0 0.0
    %v3275 = vand.u32 %v161, 4294901760
    %v3276 = vsub.f32 %v161, %v3275
    %3277 = vmatpush1.msra.mxu0 %v3276
    %3278 = vmatprep.subr.mxu0 0.0
    %v3279 = vand.u32 %v162, 4294901760
    %v3280 = vsub.f32 %v162, %v3279
    %3281 = vmatpush1.msra.mxu0 %v3280
    %3282 = vmatprep.subr.mxu0 0.0
    %v3283 = vand.u32 %v163, 4294901760
    %v3284 = vsub.f32 %v163, %v3283
    %3285 = vmatpush1.msra.mxu0 %v3284
    %3286 = vmatprep.subr.mxu0 0.0
    %v3287 = vand.u32 %v164, 4294901760
    %v3288 = vsub.f32 %v164, %v3287
    %3289 = vmatpush1.msra.mxu0 %v3288
    %3290 = vmatprep.subr.mxu0 0.0
    %v3291 = vand.u32 %v165, 4294901760
    %v3292 = vsub.f32 %v165, %v3291
    %3293 = vmatpush1.msra.mxu0 %v3292
    %3294 = vmatprep.subr.mxu0 0.0
    %v3295 = vand.u32 %v166, 4294901760
    %v3296 = vsub.f32 %v166, %v3295
    %3297 = vmatpush1.msra.mxu0 %v3296
    %3298 = vmatprep.subr.mxu0 0.0
    %v3299 = vand.u32 %v167, 4294901760
    %v3300 = vsub.f32 %v167, %v3299
    %3301 = vmatpush1.msra.mxu0 %v3300
    %3302 = vmatprep.subr.mxu0 0.0
    %v3303 = vand.u32 %v168, 4294901760
    %v3304 = vsub.f32 %v168, %v3303
    %3305 = vmatpush1.msra.mxu0 %v3304
    %3306 = vmatprep.subr.mxu0 0.0
    %v3307 = vand.u32 %v169, 4294901760
    %v3308 = vsub.f32 %v169, %v3307
    %3309 = vmatpush1.msra.mxu0 %v3308
    %3310 = vmatprep.subr.mxu0 0.0
    %v3311 = vand.u32 %v170, 4294901760
    %v3312 = vsub.f32 %v170, %v3311
    %3313 = vmatpush1.msra.mxu0 %v3312
    %v3314 = vand.u32 %v237, 4294901760
    %v3315 = vsub.f32 %v237, %v3314
    %3316 = vmatprep.mubr.f32.mxu0 %v3315
    %v3317 = vand.u32 %v233, 4294901760
    %v3318 = vsub.f32 %v233, %v3317
    %3319 = vmatmul.mubr.f32.gmra.mrb[0].mxu0 %v3318
    %v3320 = vpop.f32.mrb[0].mxu0
    %v3321 = vadd.f32 %v3183, %v3320
    %v3322 = vpop.f32.mrb[0].mxu0
    %3323 = vdwg.mxu0
    %3324 = vmatprep.subr.mxu0 0.0
    %v3325 = vand.u32 %v139, 4294901760
    %3326 = vmatpush1.msra.mxu0 %v3325
    %3327 = vmatprep.subr.mxu0 0.0
    %v3328 = vand.u32 %v140, 4294901760
    %3329 = vmatpush1.msra.mxu0 %v3328
    %3330 = vmatprep.subr.mxu0 0.0
    %v3331 = vand.u32 %v141, 4294901760
    %3332 = vmatpush1.msra.mxu0 %v3331
    %3333 = vmatprep.subr.mxu0 0.0
    %v3334 = vand.u32 %v142, 4294901760
    %3335 = vmatpush1.msra.mxu0 %v3334
    %3336 = vmatprep.subr.mxu0 0.0
    %v3337 = vand.u32 %v143, 4294901760
    %3338 = vmatpush1.msra.mxu0 %v3337
    %3339 = vmatprep.subr.mxu0 0.0
    %v3340 = vand.u32 %v144, 4294901760
    %3341 = vmatpush1.msra.mxu0 %v3340
    %3342 = vmatprep.subr.mxu0 0.0
    %v3343 = vand.u32 %v145, 4294901760
    %3344 = vmatpush1.msra.mxu0 %v3343
    %3345 = vmatprep.subr.mxu0 0.0
    %v3346 = vand.u32 %v146, 4294901760
    %3347 = vmatpush1.msra.mxu0 %v3346
    %3348 = vmatprep.subr.mxu0 0.0
    %v3349 = vand.u32 %v147, 4294901760
    %3350 = vmatpush1.msra.mxu0 %v3349
    %3351 = vmatprep.subr.mxu0 0.0
    %v3352 = vand.u32 %v148, 4294901760
    %3353 = vmatpush1.msra.mxu0 %v3352
    %3354 = vmatprep.subr.mxu0 0.0
    %v3355 = vand.u32 %v149, 4294901760
    %3356 = vmatpush1.msra.mxu0 %v3355
    %3357 = vmatprep.subr.mxu0 0.0
    %v3358 = vand.u32 %v150, 4294901760
    %3359 = vmatpush1.msra.mxu0 %v3358
    %3360 = vmatprep.subr.mxu0 0.0
    %v3361 = vand.u32 %v151, 4294901760
    %3362 = vmatpush1.msra.mxu0 %v3361
    %3363 = vmatprep.subr.mxu0 0.0
    %v3364 = vand.u32 %v152, 4294901760
    %3365 = vmatpush1.msra.mxu0 %v3364
    %3366 = vmatprep.subr.mxu0 0.0
    %v3367 = vand.u32 %v153, 4294901760
    %3368 = vmatpush1.msra.mxu0 %v3367
    %3369 = vmatprep.subr.mxu0 0.0
    %v3370 = vand.u32 %v154, 4294901760
    %3371 = vmatpush1.msra.mxu0 %v3370
    %3372 = vmatprep.subr.mxu0 0.0
    %v3373 = vand.u32 %v155, 4294901760
    %3374 = vmatpush1.msra.mxu0 %v3373
    %3375 = vmatprep.subr.mxu0 0.0
    %v3376 = vand.u32 %v156, 4294901760
    %3377 = vmatpush1.msra.mxu0 %v3376
    %3378 = vmatprep.subr.mxu0 0.0
    %v3379 = vand.u32 %v157, 4294901760
    %3380 = vmatpush1.msra.mxu0 %v3379
    %3381 = vmatprep.subr.mxu0 0.0
    %v3382 = vand.u32 %v158, 4294901760
    %3383 = vmatpush1.msra.mxu0 %v3382
    %3384 = vmatprep.subr.mxu0 0.0
    %v3385 = vand.u32 %v159, 4294901760
    %3386 = vmatpush1.msra.mxu0 %v3385
    %3387 = vmatprep.subr.mxu0 0.0
    %v3388 = vand.u32 %v160, 4294901760
    %3389 = vmatpush1.msra.mxu0 %v3388
    %3390 = vmatprep.subr.mxu0 0.0
    %v3391 = vand.u32 %v161, 4294901760
    %3392 = vmatpush1.msra.mxu0 %v3391
    %3393 = vmatprep.subr.mxu0 0.0
    %v3394 = vand.u32 %v162, 4294901760
    %3395 = vmatpush1.msra.mxu0 %v3394
    %3396 = vmatprep.subr.mxu0 0.0
    %v3397 = vand.u32 %v163, 4294901760
    %3398 = vmatpush1.msra.mxu0 %v3397
    %3399 = vmatprep.subr.mxu0 0.0
    %v3400 = vand.u32 %v164, 4294901760
    %3401 = vmatpush1.msra.mxu0 %v3400
    %3402 = vmatprep.subr.mxu0 0.0
    %v3403 = vand.u32 %v165, 4294901760
    %3404 = vmatpush1.msra.mxu0 %v3403
    %3405 = vmatprep.subr.mxu0 0.0
    %v3406 = vand.u32 %v166, 4294901760
    %3407 = vmatpush1.msra.mxu0 %v3406
    %3408 = vmatprep.subr.mxu0 0.0
    %v3409 = vand.u32 %v167, 4294901760
    %3410 = vmatpush1.msra.mxu0 %v3409
    %3411 = vmatprep.subr.mxu0 0.0
    %v3412 = vand.u32 %v168, 4294901760
    %3413 = vmatpush1.msra.mxu0 %v3412
    %3414 = vmatprep.subr.mxu0 0.0
    %v3415 = vand.u32 %v169, 4294901760
    %3416 = vmatpush1.msra.mxu0 %v3415
    %3417 = vmatprep.subr.mxu0 0.0
    %v3418 = vand.u32 %v170, 4294901760
    %3419 = vmatpush1.msra.mxu0 %v3418
    %v3420 = vand.u32 %v237, 4294901760
    %v3421 = vsub.f32 %v237, %v3420
    %v3422 = vand.u32 %v3421, 4294901760
    %3423 = vmatprep.mubr.f32.mxu0 %v3422
    %v3424 = vand.u32 %v233, 4294901760
    %v3425 = vsub.f32 %v233, %v3424
    %v3426 = vand.u32 %v3425, 4294901760
    %3427 = vmatmul.mubr.f32.gmra.mrb[0].mxu0 %v3426
    %v3428 = vpop.f32.mrb[0].mxu0
    %v3429 = vadd.f32 %v3321, %v3428
    %v3430 = vpop.f32.mrb[0].mxu0
    %3431 = vdwg.mxu0
    %3432 = vmatprep.subr.mxu0 0.0
    %v3433 = vand.u32 %v139, 4294901760
    %v3434 = vsub.f32 %v139, %v3433
    %v3435 = vand.u32 %v3434, 4294901760
    %3436 = vmatpush1.msra.mxu0 %v3435
    %3437 = vmatprep.subr.mxu0 0.0
    %v3438 = vand.u32 %v140, 4294901760
    %v3439 = vsub.f32 %v140, %v3438
    %v3440 = vand.u32 %v3439, 4294901760
    %3441 = vmatpush1.msra.mxu0 %v3440
    %3442 = vmatprep.subr.mxu0 0.0
    %v3443 = vand.u32 %v141, 4294901760
    %v3444 = vsub.f32 %v141, %v3443
    %v3445 = vand.u32 %v3444, 4294901760
    %3446 = vmatpush1.msra.mxu0 %v3445
    %3447 = vmatprep.subr.mxu0 0.0
    %v3448 = vand.u32 %v142, 4294901760
    %v3449 = vsub.f32 %v142, %v3448
    %v3450 = vand.u32 %v3449, 4294901760
    %3451 = vmatpush1.msra.mxu0 %v3450
    %3452 = vmatprep.subr.mxu0 0.0
    %v3453 = vand.u32 %v143, 4294901760
    %v3454 = vsub.f32 %v143, %v3453
    %v3455 = vand.u32 %v3454, 4294901760
    %3456 = vmatpush1.msra.mxu0 %v3455
    %3457 = vmatprep.subr.mxu0 0.0
    %v3458 = vand.u32 %v144, 4294901760
    %v3459 = vsub.f32 %v144, %v3458
    %v3460 = vand.u32 %v3459, 4294901760
    %3461 = vmatpush1.msra.mxu0 %v3460
    %3462 = vmatprep.subr.mxu0 0.0
    %v3463 = vand.u32 %v145, 4294901760
    %v3464 = vsub.f32 %v145, %v3463
    %v3465 = vand.u32 %v3464, 4294901760
    %3466 = vmatpush1.msra.mxu0 %v3465
    %3467 = vmatprep.subr.mxu0 0.0
    %v3468 = vand.u32 %v146, 4294901760
    %v3469 = vsub.f32 %v146, %v3468
    %v3470 = vand.u32 %v3469, 4294901760
    %3471 = vmatpush1.msra.mxu0 %v3470
    %3472 = vmatprep.subr.mxu0 0.0
    %v3473 = vand.u32 %v147, 4294901760
    %v3474 = vsub.f32 %v147, %v3473
    %v3475 = vand.u32 %v3474, 4294901760
    %3476 = vmatpush1.msra.mxu0 %v3475
    %3477 = vmatprep.subr.mxu0 0.0
    %v3478 = vand.u32 %v148, 4294901760
    %v3479 = vsub.f32 %v148, %v3478
    %v3480 = vand.u32 %v3479, 4294901760
    %3481 = vmatpush1.msra.mxu0 %v3480
    %3482 = vmatprep.subr.mxu0 0.0
    %v3483 = vand.u32 %v149, 4294901760
    %v3484 = vsub.f32 %v149, %v3483
    %v3485 = vand.u32 %v3484, 4294901760
    %3486 = vmatpush1.msra.mxu0 %v3485
    %3487 = vmatprep.subr.mxu0 0.0
    %v3488 = vand.u32 %v150, 4294901760
    %v3489 = vsub.f32 %v150, %v3488
    %v3490 = vand.u32 %v3489, 4294901760
    %3491 = vmatpush1.msra.mxu0 %v3490
    %3492 = vmatprep.subr.mxu0 0.0
    %v3493 = vand.u32 %v151, 4294901760
    %v3494 = vsub.f32 %v151, %v3493
    %v3495 = vand.u32 %v3494, 4294901760
    %3496 = vmatpush1.msra.mxu0 %v3495
    %3497 = vmatprep.subr.mxu0 0.0
    %v3498 = vand.u32 %v152, 4294901760
    %v3499 = vsub.f32 %v152, %v3498
    %v3500 = vand.u32 %v3499, 4294901760
    %3501 = vmatpush1.msra.mxu0 %v3500
    %3502 = vmatprep.subr.mxu0 0.0
    %v3503 = vand.u32 %v153, 4294901760
    %v3504 = vsub.f32 %v153, %v3503
    %v3505 = vand.u32 %v3504, 4294901760
    %3506 = vmatpush1.msra.mxu0 %v3505
    %3507 = vmatprep.subr.mxu0 0.0
    %v3508 = vand.u32 %v154, 4294901760
    %v3509 = vsub.f32 %v154, %v3508
    %v3510 = vand.u32 %v3509, 4294901760
    %3511 = vmatpush1.msra.mxu0 %v3510
    %3512 = vmatprep.subr.mxu0 0.0
    %v3513 = vand.u32 %v155, 4294901760
    %v3514 = vsub.f32 %v155, %v3513
    %v3515 = vand.u32 %v3514, 4294901760
    %3516 = vmatpush1.msra.mxu0 %v3515
    %3517 = vmatprep.subr.mxu0 0.0
    %v3518 = vand.u32 %v156, 4294901760
    %v3519 = vsub.f32 %v156, %v3518
    %v3520 = vand.u32 %v3519, 4294901760
    %3521 = vmatpush1.msra.mxu0 %v3520
    %3522 = vmatprep.subr.mxu0 0.0
    %v3523 = vand.u32 %v157, 4294901760
    %v3524 = vsub.f32 %v157, %v3523
    %v3525 = vand.u32 %v3524, 4294901760
    %3526 = vmatpush1.msra.mxu0 %v3525
    %3527 = vmatprep.subr.mxu0 0.0
    %v3528 = vand.u32 %v158, 4294901760
    %v3529 = vsub.f32 %v158, %v3528
    %v3530 = vand.u32 %v3529, 4294901760
    %3531 = vmatpush1.msra.mxu0 %v3530
    %3532 = vmatprep.subr.mxu0 0.0
    %v3533 = vand.u32 %v159, 4294901760
    %v3534 = vsub.f32 %v159, %v3533
    %v3535 = vand.u32 %v3534, 4294901760
    %3536 = vmatpush1.msra.mxu0 %v3535
    %3537 = vmatprep.subr.mxu0 0.0
    %v3538 = vand.u32 %v160, 4294901760
    %v3539 = vsub.f32 %v160, %v3538
    %v3540 = vand.u32 %v3539, 4294901760
    %3541 = vmatpush1.msra.mxu0 %v3540
    %3542 = vmatprep.subr.mxu0 0.0
    %v3543 = vand.u32 %v161, 4294901760
    %v3544 = vsub.f32 %v161, %v3543
    %v3545 = vand.u32 %v3544, 4294901760
    %3546 = vmatpush1.msra.mxu0 %v3545
    %3547 = vmatprep.subr.mxu0 0.0
    %v3548 = vand.u32 %v162, 4294901760
    %v3549 = vsub.f32 %v162, %v3548
    %v3550 = vand.u32 %v3549, 4294901760
    %3551 = vmatpush1.msra.mxu0 %v3550
    %3552 = vmatprep.subr.mxu0 0.0
    %v3553 = vand.u32 %v163, 4294901760
    %v3554 = vsub.f32 %v163, %v3553
    %v3555 = vand.u32 %v3554, 4294901760
    %3556 = vmatpush1.msra.mxu0 %v3555
    %3557 = vmatprep.subr.mxu0 0.0
    %v3558 = vand.u32 %v164, 4294901760
    %v3559 = vsub.f32 %v164, %v3558
    %v3560 = vand.u32 %v3559, 4294901760
    %3561 = vmatpush1.msra.mxu0 %v3560
    %3562 = vmatprep.subr.mxu0 0.0
    %v3563 = vand.u32 %v165, 4294901760
    %v3564 = vsub.f32 %v165, %v3563
    %v3565 = vand.u32 %v3564, 4294901760
    %3566 = vmatpush1.msra.mxu0 %v3565
    %3567 = vmatprep.subr.mxu0 0.0
    %v3568 = vand.u32 %v166, 4294901760
    %v3569 = vsub.f32 %v166, %v3568
    %v3570 = vand.u32 %v3569, 4294901760
    %3571 = vmatpush1.msra.mxu0 %v3570
    %3572 = vmatprep.subr.mxu0 0.0
    %v3573 = vand.u32 %v167, 4294901760
    %v3574 = vsub.f32 %v167, %v3573
    %v3575 = vand.u32 %v3574, 4294901760
    %3576 = vmatpush1.msra.mxu0 %v3575
    %3577 = vmatprep.subr.mxu0 0.0
    %v3578 = vand.u32 %v168, 4294901760
    %v3579 = vsub.f32 %v168, %v3578
    %v3580 = vand.u32 %v3579, 4294901760
    %3581 = vmatpush1.msra.mxu0 %v3580
    %3582 = vmatprep.subr.mxu0 0.0
    %v3583 = vand.u32 %v169, 4294901760
    %v3584 = vsub.f32 %v169, %v3583
    %v3585 = vand.u32 %v3584, 4294901760
    %3586 = vmatpush1.msra.mxu0 %v3585
    %3587 = vmatprep.subr.mxu0 0.0
    %v3588 = vand.u32 %v170, 4294901760
    %v3589 = vsub.f32 %v170, %v3588
    %v3590 = vand.u32 %v3589, 4294901760
    %3591 = vmatpush1.msra.mxu0 %v3590
    %v3592 = vand.u32 %v237, 4294901760
    %3593 = vmatprep.mubr.f32.mxu0 %v3592
    %v3594 = vand.u32 %v233, 4294901760
    %3595 = vmatmul.mubr.f32.gmra.mrb[0].mxu0 %v3594
    %v3596 = vpop.f32.mrb[0].mxu0
    %v3597 = vadd.f32 %v3429, %v3596
    %v3598 = vpop.f32.mrb[0].mxu0
    %3599 = vdwg.mxu0
    %3600 = vmatprep.subr.mxu0 0.0
    %v3601 = vand.u32 %v139, 4294901760
    %3602 = vmatpush1.msra.mxu0 %v3601
    %3603 = vmatprep.subr.mxu0 0.0
    %v3604 = vand.u32 %v140, 4294901760
    %3605 = vmatpush1.msra.mxu0 %v3604
    %3606 = vmatprep.subr.mxu0 0.0
    %v3607 = vand.u32 %v141, 4294901760
    %3608 = vmatpush1.msra.mxu0 %v3607
    %3609 = vmatprep.subr.mxu0 0.0
    %v3610 = vand.u32 %v142, 4294901760
    %3611 = vmatpush1.msra.mxu0 %v3610
    %3612 = vmatprep.subr.mxu0 0.0
    %v3613 = vand.u32 %v143, 4294901760
    %3614 = vmatpush1.msra.mxu0 %v3613
    %3615 = vmatprep.subr.mxu0 0.0
    %v3616 = vand.u32 %v144, 4294901760
    %3617 = vmatpush1.msra.mxu0 %v3616
    %3618 = vmatprep.subr.mxu0 0.0
    %v3619 = vand.u32 %v145, 4294901760
    %3620 = vmatpush1.msra.mxu0 %v3619
    %3621 = vmatprep.subr.mxu0 0.0
    %v3622 = vand.u32 %v146, 4294901760
    %3623 = vmatpush1.msra.mxu0 %v3622
    %3624 = vmatprep.subr.mxu0 0.0
    %v3625 = vand.u32 %v147, 4294901760
    %3626 = vmatpush1.msra.mxu0 %v3625
    %3627 = vmatprep.subr.mxu0 0.0
    %v3628 = vand.u32 %v148, 4294901760
    %3629 = vmatpush1.msra.mxu0 %v3628
    %3630 = vmatprep.subr.mxu0 0.0
    %v3631 = vand.u32 %v149, 4294901760
    %3632 = vmatpush1.msra.mxu0 %v3631
    %3633 = vmatprep.subr.mxu0 0.0
    %v3634 = vand.u32 %v150, 4294901760
    %3635 = vmatpush1.msra.mxu0 %v3634
    %3636 = vmatprep.subr.mxu0 0.0
    %v3637 = vand.u32 %v151, 4294901760
    %3638 = vmatpush1.msra.mxu0 %v3637
    %3639 = vmatprep.subr.mxu0 0.0
    %v3640 = vand.u32 %v152, 4294901760
    %3641 = vmatpush1.msra.mxu0 %v3640
    %3642 = vmatprep.subr.mxu0 0.0
    %v3643 = vand.u32 %v153, 4294901760
    %3644 = vmatpush1.msra.mxu0 %v3643
    %3645 = vmatprep.subr.mxu0 0.0
    %v3646 = vand.u32 %v154, 4294901760
    %3647 = vmatpush1.msra.mxu0 %v3646
    %3648 = vmatprep.subr.mxu0 0.0
    %v3649 = vand.u32 %v155, 4294901760
    %3650 = vmatpush1.msra.mxu0 %v3649
    %3651 = vmatprep.subr.mxu0 0.0
    %v3652 = vand.u32 %v156, 4294901760
    %3653 = vmatpush1.msra.mxu0 %v3652
    %3654 = vmatprep.subr.mxu0 0.0
    %v3655 = vand.u32 %v157, 4294901760
    %3656 = vmatpush1.msra.mxu0 %v3655
    %3657 = vmatprep.subr.mxu0 0.0
    %v3658 = vand.u32 %v158, 4294901760
    %3659 = vmatpush1.msra.mxu0 %v3658
    %3660 = vmatprep.subr.mxu0 0.0
    %v3661 = vand.u32 %v159, 4294901760
    %3662 = vmatpush1.msra.mxu0 %v3661
    %3663 = vmatprep.subr.mxu0 0.0
    %v3664 = vand.u32 %v160, 4294901760
    %3665 = vmatpush1.msra.mxu0 %v3664
    %3666 = vmatprep.subr.mxu0 0.0
    %v3667 = vand.u32 %v161, 4294901760
    %3668 = vmatpush1.msra.mxu0 %v3667
    %3669 = vmatprep.subr.mxu0 0.0
    %v3670 = vand.u32 %v162, 4294901760
    %3671 = vmatpush1.msra.mxu0 %v3670
    %3672 = vmatprep.subr.mxu0 0.0
    %v3673 = vand.u32 %v163, 4294901760
    %3674 = vmatpush1.msra.mxu0 %v3673
    %3675 = vmatprep.subr.mxu0 0.0
    %v3676 = vand.u32 %v164, 4294901760
    %3677 = vmatpush1.msra.mxu0 %v3676
    %3678 = vmatprep.subr.mxu0 0.0
    %v3679 = vand.u32 %v165, 4294901760
    %3680 = vmatpush1.msra.mxu0 %v3679
    %3681 = vmatprep.subr.mxu0 0.0
    %v3682 = vand.u32 %v166, 4294901760
    %3683 = vmatpush1.msra.mxu0 %v3682
    %3684 = vmatprep.subr.mxu0 0.0
    %v3685 = vand.u32 %v167, 4294901760
    %3686 = vmatpush1.msra.mxu0 %v3685
    %3687 = vmatprep.subr.mxu0 0.0
    %v3688 = vand.u32 %v168, 4294901760
    %3689 = vmatpush1.msra.mxu0 %v3688
    %3690 = vmatprep.subr.mxu0 0.0
    %v3691 = vand.u32 %v169, 4294901760
    %3692 = vmatpush1.msra.mxu0 %v3691
    %3693 = vmatprep.subr.mxu0 0.0
    %v3694 = vand.u32 %v170, 4294901760
    %3695 = vmatpush1.msra.mxu0 %v3694
    %v3696 = vand.u32 %v237, 4294901760
    %3697 = vmatprep.mubr.f32.mxu0 %v3696
    %v3698 = vand.u32 %v233, 4294901760
    %3699 = vmatmul.mubr.f32.gmra.mrb[0].mxu0 %v3698
    %v3700 = vpop.f32.mrb[0].mxu0
    %v3701 = vadd.f32 %v3597, %v3700
    %v3702 = vpop.f32.mrb[0].mxu0
    %3703 = vdwg.mxu0
    %3704 = vmatprep.subr.mxu0 0.0
    %v3705 = vand.u32 %v171, 4294901760
    %3706 = vmatpush1.msra.mxu0 %v3705
    %3707 = vmatprep.subr.mxu0 0.0
    %v3708 = vand.u32 %v172, 4294901760
    %3709 = vmatpush1.msra.mxu0 %v3708
    %3710 = vmatprep.subr.mxu0 0.0
    %v3711 = vand.u32 %v173, 4294901760
    %3712 = vmatpush1.msra.mxu0 %v3711
    %3713 = vmatprep.subr.mxu0 0.0
    %v3714 = vand.u32 %v174, 4294901760
    %3715 = vmatpush1.msra.mxu0 %v3714
    %3716 = vmatprep.subr.mxu0 0.0
    %v3717 = vand.u32 %v175, 4294901760
    %3718 = vmatpush1.msra.mxu0 %v3717
    %3719 = vmatprep.subr.mxu0 0.0
    %v3720 = vand.u32 %v176, 4294901760
    %3721 = vmatpush1.msra.mxu0 %v3720
    %3722 = vmatprep.subr.mxu0 0.0
    %v3723 = vand.u32 %v177, 4294901760
    %3724 = vmatpush1.msra.mxu0 %v3723
    %3725 = vmatprep.subr.mxu0 0.0
    %v3726 = vand.u32 %v178, 4294901760
    %3727 = vmatpush1.msra.mxu0 %v3726
    %3728 = vmatprep.subr.mxu0 0.0
    %v3729 = vand.u32 %v179, 4294901760
    %3730 = vmatpush1.msra.mxu0 %v3729
    %3731 = vmatprep.subr.mxu0 0.0
    %v3732 = vand.u32 %v180, 4294901760
    %3733 = vmatpush1.msra.mxu0 %v3732
    %3734 = vmatprep.subr.mxu0 0.0
    %v3735 = vand.u32 %v181, 4294901760
    %3736 = vmatpush1.msra.mxu0 %v3735
    %3737 = vmatprep.subr.mxu0 0.0
    %v3738 = vand.u32 %v182, 4294901760
    %3739 = vmatpush1.msra.mxu0 %v3738
    %3740 = vmatprep.subr.mxu0 0.0
    %v3741 = vand.u32 %v183, 4294901760
    %3742 = vmatpush1.msra.mxu0 %v3741
    %3743 = vmatprep.subr.mxu0 0.0
    %v3744 = vand.u32 %v184, 4294901760
    %3745 = vmatpush1.msra.mxu0 %v3744
    %3746 = vmatprep.subr.mxu0 0.0
    %v3747 = vand.u32 %v185, 4294901760
    %3748 = vmatpush1.msra.mxu0 %v3747
    %3749 = vmatprep.subr.mxu0 0.0
    %v3750 = vand.u32 %v186, 4294901760
    %3751 = vmatpush1.msra.mxu0 %v3750
    %3752 = vmatprep.subr.mxu0 0.0
    %v3753 = vand.u32 %v187, 4294901760
    %3754 = vmatpush1.msra.mxu0 %v3753
    %3755 = vmatprep.subr.mxu0 0.0
    %v3756 = vand.u32 %v188, 4294901760
    %3757 = vmatpush1.msra.mxu0 %v3756
    %3758 = vmatprep.subr.mxu0 0.0
    %v3759 = vand.u32 %v189, 4294901760
    %3760 = vmatpush1.msra.mxu0 %v3759
    %3761 = vmatprep.subr.mxu0 0.0
    %v3762 = vand.u32 %v190, 4294901760
    %3763 = vmatpush1.msra.mxu0 %v3762
    %3764 = vmatprep.subr.mxu0 0.0
    %v3765 = vand.u32 %v191, 4294901760
    %3766 = vmatpush1.msra.mxu0 %v3765
    %3767 = vmatprep.subr.mxu0 0.0
    %v3768 = vand.u32 %v192, 4294901760
    %3769 = vmatpush1.msra.mxu0 %v3768
    %3770 = vmatprep.subr.mxu0 0.0
    %v3771 = vand.u32 %v193, 4294901760
    %3772 = vmatpush1.msra.mxu0 %v3771
    %3773 = vmatprep.subr.mxu0 0.0
    %v3774 = vand.u32 %v194, 4294901760
    %3775 = vmatpush1.msra.mxu0 %v3774
    %3776 = vmatprep.subr.mxu0 0.0
    %v3777 = vand.u32 %v195, 4294901760
    %3778 = vmatpush1.msra.mxu0 %v3777
    %3779 = vmatprep.subr.mxu0 0.0
    %v3780 = vand.u32 %v196, 4294901760
    %3781 = vmatpush1.msra.mxu0 %v3780
    %3782 = vmatprep.subr.mxu0 0.0
    %v3783 = vand.u32 %v197, 4294901760
    %3784 = vmatpush1.msra.mxu0 %v3783
    %3785 = vmatprep.subr.mxu0 0.0
    %v3786 = vand.u32 %v198, 4294901760
    %3787 = vmatpush1.msra.mxu0 %v3786
    %3788 = vmatprep.subr.mxu0 0.0
    %v3789 = vand.u32 %v199, 4294901760
    %3790 = vmatpush1.msra.mxu0 %v3789
    %3791 = vmatprep.subr.mxu0 0.0
    %v3792 = vand.u32 %v200, 4294901760
    %3793 = vmatpush1.msra.mxu0 %v3792
    %3794 = vmatprep.subr.mxu0 0.0
    %v3795 = vand.u32 %v201, 4294901760
    %3796 = vmatpush1.msra.mxu0 %v3795
    %3797 = vmatprep.subr.mxu0 0.0
    %v3798 = vand.u32 %v202, 4294901760
    %3799 = vmatpush1.msra.mxu0 %v3798
    %v3800 = vand.u32 %v245, 4294901760
    %v3801 = vsub.f32 %v245, %v3800
    %v3802 = vand.u32 %v3801, 4294901760
    %v3803 = vsub.f32 %v3801, %v3802
    %v3804 = vand.u32 %v3803, 4294901760
    %3805 = vmatprep.mubr.f32.mxu0 %v3804
    %v3806 = vand.u32 %v241, 4294901760
    %v3807 = vsub.f32 %v241, %v3806
    %v3808 = vand.u32 %v3807, 4294901760
    %v3809 = vsub.f32 %v3807, %v3808
    %v3810 = vand.u32 %v3809, 4294901760
    %3811 = vmatmul.mubr.f32.gmra.mrb[0].mxu0 %v3810
    %v3812 = vpop.f32.mrb[0].mxu0
    %v3813 = vadd.f32 %v3701, %v3812
    %v3814 = vpop.f32.mrb[0].mxu0
    %3815 = vdwg.mxu0
    %3816 = vmatprep.subr.mxu0 0.0
    %v3817 = vand.u32 %v171, 4294901760
    %v3818 = vsub.f32 %v171, %v3817
    %v3819 = vand.u32 %v3818, 4294901760
    %v3820 = vsub.f32 %v3818, %v3819
    %v3821 = vand.u32 %v3820, 4294901760
    %3822 = vmatpush1.msra.mxu0 %v3821
    %3823 = vmatprep.subr.mxu0 0.0
    %v3824 = vand.u32 %v172, 4294901760
    %v3825 = vsub.f32 %v172, %v3824
    %v3826 = vand.u32 %v3825, 4294901760
    %v3827 = vsub.f32 %v3825, %v3826
    %v3828 = vand.u32 %v3827, 4294901760
    %3829 = vmatpush1.msra.mxu0 %v3828
    %3830 = vmatprep.subr.mxu0 0.0
    %v3831 = vand.u32 %v173, 4294901760
    %v3832 = vsub.f32 %v173, %v3831
    %v3833 = vand.u32 %v3832, 4294901760
    %v3834 = vsub.f32 %v3832, %v3833
    %v3835 = vand.u32 %v3834, 4294901760
    %3836 = vmatpush1.msra.mxu0 %v3835
    %3837 = vmatprep.subr.mxu0 0.0
    %v3838 = vand.u32 %v174, 4294901760
    %v3839 = vsub.f32 %v174, %v3838
    %v3840 = vand.u32 %v3839, 4294901760
    %v3841 = vsub.f32 %v3839, %v3840
    %v3842 = vand.u32 %v3841, 4294901760
    %3843 = vmatpush1.msra.mxu0 %v3842
    %3844 = vmatprep.subr.mxu0 0.0
    %v3845 = vand.u32 %v175, 4294901760
    %v3846 = vsub.f32 %v175, %v3845
    %v3847 = vand.u32 %v3846, 4294901760
    %v3848 = vsub.f32 %v3846, %v3847
    %v3849 = vand.u32 %v3848, 4294901760
    %3850 = vmatpush1.msra.mxu0 %v3849
    %3851 = vmatprep.subr.mxu0 0.0
    %v3852 = vand.u32 %v176, 4294901760
    %v3853 = vsub.f32 %v176, %v3852
    %v3854 = vand.u32 %v3853, 4294901760
    %v3855 = vsub.f32 %v3853, %v3854
    %v3856 = vand.u32 %v3855, 4294901760
    %3857 = vmatpush1.msra.mxu0 %v3856
    %3858 = vmatprep.subr.mxu0 0.0
    %v3859 = vand.u32 %v177, 4294901760
    %v3860 = vsub.f32 %v177, %v3859
    %v3861 = vand.u32 %v3860, 4294901760
    %v3862 = vsub.f32 %v3860, %v3861
    %v3863 = vand.u32 %v3862, 4294901760
    %3864 = vmatpush1.msra.mxu0 %v3863
    %3865 = vmatprep.subr.mxu0 0.0
    %v3866 = vand.u32 %v178, 4294901760
    %v3867 = vsub.f32 %v178, %v3866
    %v3868 = vand.u32 %v3867, 4294901760
    %v3869 = vsub.f32 %v3867, %v3868
    %v3870 = vand.u32 %v3869, 4294901760
    %3871 = vmatpush1.msra.mxu0 %v3870
    %3872 = vmatprep.subr.mxu0 0.0
    %v3873 = vand.u32 %v179, 4294901760
    %v3874 = vsub.f32 %v179, %v3873
    %v3875 = vand.u32 %v3874, 4294901760
    %v3876 = vsub.f32 %v3874, %v3875
    %v3877 = vand.u32 %v3876, 4294901760
    %3878 = vmatpush1.msra.mxu0 %v3877
    %3879 = vmatprep.subr.mxu0 0.0
    %v3880 = vand.u32 %v180, 4294901760
    %v3881 = vsub.f32 %v180, %v3880
    %v3882 = vand.u32 %v3881, 4294901760
    %v3883 = vsub.f32 %v3881, %v3882
    %v3884 = vand.u32 %v3883, 4294901760
    %3885 = vmatpush1.msra.mxu0 %v3884
    %3886 = vmatprep.subr.mxu0 0.0
    %v3887 = vand.u32 %v181, 4294901760
    %v3888 = vsub.f32 %v181, %v3887
    %v3889 = vand.u32 %v3888, 4294901760
    %v3890 = vsub.f32 %v3888, %v3889
    %v3891 = vand.u32 %v3890, 4294901760
    %3892 = vmatpush1.msra.mxu0 %v3891
    %3893 = vmatprep.subr.mxu0 0.0
    %v3894 = vand.u32 %v182, 4294901760
    %v3895 = vsub.f32 %v182, %v3894
    %v3896 = vand.u32 %v3895, 4294901760
    %v3897 = vsub.f32 %v3895, %v3896
    %v3898 = vand.u32 %v3897, 4294901760
    %3899 = vmatpush1.msra.mxu0 %v3898
    %3900 = vmatprep.subr.mxu0 0.0
    %v3901 = vand.u32 %v183, 4294901760
    %v3902 = vsub.f32 %v183, %v3901
    %v3903 = vand.u32 %v3902, 4294901760
    %v3904 = vsub.f32 %v3902, %v3903
    %v3905 = vand.u32 %v3904, 4294901760
    %3906 = vmatpush1.msra.mxu0 %v3905
    %3907 = vmatprep.subr.mxu0 0.0
    %v3908 = vand.u32 %v184, 4294901760
    %v3909 = vsub.f32 %v184, %v3908
    %v3910 = vand.u32 %v3909, 4294901760
    %v3911 = vsub.f32 %v3909, %v3910
    %v3912 = vand.u32 %v3911, 4294901760
    %3913 = vmatpush1.msra.mxu0 %v3912
    %3914 = vmatprep.subr.mxu0 0.0
    %v3915 = vand.u32 %v185, 4294901760
    %v3916 = vsub.f32 %v185, %v3915
    %v3917 = vand.u32 %v3916, 4294901760
    %v3918 = vsub.f32 %v3916, %v3917
    %v3919 = vand.u32 %v3918, 4294901760
    %3920 = vmatpush1.msra.mxu0 %v3919
    %3921 = vmatprep.subr.mxu0 0.0
    %v3922 = vand.u32 %v186, 4294901760
    %v3923 = vsub.f32 %v186, %v3922
    %v3924 = vand.u32 %v3923, 4294901760
    %v3925 = vsub.f32 %v3923, %v3924
    %v3926 = vand.u32 %v3925, 4294901760
    %3927 = vmatpush1.msra.mxu0 %v3926
    %3928 = vmatprep.subr.mxu0 0.0
    %v3929 = vand.u32 %v187, 4294901760
    %v3930 = vsub.f32 %v187, %v3929
    %v3931 = vand.u32 %v3930, 4294901760
    %v3932 = vsub.f32 %v3930, %v3931
    %v3933 = vand.u32 %v3932, 4294901760
    %3934 = vmatpush1.msra.mxu0 %v3933
    %3935 = vmatprep.subr.mxu0 0.0
    %v3936 = vand.u32 %v188, 4294901760
    %v3937 = vsub.f32 %v188, %v3936
    %v3938 = vand.u32 %v3937, 4294901760
    %v3939 = vsub.f32 %v3937, %v3938
    %v3940 = vand.u32 %v3939, 4294901760
    %3941 = vmatpush1.msra.mxu0 %v3940
    %3942 = vmatprep.subr.mxu0 0.0
    %v3943 = vand.u32 %v189, 4294901760
    %v3944 = vsub.f32 %v189, %v3943
    %v3945 = vand.u32 %v3944, 4294901760
    %v3946 = vsub.f32 %v3944, %v3945
    %v3947 = vand.u32 %v3946, 4294901760
    %3948 = vmatpush1.msra.mxu0 %v3947
    %3949 = vmatprep.subr.mxu0 0.0
    %v3950 = vand.u32 %v190, 4294901760
    %v3951 = vsub.f32 %v190, %v3950
    %v3952 = vand.u32 %v3951, 4294901760
    %v3953 = vsub.f32 %v3951, %v3952
    %v3954 = vand.u32 %v3953, 4294901760
    %3955 = vmatpush1.msra.mxu0 %v3954
    %3956 = vmatprep.subr.mxu0 0.0
    %v3957 = vand.u32 %v191, 4294901760
    %v3958 = vsub.f32 %v191, %v3957
    %v3959 = vand.u32 %v3958, 4294901760
    %v3960 = vsub.f32 %v3958, %v3959
    %v3961 = vand.u32 %v3960, 4294901760
    %3962 = vmatpush1.msra.mxu0 %v3961
    %3963 = vmatprep.subr.mxu0 0.0
    %v3964 = vand.u32 %v192, 4294901760
    %v3965 = vsub.f32 %v192, %v3964
    %v3966 = vand.u32 %v3965, 4294901760
    %v3967 = vsub.f32 %v3965, %v3966
    %v3968 = vand.u32 %v3967, 4294901760
    %3969 = vmatpush1.msra.mxu0 %v3968
    %3970 = vmatprep.subr.mxu0 0.0
    %v3971 = vand.u32 %v193, 4294901760
    %v3972 = vsub.f32 %v193, %v3971
    %v3973 = vand.u32 %v3972, 4294901760
    %v3974 = vsub.f32 %v3972, %v3973
    %v3975 = vand.u32 %v3974, 4294901760
    %3976 = vmatpush1.msra.mxu0 %v3975
    %3977 = vmatprep.subr.mxu0 0.0
    %v3978 = vand.u32 %v194, 4294901760
    %v3979 = vsub.f32 %v194, %v3978
    %v3980 = vand.u32 %v3979, 4294901760
    %v3981 = vsub.f32 %v3979, %v3980
    %v3982 = vand.u32 %v3981, 4294901760
    %3983 = vmatpush1.msra.mxu0 %v3982
    %3984 = vmatprep.subr.mxu0 0.0
    %v3985 = vand.u32 %v195, 4294901760
    %v3986 = vsub.f32 %v195, %v3985
    %v3987 = vand.u32 %v3986, 4294901760
    %v3988 = vsub.f32 %v3986, %v3987
    %v3989 = vand.u32 %v3988, 4294901760
    %3990 = vmatpush1.msra.mxu0 %v3989
    %3991 = vmatprep.subr.mxu0 0.0
    %v3992 = vand.u32 %v196, 4294901760
    %v3993 = vsub.f32 %v196, %v3992
    %v3994 = vand.u32 %v3993, 4294901760
    %v3995 = vsub.f32 %v3993, %v3994
    %v3996 = vand.u32 %v3995, 4294901760
    %3997 = vmatpush1.msra.mxu0 %v3996
    %3998 = vmatprep.subr.mxu0 0.0
    %v3999 = vand.u32 %v197, 4294901760
    %v4000 = vsub.f32 %v197, %v3999
    %v4001 = vand.u32 %v4000, 4294901760
    %v4002 = vsub.f32 %v4000, %v4001
    %v4003 = vand.u32 %v4002, 4294901760
    %4004 = vmatpush1.msra.mxu0 %v4003
    %4005 = vmatprep.subr.mxu0 0.0
    %v4006 = vand.u32 %v198, 4294901760
    %v4007 = vsub.f32 %v198, %v4006
    %v4008 = vand.u32 %v4007, 4294901760
    %v4009 = vsub.f32 %v4007, %v4008
    %v4010 = vand.u32 %v4009, 4294901760
    %4011 = vmatpush1.msra.mxu0 %v4010
    %4012 = vmatprep.subr.mxu0 0.0
    %v4013 = vand.u32 %v199, 4294901760
    %v4014 = vsub.f32 %v199, %v4013
    %v4015 = vand.u32 %v4014, 4294901760
    %v4016 = vsub.f32 %v4014, %v4015
    %v4017 = vand.u32 %v4016, 4294901760
    %4018 = vmatpush1.msra.mxu0 %v4017
    %4019 = vmatprep.subr.mxu0 0.0
    %v4020 = vand.u32 %v200, 4294901760
    %v4021 = vsub.f32 %v200, %v4020
    %v4022 = vand.u32 %v4021, 4294901760
    %v4023 = vsub.f32 %v4021, %v4022
    %v4024 = vand.u32 %v4023, 4294901760
    %4025 = vmatpush1.msra.mxu0 %v4024
    %4026 = vmatprep.subr.mxu0 0.0
    %v4027 = vand.u32 %v201, 4294901760
    %v4028 = vsub.f32 %v201, %v4027
    %v4029 = vand.u32 %v4028, 4294901760
    %v4030 = vsub.f32 %v4028, %v4029
    %v4031 = vand.u32 %v4030, 4294901760
    %4032 = vmatpush1.msra.mxu0 %v4031
    %4033 = vmatprep.subr.mxu0 0.0
    %v4034 = vand.u32 %v202, 4294901760
    %v4035 = vsub.f32 %v202, %v4034
    %v4036 = vand.u32 %v4035, 4294901760
    %v4037 = vsub.f32 %v4035, %v4036
    %v4038 = vand.u32 %v4037, 4294901760
    %4039 = vmatpush1.msra.mxu0 %v4038
    %v4040 = vand.u32 %v245, 4294901760
    %4041 = vmatprep.mubr.f32.mxu0 %v4040
    %v4042 = vand.u32 %v241, 4294901760
    %4043 = vmatmul.mubr.f32.gmra.mrb[0].mxu0 %v4042
    %v4044 = vpop.f32.mrb[0].mxu0
    %v4045 = vadd.f32 %v3813, %v4044
    %v4046 = vpop.f32.mrb[0].mxu0
    %4047 = vdwg.mxu0
    %4048 = vmatprep.subr.mxu0 0.0
    %v4049 = vand.u32 %v171, 4294901760
    %v4050 = vsub.f32 %v171, %v4049
    %4051 = vmatpush1.msra.mxu0 %v4050
    %4052 = vmatprep.subr.mxu0 0.0
    %v4053 = vand.u32 %v172, 4294901760
    %v4054 = vsub.f32 %v172, %v4053
    %4055 = vmatpush1.msra.mxu0 %v4054
    %4056 = vmatprep.subr.mxu0 0.0
    %v4057 = vand.u32 %v173, 4294901760
    %v4058 = vsub.f32 %v173, %v4057
    %4059 = vmatpush1.msra.mxu0 %v4058
    %4060 = vmatprep.subr.mxu0 0.0
    %v4061 = vand.u32 %v174, 4294901760
    %v4062 = vsub.f32 %v174, %v4061
    %4063 = vmatpush1.msra.mxu0 %v4062
    %4064 = vmatprep.subr.mxu0 0.0
    %v4065 = vand.u32 %v175, 4294901760
    %v4066 = vsub.f32 %v175, %v4065
    %4067 = vmatpush1.msra.mxu0 %v4066
    %4068 = vmatprep.subr.mxu0 0.0
    %v4069 = vand.u32 %v176, 4294901760
    %v4070 = vsub.f32 %v176, %v4069
    %4071 = vmatpush1.msra.mxu0 %v4070
    %4072 = vmatprep.subr.mxu0 0.0
    %v4073 = vand.u32 %v177, 4294901760
    %v4074 = vsub.f32 %v177, %v4073
    %4075 = vmatpush1.msra.mxu0 %v4074
    %4076 = vmatprep.subr.mxu0 0.0
    %v4077 = vand.u32 %v178, 4294901760
    %v4078 = vsub.f32 %v178, %v4077
    %4079 = vmatpush1.msra.mxu0 %v4078
    %4080 = vmatprep.subr.mxu0 0.0
    %v4081 = vand.u32 %v179, 4294901760
    %v4082 = vsub.f32 %v179, %v4081
    %4083 = vmatpush1.msra.mxu0 %v4082
    %4084 = vmatprep.subr.mxu0 0.0
    %v4085 = vand.u32 %v180, 4294901760
    %v4086 = vsub.f32 %v180, %v4085
    %4087 = vmatpush1.msra.mxu0 %v4086
    %4088 = vmatprep.subr.mxu0 0.0
    %v4089 = vand.u32 %v181, 4294901760
    %v4090 = vsub.f32 %v181, %v4089
    %4091 = vmatpush1.msra.mxu0 %v4090
    %4092 = vmatprep.subr.mxu0 0.0
    %v4093 = vand.u32 %v182, 4294901760
    %v4094 = vsub.f32 %v182, %v4093
    %4095 = vmatpush1.msra.mxu0 %v4094
    %4096 = vmatprep.subr.mxu0 0.0
    %v4097 = vand.u32 %v183, 4294901760
    %v4098 = vsub.f32 %v183, %v4097
    %4099 = vmatpush1.msra.mxu0 %v4098
    %4100 = vmatprep.subr.mxu0 0.0
    %v4101 = vand.u32 %v184, 4294901760
    %v4102 = vsub.f32 %v184, %v4101
    %4103 = vmatpush1.msra.mxu0 %v4102
    %4104 = vmatprep.subr.mxu0 0.0
    %v4105 = vand.u32 %v185, 4294901760
    %v4106 = vsub.f32 %v185, %v4105
    %4107 = vmatpush1.msra.mxu0 %v4106
    %4108 = vmatprep.subr.mxu0 0.0
    %v4109 = vand.u32 %v186, 4294901760
    %v4110 = vsub.f32 %v186, %v4109
    %4111 = vmatpush1.msra.mxu0 %v4110
    %4112 = vmatprep.subr.mxu0 0.0
    %v4113 = vand.u32 %v187, 4294901760
    %v4114 = vsub.f32 %v187, %v4113
    %4115 = vmatpush1.msra.mxu0 %v4114
    %4116 = vmatprep.subr.mxu0 0.0
    %v4117 = vand.u32 %v188, 4294901760
    %v4118 = vsub.f32 %v188, %v4117
    %4119 = vmatpush1.msra.mxu0 %v4118
    %4120 = vmatprep.subr.mxu0 0.0
    %v4121 = vand.u32 %v189, 4294901760
    %v4122 = vsub.f32 %v189, %v4121
    %4123 = vmatpush1.msra.mxu0 %v4122
    %4124 = vmatprep.subr.mxu0 0.0
    %v4125 = vand.u32 %v190, 4294901760
    %v4126 = vsub.f32 %v190, %v4125
    %4127 = vmatpush1.msra.mxu0 %v4126
    %4128 = vmatprep.subr.mxu0 0.0
    %v4129 = vand.u32 %v191, 4294901760
    %v4130 = vsub.f32 %v191, %v4129
    %4131 = vmatpush1.msra.mxu0 %v4130
    %4132 = vmatprep.subr.mxu0 0.0
    %v4133 = vand.u32 %v192, 4294901760
    %v4134 = vsub.f32 %v192, %v4133
    %4135 = vmatpush1.msra.mxu0 %v4134
    %4136 = vmatprep.subr.mxu0 0.0
    %v4137 = vand.u32 %v193, 4294901760
    %v4138 = vsub.f32 %v193, %v4137
    %4139 = vmatpush1.msra.mxu0 %v4138
    %4140 = vmatprep.subr.mxu0 0.0
    %v4141 = vand.u32 %v194, 4294901760
    %v4142 = vsub.f32 %v194, %v4141
    %4143 = vmatpush1.msra.mxu0 %v4142
    %4144 = vmatprep.subr.mxu0 0.0
    %v4145 = vand.u32 %v195, 4294901760
    %v4146 = vsub.f32 %v195, %v4145
    %4147 = vmatpush1.msra.mxu0 %v4146
    %4148 = vmatprep.subr.mxu0 0.0
    %v4149 = vand.u32 %v196, 4294901760
    %v4150 = vsub.f32 %v196, %v4149
    %4151 = vmatpush1.msra.mxu0 %v4150
    %4152 = vmatprep.subr.mxu0 0.0
    %v4153 = vand.u32 %v197, 4294901760
    %v4154 = vsub.f32 %v197, %v4153
    %4155 = vmatpush1.msra.mxu0 %v4154
    %4156 = vmatprep.subr.mxu0 0.0
    %v4157 = vand.u32 %v198, 4294901760
    %v4158 = vsub.f32 %v198, %v4157
    %4159 = vmatpush1.msra.mxu0 %v4158
    %4160 = vmatprep.subr.mxu0 0.0
    %v4161 = vand.u32 %v199, 4294901760
    %v4162 = vsub.f32 %v199, %v4161
    %4163 = vmatpush1.msra.mxu0 %v4162
    %4164 = vmatprep.subr.mxu0 0.0
    %v4165 = vand.u32 %v200, 4294901760
    %v4166 = vsub.f32 %v200, %v4165
    %4167 = vmatpush1.msra.mxu0 %v4166
    %4168 = vmatprep.subr.mxu0 0.0
    %v4169 = vand.u32 %v201, 4294901760
    %v4170 = vsub.f32 %v201, %v4169
    %4171 = vmatpush1.msra.mxu0 %v4170
    %4172 = vmatprep.subr.mxu0 0.0
    %v4173 = vand.u32 %v202, 4294901760
    %v4174 = vsub.f32 %v202, %v4173
    %4175 = vmatpush1.msra.mxu0 %v4174
    %v4176 = vand.u32 %v245, 4294901760
    %v4177 = vsub.f32 %v245, %v4176
    %4178 = vmatprep.mubr.f32.mxu0 %v4177
    %v4179 = vand.u32 %v241, 4294901760
    %v4180 = vsub.f32 %v241, %v4179
    %4181 = vmatmul.mubr.f32.gmra.mrb[0].mxu0 %v4180
    %v4182 = vpop.f32.mrb[0].mxu0
    %v4183 = vadd.f32 %v4045, %v4182
    %v4184 = vpop.f32.mrb[0].mxu0
    %4185 = vdwg.mxu0
    %4186 = vmatprep.subr.mxu0 0.0
    %v4187 = vand.u32 %v171, 4294901760
    %4188 = vmatpush1.msra.mxu0 %v4187
    %4189 = vmatprep.subr.mxu0 0.0
    %v4190 = vand.u32 %v172, 4294901760
    %4191 = vmatpush1.msra.mxu0 %v4190
    %4192 = vmatprep.subr.mxu0 0.0
    %v4193 = vand.u32 %v173, 4294901760
    %4194 = vmatpush1.msra.mxu0 %v4193
    %4195 = vmatprep.subr.mxu0 0.0
    %v4196 = vand.u32 %v174, 4294901760
    %4197 = vmatpush1.msra.mxu0 %v4196
    %4198 = vmatprep.subr.mxu0 0.0
    %v4199 = vand.u32 %v175, 4294901760
    %4200 = vmatpush1.msra.mxu0 %v4199
    %4201 = vmatprep.subr.mxu0 0.0
    %v4202 = vand.u32 %v176, 4294901760
    %4203 = vmatpush1.msra.mxu0 %v4202
    %4204 = vmatprep.subr.mxu0 0.0
    %v4205 = vand.u32 %v177, 4294901760
    %4206 = vmatpush1.msra.mxu0 %v4205
    %4207 = vmatprep.subr.mxu0 0.0
    %v4208 = vand.u32 %v178, 4294901760
    %4209 = vmatpush1.msra.mxu0 %v4208
    %4210 = vmatprep.subr.mxu0 0.0
    %v4211 = vand.u32 %v179, 4294901760
    %4212 = vmatpush1.msra.mxu0 %v4211
    %4213 = vmatprep.subr.mxu0 0.0
    %v4214 = vand.u32 %v180, 4294901760
    %4215 = vmatpush1.msra.mxu0 %v4214
    %4216 = vmatprep.subr.mxu0 0.0
    %v4217 = vand.u32 %v181, 4294901760
    %4218 = vmatpush1.msra.mxu0 %v4217
    %4219 = vmatprep.subr.mxu0 0.0
    %v4220 = vand.u32 %v182, 4294901760
    %4221 = vmatpush1.msra.mxu0 %v4220
    %4222 = vmatprep.subr.mxu0 0.0
    %v4223 = vand.u32 %v183, 4294901760
    %4224 = vmatpush1.msra.mxu0 %v4223
    %4225 = vmatprep.subr.mxu0 0.0
    %v4226 = vand.u32 %v184, 4294901760
    %4227 = vmatpush1.msra.mxu0 %v4226
    %4228 = vmatprep.subr.mxu0 0.0
    %v4229 = vand.u32 %v185, 4294901760
    %4230 = vmatpush1.msra.mxu0 %v4229
    %4231 = vmatprep.subr.mxu0 0.0
    %v4232 = vand.u32 %v186, 4294901760
    %4233 = vmatpush1.msra.mxu0 %v4232
    %4234 = vmatprep.subr.mxu0 0.0
    %v4235 = vand.u32 %v187, 4294901760
    %4236 = vmatpush1.msra.mxu0 %v4235
    %4237 = vmatprep.subr.mxu0 0.0
    %v4238 = vand.u32 %v188, 4294901760
    %4239 = vmatpush1.msra.mxu0 %v4238
    %4240 = vmatprep.subr.mxu0 0.0
    %v4241 = vand.u32 %v189, 4294901760
    %4242 = vmatpush1.msra.mxu0 %v4241
    %4243 = vmatprep.subr.mxu0 0.0
    %v4244 = vand.u32 %v190, 4294901760
    %4245 = vmatpush1.msra.mxu0 %v4244
    %4246 = vmatprep.subr.mxu0 0.0
    %v4247 = vand.u32 %v191, 4294901760
    %4248 = vmatpush1.msra.mxu0 %v4247
    %4249 = vmatprep.subr.mxu0 0.0
    %v4250 = vand.u32 %v192, 4294901760
    %4251 = vmatpush1.msra.mxu0 %v4250
    %4252 = vmatprep.subr.mxu0 0.0
    %v4253 = vand.u32 %v193, 4294901760
    %4254 = vmatpush1.msra.mxu0 %v4253
    %4255 = vmatprep.subr.mxu0 0.0
    %v4256 = vand.u32 %v194, 4294901760
    %4257 = vmatpush1.msra.mxu0 %v4256
    %4258 = vmatprep.subr.mxu0 0.0
    %v4259 = vand.u32 %v195, 4294901760
    %4260 = vmatpush1.msra.mxu0 %v4259
    %4261 = vmatprep.subr.mxu0 0.0
    %v4262 = vand.u32 %v196, 4294901760
    %4263 = vmatpush1.msra.mxu0 %v4262
    %4264 = vmatprep.subr.mxu0 0.0
    %v4265 = vand.u32 %v197, 4294901760
    %4266 = vmatpush1.msra.mxu0 %v4265
    %4267 = vmatprep.subr.mxu0 0.0
    %v4268 = vand.u32 %v198, 4294901760
    %4269 = vmatpush1.msra.mxu0 %v4268
    %4270 = vmatprep.subr.mxu0 0.0
    %v4271 = vand.u32 %v199, 4294901760
    %4272 = vmatpush1.msra.mxu0 %v4271
    %4273 = vmatprep.subr.mxu0 0.0
    %v4274 = vand.u32 %v200, 4294901760
    %4275 = vmatpush1.msra.mxu0 %v4274
    %4276 = vmatprep.subr.mxu0 0.0
    %v4277 = vand.u32 %v201, 4294901760
    %4278 = vmatpush1.msra.mxu0 %v4277
    %4279 = vmatprep.subr.mxu0 0.0
    %v4280 = vand.u32 %v202, 4294901760
    %4281 = vmatpush1.msra.mxu0 %v4280
    %v4282 = vand.u32 %v245, 4294901760
    %v4283 = vsub.f32 %v245, %v4282
    %v4284 = vand.u32 %v4283, 4294901760
    %4285 = vmatprep.mubr.f32.mxu0 %v4284
    %v4286 = vand.u32 %v241, 4294901760
    %v4287 = vsub.f32 %v241, %v4286
    %v4288 = vand.u32 %v4287, 4294901760
    %4289 = vmatmul.mubr.f32.gmra.mrb[0].mxu0 %v4288
    %v4290 = vpop.f32.mrb[0].mxu0
    %v4291 = vadd.f32 %v4183, %v4290
    %v4292 = vpop.f32.mrb[0].mxu0
    %4293 = vdwg.mxu0
    %4294 = vmatprep.subr.mxu0 0.0
    %v4295 = vand.u32 %v171, 4294901760
    %v4296 = vsub.f32 %v171, %v4295
    %v4297 = vand.u32 %v4296, 4294901760
    %4298 = vmatpush1.msra.mxu0 %v4297
    %4299 = vmatprep.subr.mxu0 0.0
    %v4300 = vand.u32 %v172, 4294901760
    %v4301 = vsub.f32 %v172, %v4300
    %v4302 = vand.u32 %v4301, 4294901760
    %4303 = vmatpush1.msra.mxu0 %v4302
    %4304 = vmatprep.subr.mxu0 0.0
    %v4305 = vand.u32 %v173, 4294901760
    %v4306 = vsub.f32 %v173, %v4305
    %v4307 = vand.u32 %v4306, 4294901760
    %4308 = vmatpush1.msra.mxu0 %v4307
    %4309 = vmatprep.subr.mxu0 0.0
    %v4310 = vand.u32 %v174, 4294901760
    %v4311 = vsub.f32 %v174, %v4310
    %v4312 = vand.u32 %v4311, 4294901760
    %4313 = vmatpush1.msra.mxu0 %v4312
    %4314 = vmatprep.subr.mxu0 0.0
    %v4315 = vand.u32 %v175, 4294901760
    %v4316 = vsub.f32 %v175, %v4315
    %v4317 = vand.u32 %v4316, 4294901760
    %4318 = vmatpush1.msra.mxu0 %v4317
    %4319 = vmatprep.subr.mxu0 0.0
    %v4320 = vand.u32 %v176, 4294901760
    %v4321 = vsub.f32 %v176, %v4320
    %v4322 = vand.u32 %v4321, 4294901760
    %4323 = vmatpush1.msra.mxu0 %v4322
    %4324 = vmatprep.subr.mxu0 0.0
    %v4325 = vand.u32 %v177, 4294901760
    %v4326 = vsub.f32 %v177, %v4325
    %v4327 = vand.u32 %v4326, 4294901760
    %4328 = vmatpush1.msra.mxu0 %v4327
    %4329 = vmatprep.subr.mxu0 0.0
    %v4330 = vand.u32 %v178, 4294901760
    %v4331 = vsub.f32 %v178, %v4330
    %v4332 = vand.u32 %v4331, 4294901760
    %4333 = vmatpush1.msra.mxu0 %v4332
    %4334 = vmatprep.subr.mxu0 0.0
    %v4335 = vand.u32 %v179, 4294901760
    %v4336 = vsub.f32 %v179, %v4335
    %v4337 = vand.u32 %v4336, 4294901760
    %4338 = vmatpush1.msra.mxu0 %v4337
    %4339 = vmatprep.subr.mxu0 0.0
    %v4340 = vand.u32 %v180, 4294901760
    %v4341 = vsub.f32 %v180, %v4340
    %v4342 = vand.u32 %v4341, 4294901760
    %4343 = vmatpush1.msra.mxu0 %v4342
    %4344 = vmatprep.subr.mxu0 0.0
    %v4345 = vand.u32 %v181, 4294901760
    %v4346 = vsub.f32 %v181, %v4345
    %v4347 = vand.u32 %v4346, 4294901760
    %4348 = vmatpush1.msra.mxu0 %v4347
    %4349 = vmatprep.subr.mxu0 0.0
    %v4350 = vand.u32 %v182, 4294901760
    %v4351 = vsub.f32 %v182, %v4350
    %v4352 = vand.u32 %v4351, 4294901760
    %4353 = vmatpush1.msra.mxu0 %v4352
    %4354 = vmatprep.subr.mxu0 0.0
    %v4355 = vand.u32 %v183, 4294901760
    %v4356 = vsub.f32 %v183, %v4355
    %v4357 = vand.u32 %v4356, 4294901760
    %4358 = vmatpush1.msra.mxu0 %v4357
    %4359 = vmatprep.subr.mxu0 0.0
    %v4360 = vand.u32 %v184, 4294901760
    %v4361 = vsub.f32 %v184, %v4360
    %v4362 = vand.u32 %v4361, 4294901760
    %4363 = vmatpush1.msra.mxu0 %v4362
    %4364 = vmatprep.subr.mxu0 0.0
    %v4365 = vand.u32 %v185, 4294901760
    %v4366 = vsub.f32 %v185, %v4365
    %v4367 = vand.u32 %v4366, 4294901760
    %4368 = vmatpush1.msra.mxu0 %v4367
    %4369 = vmatprep.subr.mxu0 0.0
    %v4370 = vand.u32 %v186, 4294901760
    %v4371 = vsub.f32 %v186, %v4370
    %v4372 = vand.u32 %v4371, 4294901760
    %4373 = vmatpush1.msra.mxu0 %v4372
    %4374 = vmatprep.subr.mxu0 0.0
    %v4375 = vand.u32 %v187, 4294901760
    %v4376 = vsub.f32 %v187, %v4375
    %v4377 = vand.u32 %v4376, 4294901760
    %4378 = vmatpush1.msra.mxu0 %v4377
    %4379 = vmatprep.subr.mxu0 0.0
    %v4380 = vand.u32 %v188, 4294901760
    %v4381 = vsub.f32 %v188, %v4380
    %v4382 = vand.u32 %v4381, 4294901760
    %4383 = vmatpush1.msra.mxu0 %v4382
    %4384 = vmatprep.subr.mxu0 0.0
    %v4385 = vand.u32 %v189, 4294901760
    %v4386 = vsub.f32 %v189, %v4385
    %v4387 = vand.u32 %v4386, 4294901760
    %4388 = vmatpush1.msra.mxu0 %v4387
    %4389 = vmatprep.subr.mxu0 0.0
    %v4390 = vand.u32 %v190, 4294901760
    %v4391 = vsub.f32 %v190, %v4390
    %v4392 = vand.u32 %v4391, 4294901760
    %4393 = vmatpush1.msra.mxu0 %v4392
    %4394 = vmatprep.subr.mxu0 0.0
    %v4395 = vand.u32 %v191, 4294901760
    %v4396 = vsub.f32 %v191, %v4395
    %v4397 = vand.u32 %v4396, 4294901760
    %4398 = vmatpush1.msra.mxu0 %v4397
    %4399 = vmatprep.subr.mxu0 0.0
    %v4400 = vand.u32 %v192, 4294901760
    %v4401 = vsub.f32 %v192, %v4400
    %v4402 = vand.u32 %v4401, 4294901760
    %4403 = vmatpush1.msra.mxu0 %v4402
    %4404 = vmatprep.subr.mxu0 0.0
    %v4405 = vand.u32 %v193, 4294901760
    %v4406 = vsub.f32 %v193, %v4405
    %v4407 = vand.u32 %v4406, 4294901760
    %4408 = vmatpush1.msra.mxu0 %v4407
    %4409 = vmatprep.subr.mxu0 0.0
    %v4410 = vand.u32 %v194, 4294901760
    %v4411 = vsub.f32 %v194, %v4410
    %v4412 = vand.u32 %v4411, 4294901760
    %4413 = vmatpush1.msra.mxu0 %v4412
    %4414 = vmatprep.subr.mxu0 0.0
    %v4415 = vand.u32 %v195, 4294901760
    %v4416 = vsub.f32 %v195, %v4415
    %v4417 = vand.u32 %v4416, 4294901760
    %4418 = vmatpush1.msra.mxu0 %v4417
    %4419 = vmatprep.subr.mxu0 0.0
    %v4420 = vand.u32 %v196, 4294901760
    %v4421 = vsub.f32 %v196, %v4420
    %v4422 = vand.u32 %v4421, 4294901760
    %4423 = vmatpush1.msra.mxu0 %v4422
    %4424 = vmatprep.subr.mxu0 0.0
    %v4425 = vand.u32 %v197, 4294901760
    %v4426 = vsub.f32 %v197, %v4425
    %v4427 = vand.u32 %v4426, 4294901760
    %4428 = vmatpush1.msra.mxu0 %v4427
    %4429 = vmatprep.subr.mxu0 0.0
    %v4430 = vand.u32 %v198, 4294901760
    %v4431 = vsub.f32 %v198, %v4430
    %v4432 = vand.u32 %v4431, 4294901760
    %4433 = vmatpush1.msra.mxu0 %v4432
    %4434 = vmatprep.subr.mxu0 0.0
    %v4435 = vand.u32 %v199, 4294901760
    %v4436 = vsub.f32 %v199, %v4435
    %v4437 = vand.u32 %v4436, 4294901760
    %4438 = vmatpush1.msra.mxu0 %v4437
    %4439 = vmatprep.subr.mxu0 0.0
    %v4440 = vand.u32 %v200, 4294901760
    %v4441 = vsub.f32 %v200, %v4440
    %v4442 = vand.u32 %v4441, 4294901760
    %4443 = vmatpush1.msra.mxu0 %v4442
    %4444 = vmatprep.subr.mxu0 0.0
    %v4445 = vand.u32 %v201, 4294901760
    %v4446 = vsub.f32 %v201, %v4445
    %v4447 = vand.u32 %v4446, 4294901760
    %4448 = vmatpush1.msra.mxu0 %v4447
    %4449 = vmatprep.subr.mxu0 0.0
    %v4450 = vand.u32 %v202, 4294901760
    %v4451 = vsub.f32 %v202, %v4450
    %v4452 = vand.u32 %v4451, 4294901760
    %4453 = vmatpush1.msra.mxu0 %v4452
    %v4454 = vand.u32 %v245, 4294901760
    %4455 = vmatprep.mubr.f32.mxu0 %v4454
    %v4456 = vand.u32 %v241, 4294901760
    %4457 = vmatmul.mubr.f32.gmra.mrb[0].mxu0 %v4456
    %v4458 = vpop.f32.mrb[0].mxu0
    %v4459 = vadd.f32 %v4291, %v4458
    %v4460 = vpop.f32.mrb[0].mxu0
    %4461 = vdwg.mxu0
    %4462 = vmatprep.subr.mxu0 0.0
    %v4463 = vand.u32 %v171, 4294901760
    %4464 = vmatpush1.msra.mxu0 %v4463
    %4465 = vmatprep.subr.mxu0 0.0
    %v4466 = vand.u32 %v172, 4294901760
    %4467 = vmatpush1.msra.mxu0 %v4466
    %4468 = vmatprep.subr.mxu0 0.0
    %v4469 = vand.u32 %v173, 4294901760
    %4470 = vmatpush1.msra.mxu0 %v4469
    %4471 = vmatprep.subr.mxu0 0.0
    %v4472 = vand.u32 %v174, 4294901760
    %4473 = vmatpush1.msra.mxu0 %v4472
    %4474 = vmatprep.subr.mxu0 0.0
    %v4475 = vand.u32 %v175, 4294901760
    %4476 = vmatpush1.msra.mxu0 %v4475
    %4477 = vmatprep.subr.mxu0 0.0
    %v4478 = vand.u32 %v176, 4294901760
    %4479 = vmatpush1.msra.mxu0 %v4478
    %4480 = vmatprep.subr.mxu0 0.0
    %v4481 = vand.u32 %v177, 4294901760
    %4482 = vmatpush1.msra.mxu0 %v4481
    %4483 = vmatprep.subr.mxu0 0.0
    %v4484 = vand.u32 %v178, 4294901760
    %4485 = vmatpush1.msra.mxu0 %v4484
    %4486 = vmatprep.subr.mxu0 0.0
    %v4487 = vand.u32 %v179, 4294901760
    %4488 = vmatpush1.msra.mxu0 %v4487
    %4489 = vmatprep.subr.mxu0 0.0
    %v4490 = vand.u32 %v180, 4294901760
    %4491 = vmatpush1.msra.mxu0 %v4490
    %4492 = vmatprep.subr.mxu0 0.0
    %v4493 = vand.u32 %v181, 4294901760
    %4494 = vmatpush1.msra.mxu0 %v4493
    %4495 = vmatprep.subr.mxu0 0.0
    %v4496 = vand.u32 %v182, 4294901760
    %4497 = vmatpush1.msra.mxu0 %v4496
    %4498 = vmatprep.subr.mxu0 0.0
    %v4499 = vand.u32 %v183, 4294901760
    %4500 = vmatpush1.msra.mxu0 %v4499
    %4501 = vmatprep.subr.mxu0 0.0
    %v4502 = vand.u32 %v184, 4294901760
    %4503 = vmatpush1.msra.mxu0 %v4502
    %4504 = vmatprep.subr.mxu0 0.0
    %v4505 = vand.u32 %v185, 4294901760
    %4506 = vmatpush1.msra.mxu0 %v4505
    %4507 = vmatprep.subr.mxu0 0.0
    %v4508 = vand.u32 %v186, 4294901760
    %4509 = vmatpush1.msra.mxu0 %v4508
    %4510 = vmatprep.subr.mxu0 0.0
    %v4511 = vand.u32 %v187, 4294901760
    %4512 = vmatpush1.msra.mxu0 %v4511
    %4513 = vmatprep.subr.mxu0 0.0
    %v4514 = vand.u32 %v188, 4294901760
    %4515 = vmatpush1.msra.mxu0 %v4514
    %4516 = vmatprep.subr.mxu0 0.0
    %v4517 = vand.u32 %v189, 4294901760
    %4518 = vmatpush1.msra.mxu0 %v4517
    %4519 = vmatprep.subr.mxu0 0.0
    %v4520 = vand.u32 %v190, 4294901760
    %4521 = vmatpush1.msra.mxu0 %v4520
    %4522 = vmatprep.subr.mxu0 0.0
    %v4523 = vand.u32 %v191, 4294901760
    %4524 = vmatpush1.msra.mxu0 %v4523
    %4525 = vmatprep.subr.mxu0 0.0
    %v4526 = vand.u32 %v192, 4294901760
    %4527 = vmatpush1.msra.mxu0 %v4526
    %4528 = vmatprep.subr.mxu0 0.0
    %v4529 = vand.u32 %v193, 4294901760
    %4530 = vmatpush1.msra.mxu0 %v4529
    %4531 = vmatprep.subr.mxu0 0.0
    %v4532 = vand.u32 %v194, 4294901760
    %4533 = vmatpush1.msra.mxu0 %v4532
    %4534 = vmatprep.subr.mxu0 0.0
    %v4535 = vand.u32 %v195, 4294901760
    %4536 = vmatpush1.msra.mxu0 %v4535
    %4537 = vmatprep.subr.mxu0 0.0
    %v4538 = vand.u32 %v196, 4294901760
    %4539 = vmatpush1.msra.mxu0 %v4538
    %4540 = vmatprep.subr.mxu0 0.0
    %v4541 = vand.u32 %v197, 4294901760
    %4542 = vmatpush1.msra.mxu0 %v4541
    %4543 = vmatprep.subr.mxu0 0.0
    %v4544 = vand.u32 %v198, 4294901760
    %4545 = vmatpush1.msra.mxu0 %v4544
    %4546 = vmatprep.subr.mxu0 0.0
    %v4547 = vand.u32 %v199, 4294901760
    %4548 = vmatpush1.msra.mxu0 %v4547
    %4549 = vmatprep.subr.mxu0 0.0
    %v4550 = vand.u32 %v200, 4294901760
    %4551 = vmatpush1.msra.mxu0 %v4550
    %4552 = vmatprep.subr.mxu0 0.0
    %v4553 = vand.u32 %v201, 4294901760
    %4554 = vmatpush1.msra.mxu0 %v4553
    %4555 = vmatprep.subr.mxu0 0.0
    %v4556 = vand.u32 %v202, 4294901760
    %4557 = vmatpush1.msra.mxu0 %v4556
    %v4558 = vand.u32 %v245, 4294901760
    %4559 = vmatprep.mubr.f32.mxu0 %v4558
    %v4560 = vand.u32 %v241, 4294901760
    %4561 = vmatmul.mubr.f32.gmra.mrb[0].mxu0 %v4560
    %v4562 = vpop.f32.mrb[0].mxu0
    %v4563 = vadd.f32 %v4459, %v4562
    %v4564 = vpop.f32.mrb[0].mxu0
    %4565 = vdwg.mxu0
    %4566 = vst [vmem:[#allocation7] sm:$0x1] %v4563
    // Predicated region
    $region22: #{tpu_custom_call.1} parent=1 // pred_check
      _
    $region23: #{tpu_custom_call.1} parent=1 // pred_check_branch
      %4568 = sbr.rel (0) target = $region25
    $region24: #{tpu_custom_call.1} parent=1 // pred_region
      %s4570 = ssub.s32 16, 16
      %4571 = vsyncadd [#allocation4], %s4570
      %s4573 = sshll.u32 [#allocation7], 4
      %s4574 = int_to_ptr.vmem [resolvable:$true] %s4573
      %4576 = dma.vmem_to_hbm [thread:$0]  %s4574, 16, %s3, [#allocation4]
    $region25: #{tpu_custom_call.1} parent=1 // pred_fallthru
      _
    // Predicated region
    $region26: #{tpu_custom_call.1} parent=1 // pred_check
      _
    $region27: #{tpu_custom_call.1} parent=1 // pred_check_branch
      %4578 = sbr.rel (0) target = $region29
    $region28: #{tpu_custom_call.1} parent=1 // pred_region
      %4579 = dma.done [#allocation4], 16
    $region29: #{tpu_custom_call.1} parent=1 // pred_fallthru
      _
    %4580 = vsyncpa [#allocation3], 1
    %4581 = vsyncpa [#allocation6], 1
    %4582 = vsyncpa [#allocation4], 1

</llo_original>
